<compile_context>
chip_gen: v7x
topology: tpu7x:2x2x1
jax: 0.10.0
libtpu: 0.0.40
codegen_flags: <defaults>
</compile_context>

<pallas_src>
import functools

import jax
import jax.numpy as jnp
from jax import lax
from jax.experimental import pallas as pl
from jax.experimental.pallas import tpu as pltpu


def icsf_kernel(xp_ref, xr_ref, wb0_ref, wb1_ref, wb2_ref,
                s1_ref, b1_ref, wdw_ref, sdw_ref, bdw_ref,
                wse1_ref, bse1_ref, wse2_ref, bse2_ref,
                o_ref, *, Bblk, H, Hp, W, Cout):
    WC = W * Cout
    f32 = jnp.float32

    # ---- conv1 (3x3, stride 1, pad 1): three banded MXU matmuls, one per
    # vertical filter tap; batch folded into M (M = Bblk*Hp). ----
    xp = xp_ref[...]                                              # (Bblk*Hp, Kpad)
    p0 = jnp.dot(xp, wb0_ref[...], preferred_element_type=f32)    # (Bblk*Hp, WC)
    p1 = jnp.dot(xp, wb1_ref[...], preferred_element_type=f32)
    p2 = jnp.dot(xp, wb2_ref[...], preferred_element_type=f32)

    # Row-shifted accumulation of the vertical taps (2D, then a tile-aligned
    # reshape since Hp % 8 == 0; garbage rows >= H per image are sliced away).
    zr = jnp.zeros((2, WC), f32)
    q = (p0
         + jnp.concatenate([p1[1:], zr[:1]], axis=0)
         + jnp.concatenate([p2[2:], zr], axis=0))                 # (Bblk*Hp, WC)
    acc = q.reshape(Bblk, Hp, WC)[:, :H]                          # (Bblk, H, WC)

    # bn1 (folded scale/bias, tiled to lane layout) + relu
    t = jnp.maximum(acc * s1_ref[...] + b1_ref[...], 0.0)         # (Bblk, H, WC)

    # ---- depthwise 3x3: lane-shifted horizontal taps, 9 VPU FMAs, then
    # per-image sublane-shifted vertical accumulation. ----
    zcol = jnp.zeros((Bblk, H, Cout), f32)
    h_m1 = jnp.concatenate([zcol, t[:, :, :WC - Cout]], axis=2)   # x-1 tap
    h_p1 = jnp.concatenate([t[:, :, Cout:], zcol], axis=2)        # x+1 tap

    wdw = wdw_ref[...]                                            # (9, WC)

    def wrow(k):
        return wdw[k:k + 1, :]                                    # (1, WC)

    g0 = h_m1 * wrow(0) + t * wrow(1) + h_p1 * wrow(2)            # filter row dy=0
    g1 = h_m1 * wrow(3) + t * wrow(4) + h_p1 * wrow(5)            # filter row dy=1
    g2 = h_m1 * wrow(6) + t * wrow(7) + h_p1 * wrow(8)            # filter row dy=2

    zrow = jnp.zeros((Bblk, 1, WC), f32)
    acc2 = (jnp.concatenate([zrow, g0[:, :H - 1]], axis=1)        # reads y-1
            + g1
            + jnp.concatenate([g2[:, 1:], zrow], axis=1))         # reads y+1

    # bn_dw (folded) + relu
    u = jnp.maximum(acc2 * sdw_ref[...] + bdw_ref[...], 0.0)      # (Bblk, H, WC)

    # ---- squeeze-excite: per-image global average pool; the W-group fold and
    # 1/(H*W) scale are pre-folded into wse1, and wse2/bias are pre-tiled over
    # W, so the excitation is produced already lane-dense. ----
    colsum = jnp.sum(u, axis=1)                                   # (Bblk, WC)
    se1 = jnp.maximum(
        jnp.dot(colsum, wse1_ref[...], preferred_element_type=f32)
        + bse1_ref[...], 0.0)                                     # (Bblk, Crp)
    se2 = jax.nn.sigmoid(
        jnp.dot(se1, wse2_ref[...], preferred_element_type=f32)
        + bse2_ref[...])                                          # (Bblk, WC)

    # ---- scale, identity residual, relu; lane-dense (WC) unmasked store ----
    o_ref[...] = jnp.maximum(u * se2[:, None, :] + xr_ref[...], 0.0)


def _banded_conv1_weight(w1_hwio, W):
    """Expand a (3,3,Cin,Cout) HWIO filter into (3, (W+2)*Cin, W*Cout): one
    banded matrix per vertical tap so the 3x3 conv over a width-W row becomes
    three matmuls (no lane concat in the kernel)."""
    Kh, Kw, Cin, Cout = w1_hwio.shape
    Wp = W + Kw - 1
    eye = jnp.eye(W, dtype=w1_hwio.dtype)                         # (W, W)
    bands = []
    for dy in range(Kh):
        acc = jnp.zeros((Wp, Cin, W, Cout), w1_hwio.dtype)
        for dx in range(Kw):
            sel = jnp.pad(eye, ((dx, Kw - 1 - dx), (0, 0)))       # sel[x+dx, x] = 1
            acc = acc + sel[:, None, :, None] * w1_hwio[dy, dx][None, :, None, :]
        bands.append(acc.reshape(Wp * Cin, W * Cout))
    return jnp.stack(bands, axis=0)                               # (Kh, Wp*Cin, W*Cout)


def icsf_block(x_nhwc, p, *, bblk=None):
    B, H, W, Cin = x_nhwc.shape
    Cout = p['s1'].shape[-1]
    Cr = p['wse1'].shape[-1]
    assert Cin == Cout, "identity residual requires in_channels == out_channels"
    # TODO(synk): stride != 1 and the optional `downsample` branch of ICSFBlock
    # are not implemented (default stride=1 / downsample=None configuration).

    if bblk is None:
        bblk = B
    assert B % bblk == 0

    Wp = W + 2
    WC = W * Cout
    Kraw = Wp * Cin
    Kpad = ((Kraw + 127) // 128) * 128      # lane-pad K to a multiple of 128
    Hp = ((H + 2 + 7) // 8) * 8             # per-image padded rows (tile aligned)
    Crp = ((Cr + 7) // 8) * 8               # pad SE bottleneck dim to >= 8

    # ----- wrapper-side layout prep (runs once, outside the kernel) -----
    wb = _banded_conv1_weight(p['w1_hwio'], W)                    # (3, Kraw, WC)
    wb = jnp.pad(wb, ((0, 0), (0, Kpad - Kraw), (0, 0)))          # zero K rows
    wb0, wb1, wb2 = wb[0], wb[1], wb[2]
    # TODO(synk): at production shapes (e.g. 56x56x256) replace this banded
    # weight (O(W^2*Cin*Cout)) with shifted-window dots of K=3*Cin plus an
    # H-tiled two-pass grid sized for v7x's 64 MiB VMEM.

    x_pad = jnp.pad(x_nhwc, ((0, 0), (1, Hp - H - 1), (1, 1), (0, 0)))
    x_pad = x_pad.reshape(B, Hp, Kraw)
    x_pad = jnp.pad(x_pad, ((0, 0), (0, 0), (0, Kpad - Kraw)))
    x_pad = x_pad.reshape(B * Hp, Kpad)                           # conv1 LHS rows

    x_res = x_nhwc.reshape(B, H, W * Cin)                         # identity residual

    s1t, b1t = jnp.tile(p['s1'], (1, W)), jnp.tile(p['b1'], (1, W))
    sdwt, bdwt = jnp.tile(p['sdw'], (1, W)), jnp.tile(p['bdw'], (1, W))
    wdwt = jnp.tile(p['wdw_hwio'].reshape(9, Cout), (1, W))        # (9, WC)

    # SE: fold the pool's W-group reduction + 1/(H*W) into fc1's weight; tile
    # fc2's weight/bias over W; pad the bottleneck dim with zeros (harmless).
    wse1_big = jnp.pad(jnp.tile(p['wse1'], (W, 1)) / float(H * W),
                       ((0, 0), (0, Crp - Cr)))                   # (WC, Crp)
    bse1p = jnp.pad(p['bse1'], ((0, 0), (0, Crp - Cr)))           # (1, Crp)
    wse2t = jnp.pad(jnp.tile(p['wse2'], (1, W)),
                    ((0, Crp - Cr), (0, 0)))                      # (Crp, WC)
    bse2t = jnp.tile(p['bse2'], (1, W))                           # (1, WC)

    kernel = functools.partial(icsf_kernel, Bblk=bblk, H=H, Hp=Hp, W=W, Cout=Cout)

    def const(arr):
        nd = arr.ndim
        return pl.BlockSpec(arr.shape, lambda i, _nd=nd: (0,) * _nd)

    out3 = pl.pallas_call(
        kernel,
        out_shape=jax.ShapeDtypeStruct((B, H, WC), jnp.float32),
        grid_spec=pltpu.PrefetchScalarGridSpec(
            num_scalar_prefetch=0,
            grid=(B // bblk,),
            in_specs=[
                pl.BlockSpec((bblk * Hp, Kpad), lambda i: (i, 0)),       # padded input
                pl.BlockSpec((bblk, H, W * Cin), lambda i: (i, 0, 0)),   # residual
                const(wb0), const(wb1), const(wb2),                      # conv1 bands
                const(s1t), const(b1t),                                  # bn1
                const(wdwt), const(sdwt), const(bdwt),                   # dw + bn_dw
                const(wse1_big), const(bse1p), const(wse2t), const(bse2t),  # SE
            ],
            out_specs=pl.BlockSpec((bblk, H, WC), lambda i: (i, 0, 0)),
        ),
        compiler_params=pltpu.CompilerParams(
            dimension_semantics=("parallel",)),
    )(x_pad, x_res, wb0, wb1, wb2, s1t, b1t, wdwt, sdwt, bdwt,
      wse1_big, bse1p, wse2t, bse2t)

    return out3.reshape(B, H, W, Cout)


def icsf_ref(x, p):
    """Pure-JAX reference (NHWC) mirroring the PyTorch forward."""
    Cout = p['s1'].shape[-1]
    dn = ('NHWC', 'HWIO', 'NHWC')
    hp = lax.Precision.HIGHEST
    y = lax.conv_general_dilated(x, p['w1_hwio'], (1, 1), 'SAME',
                                 dimension_numbers=dn, precision=hp)
    y = jnp.maximum(y * p['s1'] + p['b1'], 0.0)
    z = lax.conv_general_dilated(y, p['wdw_hwio'], (1, 1), 'SAME',
                                 dimension_numbers=dn, feature_group_count=Cout,
                                 precision=hp)
    z = jnp.maximum(z * p['sdw'] + p['bdw'], 0.0)
    se = jnp.mean(z, axis=(1, 2), keepdims=True)
    se1 = jnp.maximum(jnp.einsum('bijc,cd->bijd', se, p['wse1'], precision=hp)
                      + p['bse1'], 0.0)
    se2 = jax.nn.sigmoid(jnp.einsum('bijc,cd->bijd', se1, p['wse2'], precision=hp)
                         + p['bse2'])
    return jnp.maximum(z * se2 + x, 0.0)


def make_params(key, Cin, Cout):
    Cr = Cout // 8
    ks = jax.random.split(key, 12)
    eps = 1e-5

    w1_hwio = 0.1 * jax.random.normal(ks[0], (3, 3, Cin, Cout), jnp.float32)
    wdw_hwio = 0.1 * jax.random.normal(ks[1], (3, 3, 1, Cout), jnp.float32)
    wse1 = 0.1 * jax.random.normal(ks[2], (Cout, Cr), jnp.float32)
    bse1 = 0.05 * jax.random.normal(ks[3], (1, Cr), jnp.float32)
    wse2 = 0.1 * jax.random.normal(ks[4], (Cr, Cout), jnp.float32)
    bse2 = 0.05 * jax.random.normal(ks[5], (1, Cout), jnp.float32)

    def bn(kg, kb, km, kv):
        gamma = jax.random.uniform(kg, (Cout,), jnp.float32, 0.5, 1.5)
        beta = 0.1 * jax.random.normal(kb, (Cout,), jnp.float32)
        mean = 0.1 * jax.random.normal(km, (Cout,), jnp.float32)
        var = jax.random.uniform(kv, (Cout,), jnp.float32, 0.5, 1.5)
        scale = gamma / jnp.sqrt(var + eps)
        bias = beta - mean * scale
        return scale[None, :], bias[None, :]

    s1, b1 = bn(ks[6], ks[7], ks[8], ks[9])
    sdw, bdw = bn(ks[10], ks[11], ks[6], ks[7])

    return dict(w1_hwio=w1_hwio, wdw_hwio=wdw_hwio,
                s1=s1, b1=b1, sdw=sdw, bdw=bdw,
                wse1=wse1, bse1=bse1, wse2=wse2, bse2=bse2)


if __name__ == "__main__":
    # Small demo config: in_channels == out_channels, stride=1, no downsample.
    # bblk batches 4 images per grid step (conv1 M = 4*24 = 96 rows) while the
    # grid still has B//bblk = 2 steps for pipelining / megacore sharding.
    B, H, W, C = 8, 16, 16, 16
    key = jax.random.PRNGKey(0)
    kx, kp = jax.random.split(key)
    x = jax.random.normal(kx, (B, H, W, C), jnp.float32)
    params = make_params(kp, C, C)

    out = jax.block_until_ready(icsf_block(x, params, bblk=4))

    ref = icsf_ref(x, params)
    assert out.shape == (B, H, W, C)
    err = jnp.max(jnp.abs(out - ref))
    assert jnp.allclose(out, ref, rtol=1e-4, atol=1e-4), f"max err {err}"
    print("KERNEL_OK")
</pallas_src>

<mosaic_0001>
module attributes {stable_mosaic.version = 11 : i64} {
  func.func @icsf_kernel(%arg0: i32, %arg1: memref<96x384xf32, #tpu.memory_space<vmem>>, %arg2: memref<4x16x256xf32, #tpu.memory_space<vmem>>, %arg3: memref<384x256xf32, #tpu.memory_space<vmem>>, %arg4: memref<384x256xf32, #tpu.memory_space<vmem>>, %arg5: memref<384x256xf32, #tpu.memory_space<vmem>>, %arg6: memref<1x256xf32, #tpu.memory_space<vmem>>, %arg7: memref<1x256xf32, #tpu.memory_space<vmem>>, %arg8: memref<9x256xf32, #tpu.memory_space<vmem>>, %arg9: memref<1x256xf32, #tpu.memory_space<vmem>>, %arg10: memref<1x256xf32, #tpu.memory_space<vmem>>, %arg11: memref<256x8xf32, #tpu.memory_space<vmem>>, %arg12: memref<1x8xf32, #tpu.memory_space<vmem>>, %arg13: memref<8x256xf32, #tpu.memory_space<vmem>>, %arg14: memref<1x256xf32, #tpu.memory_space<vmem>>, %arg15: memref<4x16x256xf32, #tpu.memory_space<vmem>>) attributes {dimension_semantics = [#tpu.dimension_semantics<parallel>], iteration_bounds = array<i64: 2>, scalar_prefetch = 0 : i64, scratch_operands = 0 : i64, tpu.core_type = #tpu.core_type<tc>, window_params = [{transform_indices = @transform_0, window_bounds = array<i64: 96, 384>}, {transform_indices = @transform_1, window_bounds = array<i64: 4, 16, 256>}, {pipeline_mode = #tpu.pipeline_mode<synchronous>, transform_indices = @transform_2, window_bounds = array<i64: 384, 256>}, {pipeline_mode = #tpu.pipeline_mode<synchronous>, transform_indices = @transform_3, window_bounds = array<i64: 384, 256>}, {pipeline_mode = #tpu.pipeline_mode<synchronous>, transform_indices = @transform_4, window_bounds = array<i64: 384, 256>}, {pipeline_mode = #tpu.pipeline_mode<synchronous>, transform_indices = @transform_5, window_bounds = array<i64: 1, 256>}, {pipeline_mode = #tpu.pipeline_mode<synchronous>, transform_indices = @transform_6, window_bounds = array<i64: 1, 256>}, {pipeline_mode = #tpu.pipeline_mode<synchronous>, transform_indices = @transform_7, window_bounds = array<i64: 9, 256>}, {pipeline_mode = #tpu.pipeline_mode<synchronous>, transform_indices = @transform_8, window_bounds = array<i64: 1, 256>}, {pipeline_mode = #tpu.pipeline_mode<synchronous>, transform_indices = @transform_9, window_bounds = array<i64: 1, 256>}, {pipeline_mode = #tpu.pipeline_mode<synchronous>, transform_indices = @transform_10, window_bounds = array<i64: 256, 8>}, {pipeline_mode = #tpu.pipeline_mode<synchronous>, transform_indices = @transform_11, window_bounds = array<i64: 1, 8>}, {pipeline_mode = #tpu.pipeline_mode<synchronous>, transform_indices = @transform_12, window_bounds = array<i64: 8, 256>}, {pipeline_mode = #tpu.pipeline_mode<synchronous>, transform_indices = @transform_13, window_bounds = array<i64: 1, 256>}, {transform_indices = @transform_14, window_bounds = array<i64: 4, 16, 256>}]} {
    %c0 = arith.constant 0 : index
    %c0_0 = arith.constant 0 : index
    %0 = vector.load %arg1[%c0, %c0_0] : memref<96x384xf32, #tpu.memory_space<vmem>>, vector<96x384xf32>
    %c0_1 = arith.constant 0 : index
    %c0_2 = arith.constant 0 : index
    %1 = vector.load %arg3[%c0_1, %c0_2] : memref<384x256xf32, #tpu.memory_space<vmem>>, vector<384x256xf32>
    %cst = arith.constant dense<0.000000e+00> : vector<96x256xf32>
    %2 = tpu.matmul %0, %1, %cst {dimension_numbers = #tpu.dot_dimension_numbers<[1], [0], [0], [1], [0, 0, 1, 1], [], []>} : vector<96x384xf32>, vector<384x256xf32>, vector<96x256xf32> -> vector<96x256xf32>
    %c0_3 = arith.constant 0 : index
    %c0_4 = arith.constant 0 : index
    %3 = vector.load %arg4[%c0_3, %c0_4] : memref<384x256xf32, #tpu.memory_space<vmem>>, vector<384x256xf32>
    %cst_5 = arith.constant dense<0.000000e+00> : vector<96x256xf32>
    %4 = tpu.matmul %0, %3, %cst_5 {dimension_numbers = #tpu.dot_dimension_numbers<[1], [0], [0], [1], [0, 0, 1, 1], [], []>} : vector<96x384xf32>, vector<384x256xf32>, vector<96x256xf32> -> vector<96x256xf32>
    %c0_6 = arith.constant 0 : index
    %c0_7 = arith.constant 0 : index
    %5 = vector.load %arg5[%c0_6, %c0_7] : memref<384x256xf32, #tpu.memory_space<vmem>>, vector<384x256xf32>
    %cst_8 = arith.constant dense<0.000000e+00> : vector<96x256xf32>
    %6 = tpu.matmul %0, %5, %cst_8 {dimension_numbers = #tpu.dot_dimension_numbers<[1], [0], [0], [1], [0, 0, 1, 1], [], []>} : vector<96x384xf32>, vector<384x256xf32>, vector<96x256xf32> -> vector<96x256xf32>
    %cst_9 = arith.constant 0.000000e+00 : f32
    %7 = vector.broadcast %cst_9 : f32 to vector<2x256xf32>
    %8 = vector.extract_strided_slice %4 {offsets = [1, 0], sizes = [95, 256], strides = [1, 1]} : vector<96x256xf32> to vector<95x256xf32>
    %9 = vector.extract_strided_slice %7 {offsets = [0, 0], sizes = [1, 256], strides = [1, 1]} : vector<2x256xf32> to vector<1x256xf32>
    %10 = tpu.concatenate %8, %9 in 0 : vector<95x256xf32>, vector<1x256xf32> -> vector<96x256xf32>
    %11 = arith.addf %2, %10 : vector<96x256xf32>
    %12 = vector.extract_strided_slice %6 {offsets = [2, 0], sizes = [94, 256], strides = [1, 1]} : vector<96x256xf32> to vector<94x256xf32>
    %13 = tpu.concatenate %12, %7 in 0 : vector<94x256xf32>, vector<2x256xf32> -> vector<96x256xf32>
    %14 = arith.addf %11, %13 : vector<96x256xf32>
    %15 = vector.shape_cast %14 : vector<96x256xf32> to vector<4x24x256xf32>
    %16 = vector.extract_strided_slice %15 {offsets = [0, 0, 0], sizes = [4, 16, 256], strides = [1, 1, 1]} : vector<4x24x256xf32> to vector<4x16x256xf32>
    %c0_10 = arith.constant 0 : index
    %c0_11 = arith.constant 0 : index
    %17 = vector.load %arg6[%c0_10, %c0_11] : memref<1x256xf32, #tpu.memory_space<vmem>>, vector<1x256xf32>
    %18 = vector.shape_cast %17 : vector<1x256xf32> to vector<1x1x256xf32>
    %19 = vector.broadcast %18 : vector<1x1x256xf32> to vector<4x16x256xf32>
    %20 = arith.mulf %16, %19 : vector<4x16x256xf32>
    %c0_12 = arith.constant 0 : index
    %c0_13 = arith.constant 0 : index
    %21 = vector.load %arg7[%c0_12, %c0_13] : memref<1x256xf32, #tpu.memory_space<vmem>>, vector<1x256xf32>
    %22 = vector.shape_cast %21 : vector<1x256xf32> to vector<1x1x256xf32>
    %23 = vector.broadcast %22 : vector<1x1x256xf32> to vector<4x16x256xf32>
    %24 = arith.addf %20, %23 : vector<4x16x256xf32>
    %cst_14 = arith.constant 0.000000e+00 : f32
    %25 = vector.broadcast %cst_14 : f32 to vector<4x16x256xf32>
    %26 = arith.maximumf %24, %25 : vector<4x16x256xf32>
    %cst_15 = arith.constant 0.000000e+00 : f32
    %27 = vector.broadcast %cst_15 : f32 to vector<4x16x16xf32>
    %28 = vector.extract_strided_slice %26 {offsets = [0, 0, 0], sizes = [4, 16, 240], strides = [1, 1, 1]} : vector<4x16x256xf32> to vector<4x16x240xf32>
    %29 = tpu.concatenate %27, %28 in 2 : vector<4x16x16xf32>, vector<4x16x240xf32> -> vector<4x16x256xf32>
    %30 = vector.extract_strided_slice %26 {offsets = [0, 0, 16], sizes = [4, 16, 240], strides = [1, 1, 1]} : vector<4x16x256xf32> to vector<4x16x240xf32>
    %31 = tpu.concatenate %30, %27 in 2 : vector<4x16x240xf32>, vector<4x16x16xf32> -> vector<4x16x256xf32>
    %c0_16 = arith.constant 0 : index
    %c0_17 = arith.constant 0 : index
    %32 = vector.load %arg8[%c0_16, %c0_17] : memref<9x256xf32, #tpu.memory_space<vmem>>, vector<9x256xf32>
    %33 = vector.extract_strided_slice %32 {offsets = [0, 0], sizes = [1, 256], strides = [1, 1]} : vector<9x256xf32> to vector<1x256xf32>
    %34 = vector.shape_cast %33 : vector<1x256xf32> to vector<1x1x256xf32>
    %35 = vector.broadcast %34 : vector<1x1x256xf32> to vector<4x16x256xf32>
    %36 = arith.mulf %29, %35 : vector<4x16x256xf32>
    %37 = vector.extract_strided_slice %32 {offsets = [1, 0], sizes = [1, 256], strides = [1, 1]} : vector<9x256xf32> to vector<1x256xf32>
    %38 = vector.shape_cast %37 : vector<1x256xf32> to vector<1x1x256xf32>
    %39 = vector.broadcast %38 : vector<1x1x256xf32> to vector<4x16x256xf32>
    %40 = arith.mulf %26, %39 : vector<4x16x256xf32>
    %41 = arith.addf %36, %40 : vector<4x16x256xf32>
    %42 = vector.extract_strided_slice %32 {offsets = [2, 0], sizes = [1, 256], strides = [1, 1]} : vector<9x256xf32> to vector<1x256xf32>
    %43 = vector.shape_cast %42 : vector<1x256xf32> to vector<1x1x256xf32>
    %44 = vector.broadcast %43 : vector<1x1x256xf32> to vector<4x16x256xf32>
    %45 = arith.mulf %31, %44 : vector<4x16x256xf32>
    %46 = arith.addf %41, %45 : vector<4x16x256xf32>
    %47 = vector.extract_strided_slice %32 {offsets = [3, 0], sizes = [1, 256], strides = [1, 1]} : vector<9x256xf32> to vector<1x256xf32>
    %48 = vector.shape_cast %47 : vector<1x256xf32> to vector<1x1x256xf32>
    %49 = vector.broadcast %48 : vector<1x1x256xf32> to vector<4x16x256xf32>
    %50 = arith.mulf %29, %49 : vector<4x16x256xf32>
    %51 = vector.extract_strided_slice %32 {offsets = [4, 0], sizes = [1, 256], strides = [1, 1]} : vector<9x256xf32> to vector<1x256xf32>
    %52 = vector.shape_cast %51 : vector<1x256xf32> to vector<1x1x256xf32>
    %53 = vector.broadcast %52 : vector<1x1x256xf32> to vector<4x16x256xf32>
    %54 = arith.mulf %26, %53 : vector<4x16x256xf32>
    %55 = arith.addf %50, %54 : vector<4x16x256xf32>
    %56 = vector.extract_strided_slice %32 {offsets = [5, 0], sizes = [1, 256], strides = [1, 1]} : vector<9x256xf32> to vector<1x256xf32>
    %57 = vector.shape_cast %56 : vector<1x256xf32> to vector<1x1x256xf32>
    %58 = vector.broadcast %57 : vector<1x1x256xf32> to vector<4x16x256xf32>
    %59 = arith.mulf %31, %58 : vector<4x16x256xf32>
    %60 = arith.addf %55, %59 : vector<4x16x256xf32>
    %61 = vector.extract_strided_slice %32 {offsets = [6, 0], sizes = [1, 256], strides = [1, 1]} : vector<9x256xf32> to vector<1x256xf32>
    %62 = vector.shape_cast %61 : vector<1x256xf32> to vector<1x1x256xf32>
    %63 = vector.broadcast %62 : vector<1x1x256xf32> to vector<4x16x256xf32>
    %64 = arith.mulf %29, %63 : vector<4x16x256xf32>
    %65 = vector.extract_strided_slice %32 {offsets = [7, 0], sizes = [1, 256], strides = [1, 1]} : vector<9x256xf32> to vector<1x256xf32>
    %66 = vector.shape_cast %65 : vector<1x256xf32> to vector<1x1x256xf32>
    %67 = vector.broadcast %66 : vector<1x1x256xf32> to vector<4x16x256xf32>
    %68 = arith.mulf %26, %67 : vector<4x16x256xf32>
    %69 = arith.addf %64, %68 : vector<4x16x256xf32>
    %70 = vector.extract_strided_slice %32 {offsets = [8, 0], sizes = [1, 256], strides = [1, 1]} : vector<9x256xf32> to vector<1x256xf32>
    %71 = vector.shape_cast %70 : vector<1x256xf32> to vector<1x1x256xf32>
    %72 = vector.broadcast %71 : vector<1x1x256xf32> to vector<4x16x256xf32>
    %73 = arith.mulf %31, %72 : vector<4x16x256xf32>
    %74 = arith.addf %69, %73 : vector<4x16x256xf32>
    %cst_18 = arith.constant 0.000000e+00 : f32
    %75 = vector.broadcast %cst_18 : f32 to vector<4x1x256xf32>
    %76 = vector.extract_strided_slice %46 {offsets = [0, 0, 0], sizes = [4, 15, 256], strides = [1, 1, 1]} : vector<4x16x256xf32> to vector<4x15x256xf32>
    %77 = tpu.concatenate %75, %76 in 1 : vector<4x1x256xf32>, vector<4x15x256xf32> -> vector<4x16x256xf32>
    %78 = arith.addf %77, %60 : vector<4x16x256xf32>
    %79 = vector.extract_strided_slice %74 {offsets = [0, 1, 0], sizes = [4, 15, 256], strides = [1, 1, 1]} : vector<4x16x256xf32> to vector<4x15x256xf32>
    %80 = tpu.concatenate %79, %75 in 1 : vector<4x15x256xf32>, vector<4x1x256xf32> -> vector<4x16x256xf32>
    %81 = arith.addf %78, %80 : vector<4x16x256xf32>
    %c0_19 = arith.constant 0 : index
    %c0_20 = arith.constant 0 : index
    %82 = vector.load %arg9[%c0_19, %c0_20] : memref<1x256xf32, #tpu.memory_space<vmem>>, vector<1x256xf32>
    %83 = vector.shape_cast %82 : vector<1x256xf32> to vector<1x1x256xf32>
    %84 = vector.broadcast %83 : vector<1x1x256xf32> to vector<4x16x256xf32>
    %85 = arith.mulf %81, %84 : vector<4x16x256xf32>
    %c0_21 = arith.constant 0 : index
    %c0_22 = arith.constant 0 : index
    %86 = vector.load %arg10[%c0_21, %c0_22] : memref<1x256xf32, #tpu.memory_space<vmem>>, vector<1x256xf32>
    %87 = vector.shape_cast %86 : vector<1x256xf32> to vector<1x1x256xf32>
    %88 = vector.broadcast %87 : vector<1x1x256xf32> to vector<4x16x256xf32>
    %89 = arith.addf %85, %88 : vector<4x16x256xf32>
    %cst_23 = arith.constant 0.000000e+00 : f32
    %90 = vector.broadcast %cst_23 : f32 to vector<4x16x256xf32>
    %91 = arith.maximumf %89, %90 : vector<4x16x256xf32>
    %cst_24 = arith.constant dense<0.000000e+00> : vector<4x256xf32>
    %92 = vector.multi_reduction <add>, %91, %cst_24 [1] : vector<4x16x256xf32> to vector<4x256xf32>
    %c0_25 = arith.constant 0 : index
    %c0_26 = arith.constant 0 : index
    %93 = vector.load %arg11[%c0_25, %c0_26] : memref<256x8xf32, #tpu.memory_space<vmem>>, vector<256x8xf32>
    %cst_27 = arith.constant dense<0.000000e+00> : vector<4x8xf32>
    %94 = tpu.matmul %92, %93, %cst_27 {dimension_numbers = #tpu.dot_dimension_numbers<[1], [0], [0], [1], [0, 0, 1, 1], [], []>} : vector<4x256xf32>, vector<256x8xf32>, vector<4x8xf32> -> vector<4x8xf32>
    %c0_28 = arith.constant 0 : index
    %c0_29 = arith.constant 0 : index
    %95 = vector.load %arg12[%c0_28, %c0_29] : memref<1x8xf32, #tpu.memory_space<vmem>>, vector<1x8xf32>
    %96 = vector.broadcast %95 : vector<1x8xf32> to vector<4x8xf32>
    %97 = arith.addf %94, %96 : vector<4x8xf32>
    %cst_30 = arith.constant 0.000000e+00 : f32
    %98 = vector.broadcast %cst_30 : f32 to vector<4x8xf32>
    %99 = arith.maximumf %97, %98 : vector<4x8xf32>
    %c0_31 = arith.constant 0 : index
    %c0_32 = arith.constant 0 : index
    %100 = vector.load %arg13[%c0_31, %c0_32] : memref<8x256xf32, #tpu.memory_space<vmem>>, vector<8x256xf32>
    %cst_33 = arith.constant dense<0.000000e+00> : vector<4x256xf32>
    %101 = tpu.matmul %99, %100, %cst_33 {dimension_numbers = #tpu.dot_dimension_numbers<[1], [0], [0], [1], [0, 0, 1, 1], [], []>} : vector<4x8xf32>, vector<8x256xf32>, vector<4x256xf32> -> vector<4x256xf32>
    %c0_34 = arith.constant 0 : index
    %c0_35 = arith.constant 0 : index
    %102 = vector.load %arg14[%c0_34, %c0_35] : memref<1x256xf32, #tpu.memory_space<vmem>>, vector<1x256xf32>
    %103 = vector.broadcast %102 : vector<1x256xf32> to vector<4x256xf32>
    %104 = arith.addf %101, %103 : vector<4x256xf32>
    %105 = arith.negf %104 : vector<4x256xf32>
    %106 = math.exp %105 : vector<4x256xf32>
    %cst_36 = arith.constant 1.000000e+00 : f32
    %107 = vector.broadcast %cst_36 : f32 to vector<4x256xf32>
    %108 = arith.addf %107, %106 : vector<4x256xf32>
    %109 = arith.divf %107, %108 : vector<4x256xf32>
    %110 = vector.shape_cast %109 : vector<4x256xf32> to vector<4x1x256xf32>
    %111 = vector.broadcast %110 : vector<4x1x256xf32> to vector<4x16x256xf32>
    %112 = arith.mulf %91, %111 : vector<4x16x256xf32>
    %c0_37 = arith.constant 0 : index
    %c0_38 = arith.constant 0 : index
    %c0_39 = arith.constant 0 : index
    %113 = vector.load %arg2[%c0_37, %c0_38, %c0_39] : memref<4x16x256xf32, #tpu.memory_space<vmem>>, vector<4x16x256xf32>
    %114 = arith.addf %112, %113 : vector<4x16x256xf32>
    %cst_40 = arith.constant 0.000000e+00 : f32
    %115 = vector.broadcast %cst_40 : f32 to vector<4x16x256xf32>
    %116 = arith.maximumf %114, %115 : vector<4x16x256xf32>
    %c0_41 = arith.constant 0 : index
    %c0_42 = arith.constant 0 : index
    %c0_43 = arith.constant 0 : index
    %117 = vector.load %arg15[%c0_41, %c0_42, %c0_43] : memref<4x16x256xf32, #tpu.memory_space<vmem>>, vector<4x16x256xf32>
    tpu.vector_store %arg15[%c0_41, %c0_42, %c0_43], %116 {strides = array<i32>} : memref<4x16x256xf32, #tpu.memory_space<vmem>>, vector<4x16x256xf32>,
    return
  }
  func.func @transform_0(%arg0: i32) -> (i32, i32) {
    %c0_i32 = arith.constant 0 : i32
    %c0_i32_0 = arith.constant 0 : i32
    return %arg0, %c0_i32 : i32, i32
  }
  func.func @transform_1(%arg0: i32) -> (i32, i32, i32) {
    %c0_i32 = arith.constant 0 : i32
    %c0_i32_0 = arith.constant 0 : i32
    %c0_i32_1 = arith.constant 0 : i32
    return %arg0, %c0_i32, %c0_i32_0 : i32, i32, i32
  }
  func.func @transform_2(%arg0: i32) -> (i32, i32) {
    %c0_i32 = arith.constant 0 : i32
    %c0_i32_0 = arith.constant 0 : i32
    %c0_i32_1 = arith.constant 0 : i32
    return %c0_i32, %c0_i32_0 : i32, i32
  }
  func.func @transform_3(%arg0: i32) -> (i32, i32) {
    %c0_i32 = arith.constant 0 : i32
    %c0_i32_0 = arith.constant 0 : i32
    %c0_i32_1 = arith.constant 0 : i32
    return %c0_i32, %c0_i32_0 : i32, i32
  }
  func.func @transform_4(%arg0: i32) -> (i32, i32) {
    %c0_i32 = arith.constant 0 : i32
    %c0_i32_0 = arith.constant 0 : i32
    %c0_i32_1 = arith.constant 0 : i32
    return %c0_i32, %c0_i32_0 : i32, i32
  }
  func.func @transform_5(%arg0: i32) -> (i32, i32) {
    %c0_i32 = arith.constant 0 : i32
    %c0_i32_0 = arith.constant 0 : i32
    %c0_i32_1 = arith.constant 0 : i32
    return %c0_i32, %c0_i32_0 : i32, i32
  }
  func.func @transform_6(%arg0: i32) -> (i32, i32) {
    %c0_i32 = arith.constant 0 : i32
    %c0_i32_0 = arith.constant 0 : i32
    %c0_i32_1 = arith.constant 0 : i32
    return %c0_i32, %c0_i32_0 : i32, i32
  }
  func.func @transform_7(%arg0: i32) -> (i32, i32) {
    %c0_i32 = arith.constant 0 : i32
    %c0_i32_0 = arith.constant 0 : i32
    %c0_i32_1 = arith.constant 0 : i32
    return %c0_i32, %c0_i32_0 : i32, i32
  }
  func.func @transform_8(%arg0: i32) -> (i32, i32) {
    %c0_i32 = arith.constant 0 : i32
    %c0_i32_0 = arith.constant 0 : i32
    %c0_i32_1 = arith.constant 0 : i32
    return %c0_i32, %c0_i32_0 : i32, i32
  }
  func.func @transform_9(%arg0: i32) -> (i32, i32) {
    %c0_i32 = arith.constant 0 : i32
    %c0_i32_0 = arith.constant 0 : i32
    %c0_i32_1 = arith.constant 0 : i32
    return %c0_i32, %c0_i32_0 : i32, i32
  }
  func.func @transform_10(%arg0: i32) -> (i32, i32) {
    %c0_i32 = arith.constant 0 : i32
    %c0_i32_0 = arith.constant 0 : i32
    %c0_i32_1 = arith.constant 0 : i32
    return %c0_i32, %c0_i32_0 : i32, i32
  }
  func.func @transform_11(%arg0: i32) -> (i32, i32) {
    %c0_i32 = arith.constant 0 : i32
    %c0_i32_0 = arith.constant 0 : i32
    %c0_i32_1 = arith.constant 0 : i32
    return %c0_i32, %c0_i32_0 : i32, i32
  }
  func.func @transform_12(%arg0: i32) -> (i32, i32) {
    %c0_i32 = arith.constant 0 : i32
    %c0_i32_0 = arith.constant 0 : i32
    %c0_i32_1 = arith.constant 0 : i32
    return %c0_i32, %c0_i32_0 : i32, i32
  }
  func.func @transform_13(%arg0: i32) -> (i32, i32) {
    %c0_i32 = arith.constant 0 : i32
    %c0_i32_0 = arith.constant 0 : i32
    %c0_i32_1 = arith.constant 0 : i32
    return %c0_i32, %c0_i32_0 : i32, i32
  }
  func.func @transform_14(%arg0: i32) -> (i32, i32, i32) {
    %c0_i32 = arith.constant 0 : i32
    %c0_i32_0 = arith.constant 0 : i32
    %c0_i32_1 = arith.constant 0 : i32
    return %arg0, %c0_i32, %c0_i32_0 : i32, i32, i32
  }
}

</mosaic_0001>

<llo_original>
// kernel: tpu_custom_call.1
$region0: #{tpu_custom_call.1}
  #allocation0 [shape = 'u32[]', space=smem, size = 0x4, offset = 0x4, fixed_abs, tag = 'smem constant byte address 0x4 - core index']
  #allocation1 [shape = 'u32[144,128]{1,0:T(1,128)}', space=vmem, size = 0x12000, scoped, tag = 'internal scratch']
  %s0 = inlined_call_operand.hbm [shape: f32[192,384], index: 0, kind: input, shape index: {}]
  %s1 = inlined_call_operand.vmem [shape: f32[8,16,256], index: 1, kind: input, shape index: {}]
  %s2 = inlined_call_operand.hbm [shape: f32[384,256], index: 2, kind: input, shape index: {}]
  %s3 = inlined_call_operand.hbm [shape: f32[384,256], index: 3, kind: input, shape index: {}]
  %s4 = inlined_call_operand.hbm [shape: f32[384,256], index: 4, kind: input, shape index: {}]
  %s5 = inlined_call_operand.vmem [shape: f32[1,256], index: 5, kind: input, shape index: {}]
  %s6 = inlined_call_operand.hbm [shape: f32[1,256], index: 6, kind: input, shape index: {}]
  %s7 = inlined_call_operand.vmem [shape: f32[9,256], index: 7, kind: input, shape index: {}]
  %s8 = inlined_call_operand.hbm [shape: f32[1,256], index: 8, kind: input, shape index: {}]
  %s9 = inlined_call_operand.hbm [shape: f32[1,256], index: 9, kind: input, shape index: {}]
  %s10 = inlined_call_operand.vmem [shape: f32[256,8], index: 10, kind: input, shape index: {}]
  %s11 = inlined_call_operand.vmem [shape: f32[1,8], index: 11, kind: input, shape index: {}]
  %s12 = inlined_call_operand.vmem [shape: f32[8,256], index: 12, kind: input, shape index: {}]
  %s13 = inlined_call_operand.vmem [shape: f32[1,256], index: 13, kind: input, shape index: {}]
  %s14 = inlined_call_operand.hbm [shape: f32[8,16,256], index: 14, kind: output, shape index: {}]
  %s15 = sld [smem:[#allocation0]]
  $region117: #{tpu_custom_call.1} parent=0
    _
  %s17 = ssub.s32 1, %s15
  %s18 = scalar_select 0, %s17, %s15
  $region1: #{tpu_custom_call.1} parent=0
    #allocation2 [shape = 'u8[294912]{0}', space=vmem, size = 0x48000, scoped, tag = 'input window, operand 0']
    #allocation3 [shape = 's32[2]{0}', space=sflag, size = 0x8, scoped, tag = 'scoped memory for tpu_custom_call.1']
    #allocation4 [shape = 's32[2]{0}', space=sflag, size = 0x8, scoped, tag = 'scoped memory for tpu_custom_call.1']
    #allocation5 [shape = 'u8[393216]{0}', space=vmem, size = 0x60000, scoped, tag = 'input window, operand 2, single buffered']
    #allocation6 [shape = 's32[1]{0}', space=sflag, size = 0x4, scoped, tag = 'scoped memory for tpu_custom_call.1']
    #allocation7 [shape = 'u8[393216]{0}', space=vmem, size = 0x60000, scoped, tag = 'input window, operand 3, single buffered']
    #allocation8 [shape = 'u8[393216]{0}', space=vmem, size = 0x60000, scoped, tag = 'input window, operand 4, single buffered']
    #allocation9 [shape = 's32[1]{0}', space=sflag, size = 0x4, scoped, tag = 'scoped memory for tpu_custom_call.1']
    #allocation10 [shape = 'u8[1024]{0}', space=vmem, size = 0x400, scoped, tag = 'input window, operand 6, single buffered']
    #allocation11 [shape = 'u8[1024]{0}', space=vmem, size = 0x400, scoped, tag = 'input window, operand 8, single buffered']
    #allocation12 [shape = 's32[1]{0}', space=sflag, size = 0x4, scoped, tag = 'scoped memory for tpu_custom_call.1']
    #allocation13 [shape = 'u8[1024]{0}', space=vmem, size = 0x400, scoped, tag = 'input window, operand 9, single buffered']
    #allocation14 [shape = 'u8[131072]{0}', space=vmem, size = 0x20000, scoped, tag = 'output window, operand 0']
    %19 = vsyncpa [#allocation3], 0
    %s20 = scalar_lea.sflag [#allocation3], 1
    %21 = vsyncpa %s20, 0
    %22 = vsyncpa [#allocation6], 0
    %23 = vsyncpa [#allocation9], 0
    %24 = vsyncpa [#allocation12], 0
    %25 = vsyncpa [#allocation4], 0
    %s26 = scalar_lea.sflag [#allocation4], 1
    %27 = vsyncpa %s26, 0
    loop: start=0, step=1, limit=4
    $region2: #{tpu_custom_call.1} parent=1 // loop_pre_header
      _
    $region3: #{tpu_custom_call.1} parent=1 // loop_header
      %s29 = sphi 0, %s33
      %p30 = scmp.ge.s32.totalorder %s29, 4
      %s39 = sphi 0, %s41
      %s42 = sphi 0, %s39
      %s43 = sphi 0, %s42
      %s59 = sphi 0, %s43
      %s65 = sphi 0, %s67
      %s68 = sphi 0, %s65
      %s69 = sphi 0, %s68
      %s85 = sphi 0, %s69
      %s89 = sphi 0, %s89
      %s91 = sphi 0, %s89
      %s92 = sphi 0, %s91
      %s106 = sphi 0, %s92
      %s110 = sphi 0, %s110
      %s112 = sphi 0, %s110
      %s113 = sphi 0, %s112
      %s127 = sphi 0, %s113
      %s131 = sphi 0, %s131
      %s133 = sphi 0, %s131
      %s134 = sphi 0, %s133
      %s148 = sphi 0, %s134
      %s152 = sphi 0, %s152
      %s154 = sphi 0, %s152
      %s155 = sphi 0, %s154
      %s169 = sphi 0, %s155
      %s173 = sphi 0, %s173
      %s175 = sphi 0, %s173
      %s176 = sphi 0, %s175
      %s190 = sphi 0, %s176
      %s194 = sphi 0, %s194
      %s196 = sphi 0, %s194
      %s197 = sphi 0, %s196
      %s211 = sphi 0, %s197
      %s215 = sphi 0, %s215
      %s217 = sphi 0, %s215
      %s218 = sphi 0, %s217
      %s232 = sphi 0, %s218
      %s236 = sphi 0, %s236
      %s238 = sphi 0, %s236
      %s239 = sphi 0, %s238
      %s253 = sphi 0, %s239
      %s257 = sphi 0, %s257
      %s259 = sphi 0, %s257
      %s260 = sphi 0, %s259
      %s274 = sphi 0, %s260
      %s278 = sphi 0, %s278
      %s280 = sphi 0, %s278
      %s281 = sphi 0, %s280
      %s295 = sphi 0, %s281
      %s299 = sphi 0, %s299
      %s301 = sphi 0, %s299
      %s302 = sphi 0, %s301
      %s316 = sphi 0, %s302
      %s320 = sphi 0, %s320
      %s322 = sphi 0, %s320
      %s323 = sphi 0, %s322
      %s337 = sphi 0, %s323
      %s343 = sphi 0, %s345
      %s346 = sphi 0, %s343
      %s347 = sphi 0, %s346
      %s363 = sphi 0, %s347
    $region4: #{tpu_custom_call.1} parent=1 // loop_header_branch
      %32 = sbr.rel (%p30) target = $region8
    $region5: #{tpu_custom_call.1} parent=1 // loop_body
      %s34 = ssub.s32 %s29, 1
      %s35 = ssub.s32 %s29, 2
      %s36 = sadd.s32 %s29, 1
      %s37 = ssub.s32 %s29, %s36
      %p38 = scmp.eq.s32.totalorder %s37, 0
      %s40 = sadd.s32 %s39, 1
      %s41 = scalar_select %p38, %s39, %s40
      %p44 = pneg %p38
      %p45 = scmp.eq.s32.totalorder %s29, 1
      %p46 = por %p44, %p45
      %p47 = scmp.ne.s32.totalorder %s39, %s42
      %p48 = scmp.eq.s32.totalorder %s29, 0
      %p49 = por %p47, %p48
      %p50 = scmp.ne.s32.totalorder %s39, %s42
      %p51 = scmp.eq.s32.totalorder %s34, 1
      %p52 = por %p50, %p51
      %p53 = scmp.ne.s32.totalorder %s42, %s43
      %p54 = scmp.eq.s32.totalorder %s34, 0
      %p55 = por %p53, %p54
      %p56 = scmp.ne.s32.totalorder %s42, %s43
      %p57 = scmp.eq.s32.totalorder %s35, 1
      %p58 = por %p56, %p57
      %p60 = scmp.ne.s32.totalorder %s43, %s59
      %p61 = scmp.eq.s32.totalorder %s35, 0
      %p62 = por %p60, %p61
      %s63 = ssub.s32 %s29, %s36
      %p64 = scmp.eq.s32.totalorder %s63, 0
      %s66 = sadd.s32 %s65, 1
      %s67 = scalar_select %p64, %s65, %s66
      %p70 = pneg %p64
      %p71 = scmp.eq.s32.totalorder %s29, 1
      %p72 = por %p70, %p71
      %p73 = scmp.ne.s32.totalorder %s65, %s68
      %p74 = scmp.eq.s32.totalorder %s29, 0
      %p75 = por %p73, %p74
      %p76 = scmp.ne.s32.totalorder %s65, %s68
      %p77 = scmp.eq.s32.totalorder %s34, 1
      %p78 = por %p76, %p77
      %p79 = scmp.ne.s32.totalorder %s68, %s69
      %p80 = scmp.eq.s32.totalorder %s34, 0
      %p81 = por %p79, %p80
      %p82 = scmp.ne.s32.totalorder %s68, %s69
      %p83 = scmp.eq.s32.totalorder %s35, 1
      %p84 = por %p82, %p83
      %p86 = scmp.ne.s32.totalorder %s69, %s85
      %p87 = scmp.eq.s32.totalorder %s35, 0
      %p88 = por %p86, %p87
      %s90 = sadd.s32 %s89, 1
      %p93 = scmp.eq.s32.totalorder %s29, 1
      %p94 = scmp.ne.s32.totalorder %s89, %s91
      %p95 = scmp.eq.s32.totalorder %s29, 0
      %p96 = por %p94, %p95
      %p97 = scmp.ne.s32.totalorder %s89, %s91
      %p98 = scmp.eq.s32.totalorder %s34, 1
      %p99 = por %p97, %p98
      %p100 = scmp.ne.s32.totalorder %s91, %s92
      %p101 = scmp.eq.s32.totalorder %s34, 0
      %p102 = por %p100, %p101
      %p103 = scmp.ne.s32.totalorder %s91, %s92
      %p104 = scmp.eq.s32.totalorder %s35, 1
      %p105 = por %p103, %p104
      %p107 = scmp.ne.s32.totalorder %s92, %s106
      %p108 = scmp.eq.s32.totalorder %s35, 0
      %p109 = por %p107, %p108
      %s111 = sadd.s32 %s110, 1
      %p114 = scmp.eq.s32.totalorder %s29, 1
      %p115 = scmp.ne.s32.totalorder %s110, %s112
      %p116 = scmp.eq.s32.totalorder %s29, 0
      %p117 = por %p115, %p116
      %p118 = scmp.ne.s32.totalorder %s110, %s112
      %p119 = scmp.eq.s32.totalorder %s34, 1
      %p120 = por %p118, %p119
      %p121 = scmp.ne.s32.totalorder %s112, %s113
      %p122 = scmp.eq.s32.totalorder %s34, 0
      %p123 = por %p121, %p122
      %p124 = scmp.ne.s32.totalorder %s112, %s113
      %p125 = scmp.eq.s32.totalorder %s35, 1
      %p126 = por %p124, %p125
      %p128 = scmp.ne.s32.totalorder %s113, %s127
      %p129 = scmp.eq.s32.totalorder %s35, 0
      %p130 = por %p128, %p129
      %s132 = sadd.s32 %s131, 1
      %p135 = scmp.eq.s32.totalorder %s29, 1
      %p136 = scmp.ne.s32.totalorder %s131, %s133
      %p137 = scmp.eq.s32.totalorder %s29, 0
      %p138 = por %p136, %p137
      %p139 = scmp.ne.s32.totalorder %s131, %s133
      %p140 = scmp.eq.s32.totalorder %s34, 1
      %p141 = por %p139, %p140
      %p142 = scmp.ne.s32.totalorder %s133, %s134
      %p143 = scmp.eq.s32.totalorder %s34, 0
      %p144 = por %p142, %p143
      %p145 = scmp.ne.s32.totalorder %s133, %s134
      %p146 = scmp.eq.s32.totalorder %s35, 1
      %p147 = por %p145, %p146
      %p149 = scmp.ne.s32.totalorder %s134, %s148
      %p150 = scmp.eq.s32.totalorder %s35, 0
      %p151 = por %p149, %p150
      %s153 = sadd.s32 %s152, 1
      %p156 = scmp.eq.s32.totalorder %s29, 1
      %p157 = scmp.ne.s32.totalorder %s152, %s154
      %p158 = scmp.eq.s32.totalorder %s29, 0
      %p159 = por %p157, %p158
      %p160 = scmp.ne.s32.totalorder %s152, %s154
      %p161 = scmp.eq.s32.totalorder %s34, 1
      %p162 = por %p160, %p161
      %p163 = scmp.ne.s32.totalorder %s154, %s155
      %p164 = scmp.eq.s32.totalorder %s34, 0
      %p165 = por %p163, %p164
      %p166 = scmp.ne.s32.totalorder %s154, %s155
      %p167 = scmp.eq.s32.totalorder %s35, 1
      %p168 = por %p166, %p167
      %p170 = scmp.ne.s32.totalorder %s155, %s169
      %p171 = scmp.eq.s32.totalorder %s35, 0
      %p172 = por %p170, %p171
      %s174 = sadd.s32 %s173, 1
      %p177 = scmp.eq.s32.totalorder %s29, 1
      %p178 = scmp.ne.s32.totalorder %s173, %s175
      %p179 = scmp.eq.s32.totalorder %s29, 0
      %p180 = por %p178, %p179
      %p181 = scmp.ne.s32.totalorder %s173, %s175
      %p182 = scmp.eq.s32.totalorder %s34, 1
      %p183 = por %p181, %p182
      %p184 = scmp.ne.s32.totalorder %s175, %s176
      %p185 = scmp.eq.s32.totalorder %s34, 0
      %p186 = por %p184, %p185
      %p187 = scmp.ne.s32.totalorder %s175, %s176
      %p188 = scmp.eq.s32.totalorder %s35, 1
      %p189 = por %p187, %p188
      %p191 = scmp.ne.s32.totalorder %s176, %s190
      %p192 = scmp.eq.s32.totalorder %s35, 0
      %p193 = por %p191, %p192
      %s195 = sadd.s32 %s194, 1
      %p198 = scmp.eq.s32.totalorder %s29, 1
      %p199 = scmp.ne.s32.totalorder %s194, %s196
      %p200 = scmp.eq.s32.totalorder %s29, 0
      %p201 = por %p199, %p200
      %p202 = scmp.ne.s32.totalorder %s194, %s196
      %p203 = scmp.eq.s32.totalorder %s34, 1
      %p204 = por %p202, %p203
      %p205 = scmp.ne.s32.totalorder %s196, %s197
      %p206 = scmp.eq.s32.totalorder %s34, 0
      %p207 = por %p205, %p206
      %p208 = scmp.ne.s32.totalorder %s196, %s197
      %p209 = scmp.eq.s32.totalorder %s35, 1
      %p210 = por %p208, %p209
      %p212 = scmp.ne.s32.totalorder %s197, %s211
      %p213 = scmp.eq.s32.totalorder %s35, 0
      %p214 = por %p212, %p213
      %s216 = sadd.s32 %s215, 1
      %p219 = scmp.eq.s32.totalorder %s29, 1
      %p220 = scmp.ne.s32.totalorder %s215, %s217
      %p221 = scmp.eq.s32.totalorder %s29, 0
      %p222 = por %p220, %p221
      %p223 = scmp.ne.s32.totalorder %s215, %s217
      %p224 = scmp.eq.s32.totalorder %s34, 1
      %p225 = por %p223, %p224
      %p226 = scmp.ne.s32.totalorder %s217, %s218
      %p227 = scmp.eq.s32.totalorder %s34, 0
      %p228 = por %p226, %p227
      %p229 = scmp.ne.s32.totalorder %s217, %s218
      %p230 = scmp.eq.s32.totalorder %s35, 1
      %p231 = por %p229, %p230
      %p233 = scmp.ne.s32.totalorder %s218, %s232
      %p234 = scmp.eq.s32.totalorder %s35, 0
      %p235 = por %p233, %p234
      %s237 = sadd.s32 %s236, 1
      %p240 = scmp.eq.s32.totalorder %s29, 1
      %p241 = scmp.ne.s32.totalorder %s236, %s238
      %p242 = scmp.eq.s32.totalorder %s29, 0
      %p243 = por %p241, %p242
      %p244 = scmp.ne.s32.totalorder %s236, %s238
      %p245 = scmp.eq.s32.totalorder %s34, 1
      %p246 = por %p244, %p245
      %p247 = scmp.ne.s32.totalorder %s238, %s239
      %p248 = scmp.eq.s32.totalorder %s34, 0
      %p249 = por %p247, %p248
      %p250 = scmp.ne.s32.totalorder %s238, %s239
      %p251 = scmp.eq.s32.totalorder %s35, 1
      %p252 = por %p250, %p251
      %p254 = scmp.ne.s32.totalorder %s239, %s253
      %p255 = scmp.eq.s32.totalorder %s35, 0
      %p256 = por %p254, %p255
      %s258 = sadd.s32 %s257, 1
      %p261 = scmp.eq.s32.totalorder %s29, 1
      %p262 = scmp.ne.s32.totalorder %s257, %s259
      %p263 = scmp.eq.s32.totalorder %s29, 0
      %p264 = por %p262, %p263
      %p265 = scmp.ne.s32.totalorder %s257, %s259
      %p266 = scmp.eq.s32.totalorder %s34, 1
      %p267 = por %p265, %p266
      %p268 = scmp.ne.s32.totalorder %s259, %s260
      %p269 = scmp.eq.s32.totalorder %s34, 0
      %p270 = por %p268, %p269
      %p271 = scmp.ne.s32.totalorder %s259, %s260
      %p272 = scmp.eq.s32.totalorder %s35, 1
      %p273 = por %p271, %p272
      %p275 = scmp.ne.s32.totalorder %s260, %s274
      %p276 = scmp.eq.s32.totalorder %s35, 0
      %p277 = por %p275, %p276
      %s279 = sadd.s32 %s278, 1
      %p282 = scmp.eq.s32.totalorder %s29, 1
      %p283 = scmp.ne.s32.totalorder %s278, %s280
      %p284 = scmp.eq.s32.totalorder %s29, 0
      %p285 = por %p283, %p284
      %p286 = scmp.ne.s32.totalorder %s278, %s280
      %p287 = scmp.eq.s32.totalorder %s34, 1
      %p288 = por %p286, %p287
      %p289 = scmp.ne.s32.totalorder %s280, %s281
      %p290 = scmp.eq.s32.totalorder %s34, 0
      %p291 = por %p289, %p290
      %p292 = scmp.ne.s32.totalorder %s280, %s281
      %p293 = scmp.eq.s32.totalorder %s35, 1
      %p294 = por %p292, %p293
      %p296 = scmp.ne.s32.totalorder %s281, %s295
      %p297 = scmp.eq.s32.totalorder %s35, 0
      %p298 = por %p296, %p297
      %s300 = sadd.s32 %s299, 1
      %p303 = scmp.eq.s32.totalorder %s29, 1
      %p304 = scmp.ne.s32.totalorder %s299, %s301
      %p305 = scmp.eq.s32.totalorder %s29, 0
      %p306 = por %p304, %p305
      %p307 = scmp.ne.s32.totalorder %s299, %s301
      %p308 = scmp.eq.s32.totalorder %s34, 1
      %p309 = por %p307, %p308
      %p310 = scmp.ne.s32.totalorder %s301, %s302
      %p311 = scmp.eq.s32.totalorder %s34, 0
      %p312 = por %p310, %p311
      %p313 = scmp.ne.s32.totalorder %s301, %s302
      %p314 = scmp.eq.s32.totalorder %s35, 1
      %p315 = por %p313, %p314
      %p317 = scmp.ne.s32.totalorder %s302, %s316
      %p318 = scmp.eq.s32.totalorder %s35, 0
      %p319 = por %p317, %p318
      %s321 = sadd.s32 %s320, 1
      %p324 = scmp.eq.s32.totalorder %s29, 1
      %p325 = scmp.ne.s32.totalorder %s320, %s322
      %p326 = scmp.eq.s32.totalorder %s29, 0
      %p327 = por %p325, %p326
      %p328 = scmp.ne.s32.totalorder %s320, %s322
      %p329 = scmp.eq.s32.totalorder %s34, 1
      %p330 = por %p328, %p329
      %p331 = scmp.ne.s32.totalorder %s322, %s323
      %p332 = scmp.eq.s32.totalorder %s34, 0
      %p333 = por %p331, %p332
      %p334 = scmp.ne.s32.totalorder %s322, %s323
      %p335 = scmp.eq.s32.totalorder %s35, 1
      %p336 = por %p334, %p335
      %p338 = scmp.ne.s32.totalorder %s323, %s337
      %p339 = scmp.eq.s32.totalorder %s35, 0
      %p340 = por %p338, %p339
      %s341 = ssub.s32 %s29, %s36
      %p342 = scmp.eq.s32.totalorder %s341, 0
      %s344 = sadd.s32 %s343, 1
      %s345 = scalar_select %p342, %s343, %s344
      %p348 = pneg %p342
      %p349 = scmp.eq.s32.totalorder %s29, 1
      %p350 = por %p348, %p349
      %p351 = scmp.ne.s32.totalorder %s343, %s346
      %p352 = scmp.eq.s32.totalorder %s29, 0
      %p353 = por %p351, %p352
      %p354 = scmp.ne.s32.totalorder %s343, %s346
      %p355 = scmp.eq.s32.totalorder %s34, 1
      %p356 = por %p354, %p355
      %p357 = scmp.ne.s32.totalorder %s346, %s347
      %p358 = scmp.eq.s32.totalorder %s34, 0
      %p359 = por %p357, %p358
      %p360 = scmp.ne.s32.totalorder %s346, %s347
      %p361 = scmp.eq.s32.totalorder %s35, 1
      %p362 = por %p360, %p361
      %p364 = scmp.ne.s32.totalorder %s347, %s363
      %p365 = scmp.eq.s32.totalorder %s35, 0
      %p366 = por %p364, %p365
      %p367 = scmp.le.s32.totalorder 1, %s29
      %p368 = scmp.lt.s32.totalorder %s29, 3
      %p369 = pnand %p367, %p368
      %p370 = pneg %p369
      // Predicated region
      $region9: #{tpu_custom_call.1} parent=5 // pred_check
        _
      $region10: #{tpu_custom_call.1} parent=5 // pred_check_branch
        %372 = sbr.rel (%p369) target = $region12
      $region11: #{tpu_custom_call.1} parent=5 // pred_region
        %s373 = ssub.s32 %s29, 1
        // Predicated region
        $region13: #{tpu_custom_call.1} parent=11 // pred_check
          %p374 = pneg %p102
        $region14: #{tpu_custom_call.1} parent=11 // pred_check_branch
          %376 = sbr.rel (%p374) target = $region16
        $region15: #{tpu_custom_call.1} parent=11 // pred_region
          %s378 = ssub.s32 12288, 12288
          %379 = vsyncadd [#allocation6], %s378
          %s380 = sshll.u32 [#allocation5], 4
          %s381 = int_to_ptr.vmem [resolvable:$true] %s380
          %386 = dma.hbm_to_vmem [thread:$0]  %s2, 12288, %s381, [#allocation6], 256, 256, 16
        $region16: #{tpu_custom_call.1} parent=11 // pred_fallthru
          _
        // Predicated region
        $region17: #{tpu_custom_call.1} parent=11 // pred_check
          %p387 = pneg %p123
        $region18: #{tpu_custom_call.1} parent=11 // pred_check_branch
          %389 = sbr.rel (%p387) target = $region20
        $region19: #{tpu_custom_call.1} parent=11 // pred_region
          %s391 = ssub.s32 12288, 12288
          %392 = vsyncadd [#allocation6], %s391
          %s393 = sshll.u32 [#allocation7], 4
          %s394 = int_to_ptr.vmem [resolvable:$true] %s393
          %399 = dma.hbm_to_vmem [thread:$0]  %s3, 12288, %s394, [#allocation6], 256, 256, 16
        $region20: #{tpu_custom_call.1} parent=11 // pred_fallthru
          _
        // Predicated region
        $region21: #{tpu_custom_call.1} parent=11 // pred_check
          %p400 = pneg %p144
        $region22: #{tpu_custom_call.1} parent=11 // pred_check_branch
          %402 = sbr.rel (%p400) target = $region24
        $region23: #{tpu_custom_call.1} parent=11 // pred_region
          %s404 = ssub.s32 12288, 12288
          %405 = vsyncadd [#allocation9], %s404
          %s406 = sshll.u32 [#allocation8], 4
          %s407 = int_to_ptr.vmem [resolvable:$true] %s406
          %412 = dma.hbm_to_vmem [thread:$0]  %s4, 12288, %s407, [#allocation9], 256, 256, 16
        $region24: #{tpu_custom_call.1} parent=11 // pred_fallthru
          _
        // Predicated region
        $region25: #{tpu_custom_call.1} parent=11 // pred_check
          %p413 = pneg %p165
        $region26: #{tpu_custom_call.1} parent=11 // pred_check_branch
          %415 = sbr.rel (%p413) target = $region28
        $region27: #{tpu_custom_call.1} parent=11 // pred_region
          _
        $region28: #{tpu_custom_call.1} parent=11 // pred_fallthru
          _
        // Predicated region
        $region29: #{tpu_custom_call.1} parent=11 // pred_check
          %p416 = pneg %p186
        $region30: #{tpu_custom_call.1} parent=11 // pred_check_branch
          %418 = sbr.rel (%p416) target = $region32
        $region31: #{tpu_custom_call.1} parent=11 // pred_region
          %s420 = ssub.s32 32, 32
          %421 = vsyncadd [#allocation9], %s420
          %s423 = sshll.u32 [#allocation10], 4
          %s424 = int_to_ptr.vmem [resolvable:$true] %s423
          %426 = dma.hbm_to_vmem [thread:$0]  %s6, 32, %s424, [#allocation9]
        $region32: #{tpu_custom_call.1} parent=11 // pred_fallthru
          _
        // Predicated region
        $region33: #{tpu_custom_call.1} parent=11 // pred_check
          %p427 = pneg %p207
        $region34: #{tpu_custom_call.1} parent=11 // pred_check_branch
          %429 = sbr.rel (%p427) target = $region36
        $region35: #{tpu_custom_call.1} parent=11 // pred_region
          _
        $region36: #{tpu_custom_call.1} parent=11 // pred_fallthru
          _
        // Predicated region
        $region37: #{tpu_custom_call.1} parent=11 // pred_check
          %p430 = pneg %p228
        $region38: #{tpu_custom_call.1} parent=11 // pred_check_branch
          %432 = sbr.rel (%p430) target = $region40
        $region39: #{tpu_custom_call.1} parent=11 // pred_region
          %s434 = ssub.s32 32, 32
          %435 = vsyncadd [#allocation12], %s434
          %s437 = sshll.u32 [#allocation11], 4
          %s438 = int_to_ptr.vmem [resolvable:$true] %s437
          %440 = dma.hbm_to_vmem [thread:$0]  %s8, 32, %s438, [#allocation12]
        $region40: #{tpu_custom_call.1} parent=11 // pred_fallthru
          _
        // Predicated region
        $region41: #{tpu_custom_call.1} parent=11 // pred_check
          %p441 = pneg %p249
        $region42: #{tpu_custom_call.1} parent=11 // pred_check_branch
          %443 = sbr.rel (%p441) target = $region44
        $region43: #{tpu_custom_call.1} parent=11 // pred_region
          %s445 = ssub.s32 32, 32
          %446 = vsyncadd [#allocation12], %s445
          %s448 = sshll.u32 [#allocation13], 4
          %s449 = int_to_ptr.vmem [resolvable:$true] %s448
          %451 = dma.hbm_to_vmem [thread:$0]  %s9, 32, %s449, [#allocation12]
        $region44: #{tpu_custom_call.1} parent=11 // pred_fallthru
          _
        // Predicated region
        $region45: #{tpu_custom_call.1} parent=11 // pred_check
          %p452 = pneg %p270
        $region46: #{tpu_custom_call.1} parent=11 // pred_check_branch
          %454 = sbr.rel (%p452) target = $region48
        $region47: #{tpu_custom_call.1} parent=11 // pred_region
          _
        $region48: #{tpu_custom_call.1} parent=11 // pred_fallthru
          _
        // Predicated region
        $region49: #{tpu_custom_call.1} parent=11 // pred_check
          %p455 = pneg %p291
        $region50: #{tpu_custom_call.1} parent=11 // pred_check_branch
          %457 = sbr.rel (%p455) target = $region52
        $region51: #{tpu_custom_call.1} parent=11 // pred_region
          _
        $region52: #{tpu_custom_call.1} parent=11 // pred_fallthru
          _
        // Predicated region
        $region53: #{tpu_custom_call.1} parent=11 // pred_check
          %p458 = pneg %p312
        $region54: #{tpu_custom_call.1} parent=11 // pred_check_branch
          %460 = sbr.rel (%p458) target = $region56
        $region55: #{tpu_custom_call.1} parent=11 // pred_region
          _
        $region56: #{tpu_custom_call.1} parent=11 // pred_fallthru
          _
        // Predicated region
        $region57: #{tpu_custom_call.1} parent=11 // pred_check
          %p461 = pneg %p333
        $region58: #{tpu_custom_call.1} parent=11 // pred_check_branch
          %463 = sbr.rel (%p461) target = $region60
        $region59: #{tpu_custom_call.1} parent=11 // pred_region
          _
        $region60: #{tpu_custom_call.1} parent=11 // pred_fallthru
          _
      $region12: #{tpu_custom_call.1} parent=5 // pred_fallthru
        _
      %p464 = scmp.lt.s32.totalorder %s29, 2
      // Predicated region
      $region61: #{tpu_custom_call.1} parent=5 // pred_check
        %p465 = pneg %p464
      $region62: #{tpu_custom_call.1} parent=5 // pred_check_branch
        %467 = sbr.rel (%p465) target = $region64
      $region63: #{tpu_custom_call.1} parent=5 // pred_region
        // Predicated region
        $region65: #{tpu_custom_call.1} parent=63 // pred_check
          %p468 = pneg %p49
        $region66: #{tpu_custom_call.1} parent=63 // pred_check_branch
          %470 = sbr.rel (%p468) target = $region68
        $region67: #{tpu_custom_call.1} parent=63 // pred_region
          %s471 = sand.u32 %s39, 1
          %s472 = scalar_lea.sflag [#allocation3], %s471
          %s473 = sand.u32 %s39, 1
          %s474 = smul.addr %s473, 288
          %s475 = scalar_lea.vmem [#allocation2], %s474
          %s476 = smul.u32 12, %s29
          %s478 = ssub.s32 4608, 4608
          %479 = vsyncadd %s472, %s478
          %s480 = smul.addr %s476, 3
          %s481 = smul.addr %s480, 128
          %s482 = scalar_lea.hbm %s0, %s481
          %s483 = sshll.u32 %s475, 4
          %s484 = int_to_ptr.vmem [resolvable:$true] %s483
          %489 = dma.hbm_to_vmem [thread:$0]  %s482, 4608, %s484, %s472, 384, 384, 24
        $region68: #{tpu_custom_call.1} parent=63 // pred_fallthru
          _
        // Predicated region
        $region69: #{tpu_custom_call.1} parent=63 // pred_check
          %p490 = pneg %p75
        $region70: #{tpu_custom_call.1} parent=63 // pred_check_branch
          %492 = sbr.rel (%p490) target = $region72
        $region71: #{tpu_custom_call.1} parent=63 // pred_region
          %s493 = smul.u32 4, %s29
          %p494 = scmp.lt.s32.totalorder %s493, 7
          %s495 = scalar_select %p494, %s493, 7
          %s496 = smul.addr %s495, 4
          %s497 = smul.addr %s496, 8
          %s498 = scalar_lea.vmem %s1, %s497
          %s499 = smul.u32 4, %s29
        $region72: #{tpu_custom_call.1} parent=63 // pred_fallthru
          _
      $region64: #{tpu_custom_call.1} parent=5 // pred_fallthru
        _
      %p500 = scmp.le.s32.totalorder 1, %s29
      %p501 = scmp.lt.s32.totalorder %s29, 3
      %p502 = pnand %p500, %p501
      %p503 = pneg %p502
      // Predicated region
      $region73: #{tpu_custom_call.1} parent=5 // pred_check
        _
      $region74: #{tpu_custom_call.1} parent=5 // pred_check_branch
        %505 = sbr.rel (%p502) target = $region76
      $region75: #{tpu_custom_call.1} parent=5 // pred_region
        %s506 = ssub.s32 %s29, 1
        %s507 = sand.u32 %s42, 1
        %s508 = scalar_lea.sflag [#allocation3], %s507
        %s509 = sand.u32 %s42, 1
        %s510 = smul.addr %s509, 288
        %s511 = scalar_lea.vmem [#allocation2], %s510
        // Predicated region
        $region77: #{tpu_custom_call.1} parent=75 // pred_check
          %p512 = pneg %p55
        $region78: #{tpu_custom_call.1} parent=75 // pred_check_branch
          %514 = sbr.rel (%p512) target = $region80
        $region79: #{tpu_custom_call.1} parent=75 // pred_region
          %515 = dma.done %s508, 4608
        $region80: #{tpu_custom_call.1} parent=75 // pred_fallthru
          _
        // Predicated region
        $region81: #{tpu_custom_call.1} parent=75 // pred_check
          %p516 = pneg %p102
        $region82: #{tpu_custom_call.1} parent=75 // pred_check_branch
          %518 = sbr.rel (%p516) target = $region84
        $region83: #{tpu_custom_call.1} parent=75 // pred_region
          %519 = dma.done [#allocation6], 12288
        $region84: #{tpu_custom_call.1} parent=75 // pred_fallthru
          _
        // Predicated region
        $region85: #{tpu_custom_call.1} parent=75 // pred_check
          %p520 = pneg %p123
        $region86: #{tpu_custom_call.1} parent=75 // pred_check_branch
          %522 = sbr.rel (%p520) target = $region88
        $region87: #{tpu_custom_call.1} parent=75 // pred_region
          %523 = dma.done [#allocation6], 12288
        $region88: #{tpu_custom_call.1} parent=75 // pred_fallthru
          _
        // Predicated region
        $region89: #{tpu_custom_call.1} parent=75 // pred_check
          %p524 = pneg %p144
        $region90: #{tpu_custom_call.1} parent=75 // pred_check_branch
          %526 = sbr.rel (%p524) target = $region92
        $region91: #{tpu_custom_call.1} parent=75 // pred_region
          %527 = dma.done [#allocation9], 12288
        $region92: #{tpu_custom_call.1} parent=75 // pred_fallthru
          _
        // Predicated region
        $region93: #{tpu_custom_call.1} parent=75 // pred_check
          %p528 = pneg %p186
        $region94: #{tpu_custom_call.1} parent=75 // pred_check_branch
          %530 = sbr.rel (%p528) target = $region96
        $region95: #{tpu_custom_call.1} parent=75 // pred_region
          %531 = dma.done [#allocation9], 32
        $region96: #{tpu_custom_call.1} parent=75 // pred_fallthru
          _
        // Predicated region
        $region97: #{tpu_custom_call.1} parent=75 // pred_check
          %p532 = pneg %p228
        $region98: #{tpu_custom_call.1} parent=75 // pred_check_branch
          %534 = sbr.rel (%p532) target = $region100
        $region99: #{tpu_custom_call.1} parent=75 // pred_region
          %535 = dma.done [#allocation12], 32
        $region100: #{tpu_custom_call.1} parent=75 // pred_fallthru
          _
        // Predicated region
        $region101: #{tpu_custom_call.1} parent=75 // pred_check
          %p536 = pneg %p249
        $region102: #{tpu_custom_call.1} parent=75 // pred_check_branch
          %538 = sbr.rel (%p536) target = $region104
        $region103: #{tpu_custom_call.1} parent=75 // pred_region
          %539 = dma.done [#allocation12], 32
        $region104: #{tpu_custom_call.1} parent=75 // pred_fallthru
          _
        %s540 = sand.u32 %s42, 1
        %s541 = scalar_lea.sflag [#allocation3], %s540
        %s542 = sand.u32 %s42, 1
        %s543 = smul.addr %s542, 288
        %s544 = scalar_lea.vmem [#allocation2], %s543
        %p545 = pneg %p55
        %p546 = pneg %p52
        %s547 = smul.u32 4, %s34
        %p548 = scmp.lt.s32.totalorder %s547, 7
        %s549 = scalar_select %p548, %s547, 7
        %s550 = smul.addr %s549, 4
        %s551 = smul.addr %s550, 8
        %s552 = scalar_lea.vmem %s1, %s551
        %p553 = pneg %p81
        %p554 = pneg %p78
        %p555 = pneg %p102
        %p556 = pneg %p99
        %p557 = pneg %p123
        %p558 = pneg %p120
        %p559 = pneg %p144
        %p560 = pneg %p141
        %p561 = pneg %p165
        %p562 = pneg %p162
        %p563 = pneg %p186
        %p564 = pneg %p183
        %p565 = pneg %p207
        %p566 = pneg %p204
        %p567 = pneg %p228
        %p568 = pneg %p225
        %p569 = pneg %p249
        %p570 = pneg %p246
        %p571 = pneg %p270
        %p572 = pneg %p267
        %p573 = pneg %p291
        %p574 = pneg %p288
        %p575 = pneg %p312
        %p576 = pneg %p309
        %p577 = pneg %p333
        %p578 = pneg %p330
        %p579 = pneg %p359
        %p580 = pneg %p356
        %s581 = sand.u32 %s346, 1
        %s582 = scalar_lea.sflag [#allocation4], %s581
        %s583 = sand.u32 %s346, 1
        %s584 = smul.addr %s583, 128
        %s585 = scalar_lea.vmem [#allocation14], %s584
        %s586 = smul.u32 12, %s34
        %s587 = smul.u32 4, %s34
        %p588 = scmp.lt.s32.totalorder %s587, 7
        %s589 = scalar_select %p588, %s587, 7
        %s590 = smul.addr %s589, 4
        %s591 = smul.addr %s590, 8
        %s592 = scalar_lea.vmem %s1, %s591
        %s593 = smul.u32 4, %s34
        %s594 = smul.u32 4, %s34
        %v595 = vld [vmem:[%s511] sm:$0xff]
        %v596 = vld [vmem:[%s511 + $0x8] sm:$0xff]
        %v597 = vld [vmem:[%s511 + $0x10] sm:$0xff]
        %v598 = vld [vmem:[%s511 + $0x18] sm:$0xff]
        %v599 = vld [vmem:[%s511 + $0x20] sm:$0xff]
        %v600 = vld [vmem:[%s511 + $0x28] sm:$0xff]
        %v601 = vld [vmem:[%s511 + $0x30] sm:$0xff]
        %v602 = vld [vmem:[%s511 + $0x38] sm:$0xff]
        %v603 = vld [vmem:[%s511 + $0x40] sm:$0xff]
        %v604 = vld [vmem:[%s511 + $0x48] sm:$0xff]
        %v605 = vld [vmem:[%s511 + $0x50] sm:$0xff]
        %v606 = vld [vmem:[%s511 + $0x58] sm:$0xff]
        %v607 = vld [vmem:[%s511 + $0x60] sm:$0xff]
        %v608 = vld [vmem:[%s511 + $0x68] sm:$0xff]
        %v609 = vld [vmem:[%s511 + $0x70] sm:$0xff]
        %v610 = vld [vmem:[%s511 + $0x78] sm:$0xff]
        %v611 = vld [vmem:[%s511 + $0x80] sm:$0xff]
        %v612 = vld [vmem:[%s511 + $0x88] sm:$0xff]
        %v613 = vld [vmem:[%s511 + $0x90] sm:$0xff]
        %v614 = vld [vmem:[%s511 + $0x98] sm:$0xff]
        %v615 = vld [vmem:[%s511 + $0xa0] sm:$0xff]
        %v616 = vld [vmem:[%s511 + $0xa8] sm:$0xff]
        %v617 = vld [vmem:[%s511 + $0xb0] sm:$0xff]
        %v618 = vld [vmem:[%s511 + $0xb8] sm:$0xff]
        %v619 = vld [vmem:[%s511 + $0xc0] sm:$0xff]
        %v620 = vld [vmem:[%s511 + $0xc8] sm:$0xff]
        %v621 = vld [vmem:[%s511 + $0xd0] sm:$0xff]
        %v622 = vld [vmem:[%s511 + $0xd8] sm:$0xff]
        %v623 = vld [vmem:[%s511 + $0xe0] sm:$0xff]
        %v624 = vld [vmem:[%s511 + $0xe8] sm:$0xff]
        %v625 = vld [vmem:[%s511 + $0xf0] sm:$0xff]
        %v626 = vld [vmem:[%s511 + $0xf8] sm:$0xff]
        %v627 = vld [vmem:[%s511 + $0x100] sm:$0xff]
        %v628 = vld [vmem:[%s511 + $0x108] sm:$0xff]
        %v629 = vld [vmem:[%s511 + $0x110] sm:$0xff]
        %v630 = vld [vmem:[%s511 + $0x118] sm:$0xff]
        %v631 = vld [vmem:[#allocation5] sm:$0xff]
        %v632 = vld [vmem:[#allocation5 + $0x8] sm:$0xff]
        %v633 = vld [vmem:[#allocation5 + $0x10] sm:$0xff]
        %v634 = vld [vmem:[#allocation5 + $0x18] sm:$0xff]
        %v635 = vld [vmem:[#allocation5 + $0x20] sm:$0xff]
        %v636 = vld [vmem:[#allocation5 + $0x28] sm:$0xff]
        %v637 = vld [vmem:[#allocation5 + $0x30] sm:$0xff]
        %v638 = vld [vmem:[#allocation5 + $0x38] sm:$0xff]
        %v639 = vld [vmem:[#allocation5 + $0x40] sm:$0xff]
        %v640 = vld [vmem:[#allocation5 + $0x48] sm:$0xff]
        %v641 = vld [vmem:[#allocation5 + $0x50] sm:$0xff]
        %v642 = vld [vmem:[#allocation5 + $0x58] sm:$0xff]
        %v643 = vld [vmem:[#allocation5 + $0x60] sm:$0xff]
        %v644 = vld [vmem:[#allocation5 + $0x68] sm:$0xff]
        %v645 = vld [vmem:[#allocation5 + $0x70] sm:$0xff]
        %v646 = vld [vmem:[#allocation5 + $0x78] sm:$0xff]
        %v647 = vld [vmem:[#allocation5 + $0x80] sm:$0xff]
        %v648 = vld [vmem:[#allocation5 + $0x88] sm:$0xff]
        %v649 = vld [vmem:[#allocation5 + $0x90] sm:$0xff]
        %v650 = vld [vmem:[#allocation5 + $0x98] sm:$0xff]
        %v651 = vld [vmem:[#allocation5 + $0xa0] sm:$0xff]
        %v652 = vld [vmem:[#allocation5 + $0xa8] sm:$0xff]
        %v653 = vld [vmem:[#allocation5 + $0xb0] sm:$0xff]
        %v654 = vld [vmem:[#allocation5 + $0xb8] sm:$0xff]
        %v655 = vld [vmem:[#allocation5 + $0xc0] sm:$0xff]
        %v656 = vld [vmem:[#allocation5 + $0xc8] sm:$0xff]
        %v657 = vld [vmem:[#allocation5 + $0xd0] sm:$0xff]
        %v658 = vld [vmem:[#allocation5 + $0xd8] sm:$0xff]
        %v659 = vld [vmem:[#allocation5 + $0xe0] sm:$0xff]
        %v660 = vld [vmem:[#allocation5 + $0xe8] sm:$0xff]
        %v661 = vld [vmem:[#allocation5 + $0xf0] sm:$0xff]
        %v662 = vld [vmem:[#allocation5 + $0xf8] sm:$0xff]
        %v663 = vld [vmem:[#allocation5 + $0x100] sm:$0xff]
        %v664 = vld [vmem:[#allocation5 + $0x108] sm:$0xff]
        %v665 = vld [vmem:[#allocation5 + $0x110] sm:$0xff]
        %v666 = vld [vmem:[#allocation5 + $0x118] sm:$0xff]
        %v667 = vld [vmem:[#allocation5 + $0x120] sm:$0xff]
        %v668 = vld [vmem:[#allocation5 + $0x128] sm:$0xff]
        %v669 = vld [vmem:[#allocation5 + $0x130] sm:$0xff]
        %v670 = vld [vmem:[#allocation5 + $0x138] sm:$0xff]
        %v671 = vld [vmem:[#allocation5 + $0x140] sm:$0xff]
        %v672 = vld [vmem:[#allocation5 + $0x148] sm:$0xff]
        %v673 = vld [vmem:[#allocation5 + $0x150] sm:$0xff]
        %v674 = vld [vmem:[#allocation5 + $0x158] sm:$0xff]
        %v675 = vld [vmem:[#allocation5 + $0x160] sm:$0xff]
        %v676 = vld [vmem:[#allocation5 + $0x168] sm:$0xff]
        %v677 = vld [vmem:[#allocation5 + $0x170] sm:$0xff]
        %v678 = vld [vmem:[#allocation5 + $0x178] sm:$0xff]
        %v679 = vld [vmem:[#allocation5 + $0x180] sm:$0xff]
        %v680 = vld [vmem:[#allocation5 + $0x188] sm:$0xff]
        %v681 = vld [vmem:[#allocation5 + $0x190] sm:$0xff]
        %v682 = vld [vmem:[#allocation5 + $0x198] sm:$0xff]
        %v683 = vld [vmem:[#allocation5 + $0x1a0] sm:$0xff]
        %v684 = vld [vmem:[#allocation5 + $0x1a8] sm:$0xff]
        %v685 = vld [vmem:[#allocation5 + $0x1b0] sm:$0xff]
        %v686 = vld [vmem:[#allocation5 + $0x1b8] sm:$0xff]
        %v687 = vld [vmem:[#allocation5 + $0x1c0] sm:$0xff]
        %v688 = vld [vmem:[#allocation5 + $0x1c8] sm:$0xff]
        %v689 = vld [vmem:[#allocation5 + $0x1d0] sm:$0xff]
        %v690 = vld [vmem:[#allocation5 + $0x1d8] sm:$0xff]
        %v691 = vld [vmem:[#allocation5 + $0x1e0] sm:$0xff]
        %v692 = vld [vmem:[#allocation5 + $0x1e8] sm:$0xff]
        %v693 = vld [vmem:[#allocation5 + $0x1f0] sm:$0xff]
        %v694 = vld [vmem:[#allocation5 + $0x1f8] sm:$0xff]
        %v695 = vld [vmem:[#allocation5 + $0x200] sm:$0xff]
        %v696 = vld [vmem:[#allocation5 + $0x208] sm:$0xff]
        %v697 = vld [vmem:[#allocation5 + $0x210] sm:$0xff]
        %v698 = vld [vmem:[#allocation5 + $0x218] sm:$0xff]
        %v699 = vld [vmem:[#allocation5 + $0x220] sm:$0xff]
        %v700 = vld [vmem:[#allocation5 + $0x228] sm:$0xff]
        %v701 = vld [vmem:[#allocation5 + $0x230] sm:$0xff]
        %v702 = vld [vmem:[#allocation5 + $0x238] sm:$0xff]
        %v703 = vld [vmem:[#allocation5 + $0x240] sm:$0xff]
        %v704 = vld [vmem:[#allocation5 + $0x248] sm:$0xff]
        %v705 = vld [vmem:[#allocation5 + $0x250] sm:$0xff]
        %v706 = vld [vmem:[#allocation5 + $0x258] sm:$0xff]
        %v707 = vld [vmem:[#allocation5 + $0x260] sm:$0xff]
        %v708 = vld [vmem:[#allocation5 + $0x268] sm:$0xff]
        %v709 = vld [vmem:[#allocation5 + $0x270] sm:$0xff]
        %v710 = vld [vmem:[#allocation5 + $0x278] sm:$0xff]
        %v711 = vld [vmem:[#allocation5 + $0x280] sm:$0xff]
        %v712 = vld [vmem:[#allocation5 + $0x288] sm:$0xff]
        %v713 = vld [vmem:[#allocation5 + $0x290] sm:$0xff]
        %v714 = vld [vmem:[#allocation5 + $0x298] sm:$0xff]
        %v715 = vld [vmem:[#allocation5 + $0x2a0] sm:$0xff]
        %v716 = vld [vmem:[#allocation5 + $0x2a8] sm:$0xff]
        %v717 = vld [vmem:[#allocation5 + $0x2b0] sm:$0xff]
        %v718 = vld [vmem:[#allocation5 + $0x2b8] sm:$0xff]
        %v719 = vld [vmem:[#allocation5 + $0x2c0] sm:$0xff]
        %v720 = vld [vmem:[#allocation5 + $0x2c8] sm:$0xff]
        %v721 = vld [vmem:[#allocation5 + $0x2d0] sm:$0xff]
        %v722 = vld [vmem:[#allocation5 + $0x2d8] sm:$0xff]
        %v723 = vld [vmem:[#allocation5 + $0x2e0] sm:$0xff]
        %v724 = vld [vmem:[#allocation5 + $0x2e8] sm:$0xff]
        %v725 = vld [vmem:[#allocation5 + $0x2f0] sm:$0xff]
        %v726 = vld [vmem:[#allocation5 + $0x2f8] sm:$0xff]
        %v727 = vld [vmem:[#allocation7] sm:$0xff]
        %v728 = vld [vmem:[#allocation7 + $0x8] sm:$0xff]
        %v729 = vld [vmem:[#allocation7 + $0x10] sm:$0xff]
        %v730 = vld [vmem:[#allocation7 + $0x18] sm:$0xff]
        %v731 = vld [vmem:[#allocation7 + $0x20] sm:$0xff]
        %v732 = vld [vmem:[#allocation7 + $0x28] sm:$0xff]
        %v733 = vld [vmem:[#allocation7 + $0x30] sm:$0xff]
        %v734 = vld [vmem:[#allocation7 + $0x38] sm:$0xff]
        %v735 = vld [vmem:[#allocation7 + $0x40] sm:$0xff]
        %v736 = vld [vmem:[#allocation7 + $0x48] sm:$0xff]
        %v737 = vld [vmem:[#allocation7 + $0x50] sm:$0xff]
        %v738 = vld [vmem:[#allocation7 + $0x58] sm:$0xff]
        %v739 = vld [vmem:[#allocation7 + $0x60] sm:$0xff]
        %v740 = vld [vmem:[#allocation7 + $0x68] sm:$0xff]
        %v741 = vld [vmem:[#allocation7 + $0x70] sm:$0xff]
        %v742 = vld [vmem:[#allocation7 + $0x78] sm:$0xff]
        %v743 = vld [vmem:[#allocation7 + $0x80] sm:$0xff]
        %v744 = vld [vmem:[#allocation7 + $0x88] sm:$0xff]
        %v745 = vld [vmem:[#allocation7 + $0x90] sm:$0xff]
        %v746 = vld [vmem:[#allocation7 + $0x98] sm:$0xff]
        %v747 = vld [vmem:[#allocation7 + $0xa0] sm:$0xff]
        %v748 = vld [vmem:[#allocation7 + $0xa8] sm:$0xff]
        %v749 = vld [vmem:[#allocation7 + $0xb0] sm:$0xff]
        %v750 = vld [vmem:[#allocation7 + $0xb8] sm:$0xff]
        %v751 = vld [vmem:[#allocation7 + $0xc0] sm:$0xff]
        %v752 = vld [vmem:[#allocation7 + $0xc8] sm:$0xff]
        %v753 = vld [vmem:[#allocation7 + $0xd0] sm:$0xff]
        %v754 = vld [vmem:[#allocation7 + $0xd8] sm:$0xff]
        %v755 = vld [vmem:[#allocation7 + $0xe0] sm:$0xff]
        %v756 = vld [vmem:[#allocation7 + $0xe8] sm:$0xff]
        %v757 = vld [vmem:[#allocation7 + $0xf0] sm:$0xff]
        %v758 = vld [vmem:[#allocation7 + $0xf8] sm:$0xff]
        %v759 = vld [vmem:[#allocation7 + $0x100] sm:$0xff]
        %v760 = vld [vmem:[#allocation7 + $0x108] sm:$0xff]
        %v761 = vld [vmem:[#allocation7 + $0x110] sm:$0xff]
        %v762 = vld [vmem:[#allocation7 + $0x118] sm:$0xff]
        %v763 = vld [vmem:[#allocation7 + $0x120] sm:$0xff]
        %v764 = vld [vmem:[#allocation7 + $0x128] sm:$0xff]
        %v765 = vld [vmem:[#allocation7 + $0x130] sm:$0xff]
        %v766 = vld [vmem:[#allocation7 + $0x138] sm:$0xff]
        %v767 = vld [vmem:[#allocation7 + $0x140] sm:$0xff]
        %v768 = vld [vmem:[#allocation7 + $0x148] sm:$0xff]
        %v769 = vld [vmem:[#allocation7 + $0x150] sm:$0xff]
        %v770 = vld [vmem:[#allocation7 + $0x158] sm:$0xff]
        %v771 = vld [vmem:[#allocation7 + $0x160] sm:$0xff]
        %v772 = vld [vmem:[#allocation7 + $0x168] sm:$0xff]
        %v773 = vld [vmem:[#allocation7 + $0x170] sm:$0xff]
        %v774 = vld [vmem:[#allocation7 + $0x178] sm:$0xff]
        %v775 = vld [vmem:[#allocation7 + $0x180] sm:$0xff]
        %v776 = vld [vmem:[#allocation7 + $0x188] sm:$0xff]
        %v777 = vld [vmem:[#allocation7 + $0x190] sm:$0xff]
        %v778 = vld [vmem:[#allocation7 + $0x198] sm:$0xff]
        %v779 = vld [vmem:[#allocation7 + $0x1a0] sm:$0xff]
        %v780 = vld [vmem:[#allocation7 + $0x1a8] sm:$0xff]
        %v781 = vld [vmem:[#allocation7 + $0x1b0] sm:$0xff]
        %v782 = vld [vmem:[#allocation7 + $0x1b8] sm:$0xff]
        %v783 = vld [vmem:[#allocation7 + $0x1c0] sm:$0xff]
        %v784 = vld [vmem:[#allocation7 + $0x1c8] sm:$0xff]
        %v785 = vld [vmem:[#allocation7 + $0x1d0] sm:$0xff]
        %v786 = vld [vmem:[#allocation7 + $0x1d8] sm:$0xff]
        %v787 = vld [vmem:[#allocation7 + $0x1e0] sm:$0xff]
        %v788 = vld [vmem:[#allocation7 + $0x1e8] sm:$0xff]
        %v789 = vld [vmem:[#allocation7 + $0x1f0] sm:$0xff]
        %v790 = vld [vmem:[#allocation7 + $0x1f8] sm:$0xff]
        %v791 = vld [vmem:[#allocation7 + $0x200] sm:$0xff]
        %v792 = vld [vmem:[#allocation7 + $0x208] sm:$0xff]
        %v793 = vld [vmem:[#allocation7 + $0x210] sm:$0xff]
        %v794 = vld [vmem:[#allocation7 + $0x218] sm:$0xff]
        %v795 = vld [vmem:[#allocation7 + $0x220] sm:$0xff]
        %v796 = vld [vmem:[#allocation7 + $0x228] sm:$0xff]
        %v797 = vld [vmem:[#allocation7 + $0x230] sm:$0xff]
        %v798 = vld [vmem:[#allocation7 + $0x238] sm:$0xff]
        %v799 = vld [vmem:[#allocation7 + $0x240] sm:$0xff]
        %v800 = vld [vmem:[#allocation7 + $0x248] sm:$0xff]
        %v801 = vld [vmem:[#allocation7 + $0x250] sm:$0xff]
        %v802 = vld [vmem:[#allocation7 + $0x258] sm:$0xff]
        %v803 = vld [vmem:[#allocation7 + $0x260] sm:$0xff]
        %v804 = vld [vmem:[#allocation7 + $0x268] sm:$0xff]
        %v805 = vld [vmem:[#allocation7 + $0x270] sm:$0xff]
        %v806 = vld [vmem:[#allocation7 + $0x278] sm:$0xff]
        %v807 = vld [vmem:[#allocation7 + $0x280] sm:$0xff]
        %v808 = vld [vmem:[#allocation7 + $0x288] sm:$0xff]
        %v809 = vld [vmem:[#allocation7 + $0x290] sm:$0xff]
        %v810 = vld [vmem:[#allocation7 + $0x298] sm:$0xff]
        %v811 = vld [vmem:[#allocation7 + $0x2a0] sm:$0xff]
        %v812 = vld [vmem:[#allocation7 + $0x2a8] sm:$0xff]
        %v813 = vld [vmem:[#allocation7 + $0x2b0] sm:$0xff]
        %v814 = vld [vmem:[#allocation7 + $0x2b8] sm:$0xff]
        %v815 = vld [vmem:[#allocation7 + $0x2c0] sm:$0xff]
        %v816 = vld [vmem:[#allocation7 + $0x2c8] sm:$0xff]
        %v817 = vld [vmem:[#allocation7 + $0x2d0] sm:$0xff]
        %v818 = vld [vmem:[#allocation7 + $0x2d8] sm:$0xff]
        %v819 = vld [vmem:[#allocation7 + $0x2e0] sm:$0xff]
        %v820 = vld [vmem:[#allocation7 + $0x2e8] sm:$0xff]
        %v821 = vld [vmem:[#allocation7 + $0x2f0] sm:$0xff]
        %v822 = vld [vmem:[#allocation7 + $0x2f8] sm:$0xff]
        %823 = vmatprep.subr.mxu0 %v728
        %824 = vmatpush1.msra.mxu0 %v727
        %825 = vmatprep.subr.mxu0 %v730
        %826 = vmatpush1.msra.mxu0 %v729
        %827 = vmatprep.subr.mxu0 %v732
        %828 = vmatpush1.msra.mxu0 %v731
        %829 = vmatprep.subr.mxu0 %v734
        %830 = vmatpush1.msra.mxu0 %v733
        %831 = vmatprep.subr.mxu0 %v736
        %832 = vmatpush1.msra.mxu0 %v735
        %833 = vmatprep.subr.mxu0 %v738
        %834 = vmatpush1.msra.mxu0 %v737
        %835 = vmatprep.subr.mxu0 %v740
        %836 = vmatpush1.msra.mxu0 %v739
        %837 = vmatprep.subr.mxu0 %v742
        %838 = vmatpush1.msra.mxu0 %v741
        %839 = vmatprep.subr.mxu0 %v744
        %840 = vmatpush1.msra.mxu0 %v743
        %841 = vmatprep.subr.mxu0 %v746
        %842 = vmatpush1.msra.mxu0 %v745
        %843 = vmatprep.subr.mxu0 %v748
        %844 = vmatpush1.msra.mxu0 %v747
        %845 = vmatprep.subr.mxu0 %v750
        %846 = vmatpush1.msra.mxu0 %v749
        %847 = vmatprep.subr.mxu0 %v752
        %848 = vmatpush1.msra.mxu0 %v751
        %849 = vmatprep.subr.mxu0 %v754
        %850 = vmatpush1.msra.mxu0 %v753
        %851 = vmatprep.subr.mxu0 %v756
        %852 = vmatpush1.msra.mxu0 %v755
        %853 = vmatprep.subr.mxu0 %v758
        %854 = vmatpush1.msra.mxu0 %v757
        %855 = vmatprep.subr.mxu0 %v760
        %856 = vmatpush1.msra.mxu0 %v759
        %857 = vmatprep.subr.mxu0 %v762
        %858 = vmatpush1.msra.mxu0 %v761
        %859 = vmatprep.subr.mxu0 %v764
        %860 = vmatpush1.msra.mxu0 %v763
        %861 = vmatprep.subr.mxu0 %v766
        %862 = vmatpush1.msra.mxu0 %v765
        %863 = vmatprep.subr.mxu0 %v768
        %864 = vmatpush1.msra.mxu0 %v767
        %865 = vmatprep.subr.mxu0 %v770
        %866 = vmatpush1.msra.mxu0 %v769
        %867 = vmatprep.subr.mxu0 %v772
        %868 = vmatpush1.msra.mxu0 %v771
        %869 = vmatprep.subr.mxu0 %v774
        %870 = vmatpush1.msra.mxu0 %v773
        %871 = vmatprep.subr.mxu0 %v776
        %872 = vmatpush1.msra.mxu0 %v775
        %873 = vmatprep.subr.mxu0 %v778
        %874 = vmatpush1.msra.mxu0 %v777
        %875 = vmatprep.subr.mxu0 %v780
        %876 = vmatpush1.msra.mxu0 %v779
        %877 = vmatprep.subr.mxu0 %v782
        %878 = vmatpush1.msra.mxu0 %v781
        %879 = vmatprep.subr.mxu0 %v784
        %880 = vmatpush1.msra.mxu0 %v783
        %881 = vmatprep.subr.mxu0 %v786
        %882 = vmatpush1.msra.mxu0 %v785
        %883 = vmatprep.subr.mxu0 %v788
        %884 = vmatpush1.msra.mxu0 %v787
        %885 = vmatprep.subr.mxu0 %v790
        %886 = vmatpush1.msra.mxu0 %v789
        %887 = vmatprep.mubr.f32.mxu0 %v596
        %888 = vmatmul.mubr.f32.gmra.mrb[0].mxu0 %v595
        %v889 = vpop.f32.mrb[0].mxu0
        %v890 = vadd.f32 0.0, %v889
        %v891 = vpop.f32.mrb[0].mxu0
        %v892 = vadd.f32 0.0, %v891
        %893 = vmatprep.mubr.f32.mxu0 %v599
        %894 = vmatmul.mubr.f32.gmra.mrb[0].mxu0 %v598
        %v895 = vpop.f32.mrb[0].mxu0
        %v896 = vadd.f32 0.0, %v895
        %v897 = vpop.f32.mrb[0].mxu0
        %v898 = vadd.f32 0.0, %v897
        %899 = vmatprep.mubr.f32.mxu0 %v602
        %900 = vmatmul.mubr.f32.gmra.mrb[0].mxu0 %v601
        %v901 = vpop.f32.mrb[0].mxu0
        %v902 = vadd.f32 0.0, %v901
        %v903 = vpop.f32.mrb[0].mxu0
        %v904 = vadd.f32 0.0, %v903
        %905 = vmatprep.mubr.f32.mxu0 %v605
        %906 = vmatmul.mubr.f32.gmra.mrb[0].mxu0 %v604
        %v907 = vpop.f32.mrb[0].mxu0
        %v908 = vadd.f32 0.0, %v907
        %v909 = vpop.f32.mrb[0].mxu0
        %v910 = vadd.f32 0.0, %v909
        %911 = vmatprep.mubr.f32.mxu0 %v608
        %912 = vmatmul.mubr.f32.gmra.mrb[0].mxu0 %v607
        %v913 = vpop.f32.mrb[0].mxu0
        %v914 = vadd.f32 0.0, %v913
        %v915 = vpop.f32.mrb[0].mxu0
        %v916 = vadd.f32 0.0, %v915
        %917 = vmatprep.mubr.f32.mxu0 %v611
        %918 = vmatmul.mubr.f32.gmra.mrb[0].mxu0 %v610
        %v919 = vpop.f32.mrb[0].mxu0
        %v920 = vadd.f32 0.0, %v919
        %v921 = vpop.f32.mrb[0].mxu0
        %v922 = vadd.f32 0.0, %v921
        %923 = vmatprep.mubr.f32.mxu0 %v614
        %924 = vmatmul.mubr.f32.gmra.mrb[0].mxu0 %v613
        %v925 = vpop.f32.mrb[0].mxu0
        %v926 = vadd.f32 0.0, %v925
        %v927 = vpop.f32.mrb[0].mxu0
        %v928 = vadd.f32 0.0, %v927
        %929 = vmatprep.mubr.f32.mxu0 %v617
        %930 = vmatmul.mubr.f32.gmra.mrb[0].mxu0 %v616
        %v931 = vpop.f32.mrb[0].mxu0
        %v932 = vadd.f32 0.0, %v931
        %v933 = vpop.f32.mrb[0].mxu0
        %v934 = vadd.f32 0.0, %v933
        %935 = vmatprep.mubr.f32.mxu0 %v620
        %936 = vmatmul.mubr.f32.gmra.mrb[0].mxu0 %v619
        %v937 = vpop.f32.mrb[0].mxu0
        %v938 = vadd.f32 0.0, %v937
        %v939 = vpop.f32.mrb[0].mxu0
        %v940 = vadd.f32 0.0, %v939
        %941 = vmatprep.mubr.f32.mxu0 %v623
        %942 = vmatmul.mubr.f32.gmra.mrb[0].mxu0 %v622
        %v943 = vpop.f32.mrb[0].mxu0
        %v944 = vadd.f32 0.0, %v943
        %v945 = vpop.f32.mrb[0].mxu0
        %v946 = vadd.f32 0.0, %v945
        %947 = vmatprep.mubr.f32.mxu0 %v626
        %948 = vmatmul.mubr.f32.gmra.mrb[0].mxu0 %v625
        %v949 = vpop.f32.mrb[0].mxu0
        %v950 = vadd.f32 0.0, %v949
        %v951 = vpop.f32.mrb[0].mxu0
        %v952 = vadd.f32 0.0, %v951
        %953 = vmatprep.mubr.f32.mxu0 %v629
        %954 = vmatmul.mubr.f32.gmra.mrb[0].mxu0 %v628
        %v955 = vpop.f32.mrb[0].mxu0
        %v956 = vadd.f32 0.0, %v955
        %v957 = vpop.f32.mrb[0].mxu0
        %v958 = vadd.f32 0.0, %v957
        %959 = vdwg.mxu0
        %960 = vmatprep.subr.mxu0 %v792
        %961 = vmatpush1.msra.mxu0 %v791
        %962 = vmatprep.subr.mxu0 %v794
        %963 = vmatpush1.msra.mxu0 %v793
        %964 = vmatprep.subr.mxu0 %v796
        %965 = vmatpush1.msra.mxu0 %v795
        %966 = vmatprep.subr.mxu0 %v798
        %967 = vmatpush1.msra.mxu0 %v797
        %968 = vmatprep.subr.mxu0 %v800
        %969 = vmatpush1.msra.mxu0 %v799
        %970 = vmatprep.subr.mxu0 %v802
        %971 = vmatpush1.msra.mxu0 %v801
        %972 = vmatprep.subr.mxu0 %v804
        %973 = vmatpush1.msra.mxu0 %v803
        %974 = vmatprep.subr.mxu0 %v806
        %975 = vmatpush1.msra.mxu0 %v805
        %976 = vmatprep.subr.mxu0 %v808
        %977 = vmatpush1.msra.mxu0 %v807
        %978 = vmatprep.subr.mxu0 %v810
        %979 = vmatpush1.msra.mxu0 %v809
        %980 = vmatprep.subr.mxu0 %v812
        %981 = vmatpush1.msra.mxu0 %v811
        %982 = vmatprep.subr.mxu0 %v814
        %983 = vmatpush1.msra.mxu0 %v813
        %984 = vmatprep.subr.mxu0 %v816
        %985 = vmatpush1.msra.mxu0 %v815
        %986 = vmatprep.subr.mxu0 %v818
        %987 = vmatpush1.msra.mxu0 %v817
        %988 = vmatprep.subr.mxu0 %v820
        %989 = vmatpush1.msra.mxu0 %v819
        %990 = vmatprep.subr.mxu0 %v822
        %991 = vmatpush1.msra.mxu0 %v821
        %992 = vmatprep.subr.mxu0 0.0
        %993 = vmatpush1.msra.mxu0 0.0
        %994 = vmatprep.subr.mxu0 0.0
        %995 = vmatpush1.msra.mxu0 0.0
        %996 = vmatprep.subr.mxu0 0.0
        %997 = vmatpush1.msra.mxu0 0.0
        %998 = vmatprep.subr.mxu0 0.0
        %999 = vmatpush1.msra.mxu0 0.0
        %1000 = vmatprep.subr.mxu0 0.0
        %1001 = vmatpush1.msra.mxu0 0.0
        %1002 = vmatprep.subr.mxu0 0.0
        %1003 = vmatpush1.msra.mxu0 0.0
        %1004 = vmatprep.subr.mxu0 0.0
        %1005 = vmatpush1.msra.mxu0 0.0
        %1006 = vmatprep.subr.mxu0 0.0
        %1007 = vmatpush1.msra.mxu0 0.0
        %1008 = vmatprep.subr.mxu0 0.0
        %1009 = vmatpush1.msra.mxu0 0.0
        %1010 = vmatprep.subr.mxu0 0.0
        %1011 = vmatpush1.msra.mxu0 0.0
        %1012 = vmatprep.subr.mxu0 0.0
        %1013 = vmatpush1.msra.mxu0 0.0
        %1014 = vmatprep.subr.mxu0 0.0
        %1015 = vmatpush1.msra.mxu0 0.0
        %1016 = vmatprep.subr.mxu0 0.0
        %1017 = vmatpush1.msra.mxu0 0.0
        %1018 = vmatprep.subr.mxu0 0.0
        %1019 = vmatpush1.msra.mxu0 0.0
        %1020 = vmatprep.subr.mxu0 0.0
        %1021 = vmatpush1.msra.mxu0 0.0
        %1022 = vmatprep.subr.mxu0 0.0
        %1023 = vmatpush1.msra.mxu0 0.0
        %1024 = vmatprep.mubr.f32.mxu0 0.0
        %1025 = vmatmul.mubr.f32.gmra.mrb[0].mxu0 %v597
        %v1026 = vpop.f32.mrb[0].mxu0
        %v1027 = vadd.f32 %v890, %v1026
        %v1028 = vpop.f32.mrb[0].mxu0
        %v1029 = vadd.f32 %v892, %v1028
        %1030 = vmatprep.mubr.f32.mxu0 0.0
        %1031 = vmatmul.mubr.f32.gmra.mrb[0].mxu0 %v600
        %v1032 = vpop.f32.mrb[0].mxu0
        %v1033 = vadd.f32 %v896, %v1032
        %v1034 = vpop.f32.mrb[0].mxu0
        %v1035 = vadd.f32 %v898, %v1034
        %1036 = vmatprep.mubr.f32.mxu0 0.0
        %1037 = vmatmul.mubr.f32.gmra.mrb[0].mxu0 %v603
        %v1038 = vpop.f32.mrb[0].mxu0
        %v1039 = vadd.f32 %v902, %v1038
        %v1040 = vpop.f32.mrb[0].mxu0
        %v1041 = vadd.f32 %v904, %v1040
        %1042 = vmatprep.mubr.f32.mxu0 0.0
        %1043 = vmatmul.mubr.f32.gmra.mrb[0].mxu0 %v606
        %v1044 = vpop.f32.mrb[0].mxu0
        %v1045 = vadd.f32 %v908, %v1044
        %v1046 = vpop.f32.mrb[0].mxu0
        %v1047 = vadd.f32 %v910, %v1046
        %1048 = vmatprep.mubr.f32.mxu0 0.0
        %1049 = vmatmul.mubr.f32.gmra.mrb[0].mxu0 %v609
        %v1050 = vpop.f32.mrb[0].mxu0
        %v1051 = vadd.f32 %v914, %v1050
        %v1052 = vpop.f32.mrb[0].mxu0
        %v1053 = vadd.f32 %v916, %v1052
        %1054 = vmatprep.mubr.f32.mxu0 0.0
        %1055 = vmatmul.mubr.f32.gmra.mrb[0].mxu0 %v612
        %v1056 = vpop.f32.mrb[0].mxu0
        %v1057 = vadd.f32 %v920, %v1056
        %v1058 = vpop.f32.mrb[0].mxu0
        %v1059 = vadd.f32 %v922, %v1058
        %1060 = vmatprep.mubr.f32.mxu0 0.0
        %1061 = vmatmul.mubr.f32.gmra.mrb[0].mxu0 %v615
        %v1062 = vpop.f32.mrb[0].mxu0
        %v1063 = vadd.f32 %v926, %v1062
        %v1064 = vpop.f32.mrb[0].mxu0
        %v1065 = vadd.f32 %v928, %v1064
        %1066 = vmatprep.mubr.f32.mxu0 0.0
        %1067 = vmatmul.mubr.f32.gmra.mrb[0].mxu0 %v618
        %v1068 = vpop.f32.mrb[0].mxu0
        %v1069 = vadd.f32 %v932, %v1068
        %v1070 = vpop.f32.mrb[0].mxu0
        %v1071 = vadd.f32 %v934, %v1070
        %1072 = vmatprep.mubr.f32.mxu0 0.0
        %1073 = vmatmul.mubr.f32.gmra.mrb[0].mxu0 %v621
        %v1074 = vpop.f32.mrb[0].mxu0
        %v1075 = vadd.f32 %v938, %v1074
        %v1076 = vpop.f32.mrb[0].mxu0
        %v1077 = vadd.f32 %v940, %v1076
        %1078 = vmatprep.mubr.f32.mxu0 0.0
        %1079 = vmatmul.mubr.f32.gmra.mrb[0].mxu0 %v624
        %v1080 = vpop.f32.mrb[0].mxu0
        %v1081 = vadd.f32 %v944, %v1080
        %v1082 = vpop.f32.mrb[0].mxu0
        %v1083 = vadd.f32 %v946, %v1082
        %1084 = vmatprep.mubr.f32.mxu0 0.0
        %1085 = vmatmul.mubr.f32.gmra.mrb[0].mxu0 %v627
        %v1086 = vpop.f32.mrb[0].mxu0
        %v1087 = vadd.f32 %v950, %v1086
        %v1088 = vpop.f32.mrb[0].mxu0
        %v1089 = vadd.f32 %v952, %v1088
        %1090 = vmatprep.mubr.f32.mxu0 0.0
        %1091 = vmatmul.mubr.f32.gmra.mrb[0].mxu0 %v630
        %v1092 = vpop.f32.mrb[0].mxu0
        %v1093 = vadd.f32 %v956, %v1092
        %v1094 = vpop.f32.mrb[0].mxu0
        %v1095 = vadd.f32 %v958, %v1094
        %1096 = vdwg.mxu0
        %v1097 = vld [vmem:[#allocation8] sm:$0xff]
        %v1098 = vld [vmem:[#allocation8 + $0x8] sm:$0xff]
        %v1099 = vld [vmem:[#allocation8 + $0x10] sm:$0xff]
        %v1100 = vld [vmem:[#allocation8 + $0x18] sm:$0xff]
        %v1101 = vld [vmem:[#allocation8 + $0x20] sm:$0xff]
        %v1102 = vld [vmem:[#allocation8 + $0x28] sm:$0xff]
        %v1103 = vld [vmem:[#allocation8 + $0x30] sm:$0xff]
        %v1104 = vld [vmem:[#allocation8 + $0x38] sm:$0xff]
        %v1105 = vld [vmem:[#allocation8 + $0x40] sm:$0xff]
        %v1106 = vld [vmem:[#allocation8 + $0x48] sm:$0xff]
        %v1107 = vld [vmem:[#allocation8 + $0x50] sm:$0xff]
        %v1108 = vld [vmem:[#allocation8 + $0x58] sm:$0xff]
        %v1109 = vld [vmem:[#allocation8 + $0x60] sm:$0xff]
        %v1110 = vld [vmem:[#allocation8 + $0x68] sm:$0xff]
        %v1111 = vld [vmem:[#allocation8 + $0x70] sm:$0xff]
        %v1112 = vld [vmem:[#allocation8 + $0x78] sm:$0xff]
        %v1113 = vld [vmem:[#allocation8 + $0x80] sm:$0xff]
        %v1114 = vld [vmem:[#allocation8 + $0x88] sm:$0xff]
        %v1115 = vld [vmem:[#allocation8 + $0x90] sm:$0xff]
        %v1116 = vld [vmem:[#allocation8 + $0x98] sm:$0xff]
        %v1117 = vld [vmem:[#allocation8 + $0xa0] sm:$0xff]
        %v1118 = vld [vmem:[#allocation8 + $0xa8] sm:$0xff]
        %v1119 = vld [vmem:[#allocation8 + $0xb0] sm:$0xff]
        %v1120 = vld [vmem:[#allocation8 + $0xb8] sm:$0xff]
        %v1121 = vld [vmem:[#allocation8 + $0xc0] sm:$0xff]
        %v1122 = vld [vmem:[#allocation8 + $0xc8] sm:$0xff]
        %v1123 = vld [vmem:[#allocation8 + $0xd0] sm:$0xff]
        %v1124 = vld [vmem:[#allocation8 + $0xd8] sm:$0xff]
        %v1125 = vld [vmem:[#allocation8 + $0xe0] sm:$0xff]
        %v1126 = vld [vmem:[#allocation8 + $0xe8] sm:$0xff]
        %v1127 = vld [vmem:[#allocation8 + $0xf0] sm:$0xff]
        %v1128 = vld [vmem:[#allocation8 + $0xf8] sm:$0xff]
        %v1129 = vld [vmem:[#allocation8 + $0x100] sm:$0xff]
        %v1130 = vld [vmem:[#allocation8 + $0x108] sm:$0xff]
        %v1131 = vld [vmem:[#allocation8 + $0x110] sm:$0xff]
        %v1132 = vld [vmem:[#allocation8 + $0x118] sm:$0xff]
        %v1133 = vld [vmem:[#allocation8 + $0x120] sm:$0xff]
        %v1134 = vld [vmem:[#allocation8 + $0x128] sm:$0xff]
        %v1135 = vld [vmem:[#allocation8 + $0x130] sm:$0xff]
        %v1136 = vld [vmem:[#allocation8 + $0x138] sm:$0xff]
        %v1137 = vld [vmem:[#allocation8 + $0x140] sm:$0xff]
        %v1138 = vld [vmem:[#allocation8 + $0x148] sm:$0xff]
        %v1139 = vld [vmem:[#allocation8 + $0x150] sm:$0xff]
        %v1140 = vld [vmem:[#allocation8 + $0x158] sm:$0xff]
        %v1141 = vld [vmem:[#allocation8 + $0x160] sm:$0xff]
        %v1142 = vld [vmem:[#allocation8 + $0x168] sm:$0xff]
        %v1143 = vld [vmem:[#allocation8 + $0x170] sm:$0xff]
        %v1144 = vld [vmem:[#allocation8 + $0x178] sm:$0xff]
        %v1145 = vld [vmem:[#allocation8 + $0x180] sm:$0xff]
        %v1146 = vld [vmem:[#allocation8 + $0x188] sm:$0xff]
        %v1147 = vld [vmem:[#allocation8 + $0x190] sm:$0xff]
        %v1148 = vld [vmem:[#allocation8 + $0x198] sm:$0xff]
        %v1149 = vld [vmem:[#allocation8 + $0x1a0] sm:$0xff]
        %v1150 = vld [vmem:[#allocation8 + $0x1a8] sm:$0xff]
        %v1151 = vld [vmem:[#allocation8 + $0x1b0] sm:$0xff]
        %v1152 = vld [vmem:[#allocation8 + $0x1b8] sm:$0xff]
        %v1153 = vld [vmem:[#allocation8 + $0x1c0] sm:$0xff]
        %v1154 = vld [vmem:[#allocation8 + $0x1c8] sm:$0xff]
        %v1155 = vld [vmem:[#allocation8 + $0x1d0] sm:$0xff]
        %v1156 = vld [vmem:[#allocation8 + $0x1d8] sm:$0xff]
        %v1157 = vld [vmem:[#allocation8 + $0x1e0] sm:$0xff]
        %v1158 = vld [vmem:[#allocation8 + $0x1e8] sm:$0xff]
        %v1159 = vld [vmem:[#allocation8 + $0x1f0] sm:$0xff]
        %v1160 = vld [vmem:[#allocation8 + $0x1f8] sm:$0xff]
        %v1161 = vld [vmem:[#allocation8 + $0x200] sm:$0xff]
        %v1162 = vld [vmem:[#allocation8 + $0x208] sm:$0xff]
        %v1163 = vld [vmem:[#allocation8 + $0x210] sm:$0xff]
        %v1164 = vld [vmem:[#allocation8 + $0x218] sm:$0xff]
        %v1165 = vld [vmem:[#allocation8 + $0x220] sm:$0xff]
        %v1166 = vld [vmem:[#allocation8 + $0x228] sm:$0xff]
        %v1167 = vld [vmem:[#allocation8 + $0x230] sm:$0xff]
        %v1168 = vld [vmem:[#allocation8 + $0x238] sm:$0xff]
        %v1169 = vld [vmem:[#allocation8 + $0x240] sm:$0xff]
        %v1170 = vld [vmem:[#allocation8 + $0x248] sm:$0xff]
        %v1171 = vld [vmem:[#allocation8 + $0x250] sm:$0xff]
        %v1172 = vld [vmem:[#allocation8 + $0x258] sm:$0xff]
        %v1173 = vld [vmem:[#allocation8 + $0x260] sm:$0xff]
        %v1174 = vld [vmem:[#allocation8 + $0x268] sm:$0xff]
        %v1175 = vld [vmem:[#allocation8 + $0x270] sm:$0xff]
        %v1176 = vld [vmem:[#allocation8 + $0x278] sm:$0xff]
        %v1177 = vld [vmem:[#allocation8 + $0x280] sm:$0xff]
        %v1178 = vld [vmem:[#allocation8 + $0x288] sm:$0xff]
        %v1179 = vld [vmem:[#allocation8 + $0x290] sm:$0xff]
        %v1180 = vld [vmem:[#allocation8 + $0x298] sm:$0xff]
        %v1181 = vld [vmem:[#allocation8 + $0x2a0] sm:$0xff]
        %v1182 = vld [vmem:[#allocation8 + $0x2a8] sm:$0xff]
        %v1183 = vld [vmem:[#allocation8 + $0x2b0] sm:$0xff]
        %v1184 = vld [vmem:[#allocation8 + $0x2b8] sm:$0xff]
        %v1185 = vld [vmem:[#allocation8 + $0x2c0] sm:$0xff]
        %v1186 = vld [vmem:[#allocation8 + $0x2c8] sm:$0xff]
        %v1187 = vld [vmem:[#allocation8 + $0x2d0] sm:$0xff]
        %v1188 = vld [vmem:[#allocation8 + $0x2d8] sm:$0xff]
        %v1189 = vld [vmem:[#allocation8 + $0x2e0] sm:$0xff]
        %v1190 = vld [vmem:[#allocation8 + $0x2e8] sm:$0xff]
        %v1191 = vld [vmem:[#allocation8 + $0x2f0] sm:$0xff]
        %v1192 = vld [vmem:[#allocation8 + $0x2f8] sm:$0xff]
        %1193 = vmatprep.subr.mxu0 %v1098
        %1194 = vmatpush1.msra.mxu0 %v1097
        %1195 = vmatprep.subr.mxu0 %v1100
        %1196 = vmatpush1.msra.mxu0 %v1099
        %1197 = vmatprep.subr.mxu0 %v1102
        %1198 = vmatpush1.msra.mxu0 %v1101
        %1199 = vmatprep.subr.mxu0 %v1104
        %1200 = vmatpush1.msra.mxu0 %v1103
        %1201 = vmatprep.subr.mxu0 %v1106
        %1202 = vmatpush1.msra.mxu0 %v1105
        %1203 = vmatprep.subr.mxu0 %v1108
        %1204 = vmatpush1.msra.mxu0 %v1107
        %1205 = vmatprep.subr.mxu0 %v1110
        %1206 = vmatpush1.msra.mxu0 %v1109
        %1207 = vmatprep.subr.mxu0 %v1112
        %1208 = vmatpush1.msra.mxu0 %v1111
        %1209 = vmatprep.subr.mxu0 %v1114
        %1210 = vmatpush1.msra.mxu0 %v1113
        %1211 = vmatprep.subr.mxu0 %v1116
        %1212 = vmatpush1.msra.mxu0 %v1115
        %1213 = vmatprep.subr.mxu0 %v1118
        %1214 = vmatpush1.msra.mxu0 %v1117
        %1215 = vmatprep.subr.mxu0 %v1120
        %1216 = vmatpush1.msra.mxu0 %v1119
        %1217 = vmatprep.subr.mxu0 %v1122
        %1218 = vmatpush1.msra.mxu0 %v1121
        %1219 = vmatprep.subr.mxu0 %v1124
        %1220 = vmatpush1.msra.mxu0 %v1123
        %1221 = vmatprep.subr.mxu0 %v1126
        %1222 = vmatpush1.msra.mxu0 %v1125
        %1223 = vmatprep.subr.mxu0 %v1128
        %1224 = vmatpush1.msra.mxu0 %v1127
        %1225 = vmatprep.subr.mxu0 %v1130
        %1226 = vmatpush1.msra.mxu0 %v1129
        %1227 = vmatprep.subr.mxu0 %v1132
        %1228 = vmatpush1.msra.mxu0 %v1131
        %1229 = vmatprep.subr.mxu0 %v1134
        %1230 = vmatpush1.msra.mxu0 %v1133
        %1231 = vmatprep.subr.mxu0 %v1136
        %1232 = vmatpush1.msra.mxu0 %v1135
        %1233 = vmatprep.subr.mxu0 %v1138
        %1234 = vmatpush1.msra.mxu0 %v1137
        %1235 = vmatprep.subr.mxu0 %v1140
        %1236 = vmatpush1.msra.mxu0 %v1139
        %1237 = vmatprep.subr.mxu0 %v1142
        %1238 = vmatpush1.msra.mxu0 %v1141
        %1239 = vmatprep.subr.mxu0 %v1144
        %1240 = vmatpush1.msra.mxu0 %v1143
        %1241 = vmatprep.subr.mxu0 %v1146
        %1242 = vmatpush1.msra.mxu0 %v1145
        %1243 = vmatprep.subr.mxu0 %v1148
        %1244 = vmatpush1.msra.mxu0 %v1147
        %1245 = vmatprep.subr.mxu0 %v1150
        %1246 = vmatpush1.msra.mxu0 %v1149
        %1247 = vmatprep.subr.mxu0 %v1152
        %1248 = vmatpush1.msra.mxu0 %v1151
        %1249 = vmatprep.subr.mxu0 %v1154
        %1250 = vmatpush1.msra.mxu0 %v1153
        %1251 = vmatprep.subr.mxu0 %v1156
        %1252 = vmatpush1.msra.mxu0 %v1155
        %1253 = vmatprep.subr.mxu0 %v1158
        %1254 = vmatpush1.msra.mxu0 %v1157
        %1255 = vmatprep.subr.mxu0 %v1160
        %1256 = vmatpush1.msra.mxu0 %v1159
        %1257 = vmatprep.mubr.f32.mxu0 %v596
        %1258 = vmatmul.mubr.f32.gmra.mrb[0].mxu0 %v595
        %v1259 = vpop.f32.mrb[0].mxu0
        %v1260 = vadd.f32 0.0, %v1259
        %v1261 = vpop.f32.mrb[0].mxu0
        %v1262 = vadd.f32 0.0, %v1261
        %1263 = vmatprep.mubr.f32.mxu0 %v599
        %1264 = vmatmul.mubr.f32.gmra.mrb[0].mxu0 %v598
        %v1265 = vpop.f32.mrb[0].mxu0
        %v1266 = vadd.f32 0.0, %v1265
        %v1267 = vpop.f32.mrb[0].mxu0
        %v1268 = vadd.f32 0.0, %v1267
        %1269 = vmatprep.mubr.f32.mxu0 %v602
        %1270 = vmatmul.mubr.f32.gmra.mrb[0].mxu0 %v601
        %v1271 = vpop.f32.mrb[0].mxu0
        %v1272 = vadd.f32 0.0, %v1271
        %v1273 = vpop.f32.mrb[0].mxu0
        %v1274 = vadd.f32 0.0, %v1273
        %1275 = vmatprep.mubr.f32.mxu0 %v605
        %1276 = vmatmul.mubr.f32.gmra.mrb[0].mxu0 %v604
        %v1277 = vpop.f32.mrb[0].mxu0
        %v1278 = vadd.f32 0.0, %v1277
        %v1279 = vpop.f32.mrb[0].mxu0
        %v1280 = vadd.f32 0.0, %v1279
        %1281 = vmatprep.mubr.f32.mxu0 %v608
        %1282 = vmatmul.mubr.f32.gmra.mrb[0].mxu0 %v607
        %v1283 = vpop.f32.mrb[0].mxu0
        %v1284 = vadd.f32 0.0, %v1283
        %v1285 = vpop.f32.mrb[0].mxu0
        %v1286 = vadd.f32 0.0, %v1285
        %1287 = vmatprep.mubr.f32.mxu0 %v611
        %1288 = vmatmul.mubr.f32.gmra.mrb[0].mxu0 %v610
        %v1289 = vpop.f32.mrb[0].mxu0
        %v1290 = vadd.f32 0.0, %v1289
        %v1291 = vpop.f32.mrb[0].mxu0
        %v1292 = vadd.f32 0.0, %v1291
        %1293 = vmatprep.mubr.f32.mxu0 %v614
        %1294 = vmatmul.mubr.f32.gmra.mrb[0].mxu0 %v613
        %v1295 = vpop.f32.mrb[0].mxu0
        %v1296 = vadd.f32 0.0, %v1295
        %v1297 = vpop.f32.mrb[0].mxu0
        %v1298 = vadd.f32 0.0, %v1297
        %1299 = vmatprep.mubr.f32.mxu0 %v617
        %1300 = vmatmul.mubr.f32.gmra.mrb[0].mxu0 %v616
        %v1301 = vpop.f32.mrb[0].mxu0
        %v1302 = vadd.f32 0.0, %v1301
        %v1303 = vpop.f32.mrb[0].mxu0
        %v1304 = vadd.f32 0.0, %v1303
        %1305 = vmatprep.mubr.f32.mxu0 %v620
        %1306 = vmatmul.mubr.f32.gmra.mrb[0].mxu0 %v619
        %v1307 = vpop.f32.mrb[0].mxu0
        %v1308 = vadd.f32 0.0, %v1307
        %v1309 = vpop.f32.mrb[0].mxu0
        %v1310 = vadd.f32 0.0, %v1309
        %1311 = vmatprep.mubr.f32.mxu0 %v623
        %1312 = vmatmul.mubr.f32.gmra.mrb[0].mxu0 %v622
        %v1313 = vpop.f32.mrb[0].mxu0
        %v1314 = vadd.f32 0.0, %v1313
        %v1315 = vpop.f32.mrb[0].mxu0
        %v1316 = vadd.f32 0.0, %v1315
        %1317 = vmatprep.mubr.f32.mxu0 %v626
        %1318 = vmatmul.mubr.f32.gmra.mrb[0].mxu0 %v625
        %v1319 = vpop.f32.mrb[0].mxu0
        %v1320 = vadd.f32 0.0, %v1319
        %v1321 = vpop.f32.mrb[0].mxu0
        %v1322 = vadd.f32 0.0, %v1321
        %1323 = vmatprep.mubr.f32.mxu0 %v629
        %1324 = vmatmul.mubr.f32.gmra.mrb[0].mxu0 %v628
        %v1325 = vpop.f32.mrb[0].mxu0
        %v1326 = vadd.f32 0.0, %v1325
        %v1327 = vpop.f32.mrb[0].mxu0
        %v1328 = vadd.f32 0.0, %v1327
        %1329 = vdwg.mxu0
        %1330 = vmatprep.subr.mxu0 %v1162
        %1331 = vmatpush1.msra.mxu0 %v1161
        %1332 = vmatprep.subr.mxu0 %v1164
        %1333 = vmatpush1.msra.mxu0 %v1163
        %1334 = vmatprep.subr.mxu0 %v1166
        %1335 = vmatpush1.msra.mxu0 %v1165
        %1336 = vmatprep.subr.mxu0 %v1168
        %1337 = vmatpush1.msra.mxu0 %v1167
        %1338 = vmatprep.subr.mxu0 %v1170
        %1339 = vmatpush1.msra.mxu0 %v1169
        %1340 = vmatprep.subr.mxu0 %v1172
        %1341 = vmatpush1.msra.mxu0 %v1171
        %1342 = vmatprep.subr.mxu0 %v1174
        %1343 = vmatpush1.msra.mxu0 %v1173
        %1344 = vmatprep.subr.mxu0 %v1176
        %1345 = vmatpush1.msra.mxu0 %v1175
        %1346 = vmatprep.subr.mxu0 %v1178
        %1347 = vmatpush1.msra.mxu0 %v1177
        %1348 = vmatprep.subr.mxu0 %v1180
        %1349 = vmatpush1.msra.mxu0 %v1179
        %1350 = vmatprep.subr.mxu0 %v1182
        %1351 = vmatpush1.msra.mxu0 %v1181
        %1352 = vmatprep.subr.mxu0 %v1184
        %1353 = vmatpush1.msra.mxu0 %v1183
        %1354 = vmatprep.subr.mxu0 %v1186
        %1355 = vmatpush1.msra.mxu0 %v1185
        %1356 = vmatprep.subr.mxu0 %v1188
        %1357 = vmatpush1.msra.mxu0 %v1187
        %1358 = vmatprep.subr.mxu0 %v1190
        %1359 = vmatpush1.msra.mxu0 %v1189
        %1360 = vmatprep.subr.mxu0 %v1192
        %1361 = vmatpush1.msra.mxu0 %v1191
        %1362 = vmatprep.subr.mxu0 0.0
        %1363 = vmatpush1.msra.mxu0 0.0
        %1364 = vmatprep.subr.mxu0 0.0
        %1365 = vmatpush1.msra.mxu0 0.0
        %1366 = vmatprep.subr.mxu0 0.0
        %1367 = vmatpush1.msra.mxu0 0.0
        %1368 = vmatprep.subr.mxu0 0.0
        %1369 = vmatpush1.msra.mxu0 0.0
        %1370 = vmatprep.subr.mxu0 0.0
        %1371 = vmatpush1.msra.mxu0 0.0
        %1372 = vmatprep.subr.mxu0 0.0
        %1373 = vmatpush1.msra.mxu0 0.0
        %1374 = vmatprep.subr.mxu0 0.0
        %1375 = vmatpush1.msra.mxu0 0.0
        %1376 = vmatprep.subr.mxu0 0.0
        %1377 = vmatpush1.msra.mxu0 0.0
        %1378 = vmatprep.subr.mxu0 0.0
        %1379 = vmatpush1.msra.mxu0 0.0
        %1380 = vmatprep.subr.mxu0 0.0
        %1381 = vmatpush1.msra.mxu0 0.0
        %1382 = vmatprep.subr.mxu0 0.0
        %1383 = vmatpush1.msra.mxu0 0.0
        %1384 = vmatprep.subr.mxu0 0.0
        %1385 = vmatpush1.msra.mxu0 0.0
        %1386 = vmatprep.subr.mxu0 0.0
        %1387 = vmatpush1.msra.mxu0 0.0
        %1388 = vmatprep.subr.mxu0 0.0
        %1389 = vmatpush1.msra.mxu0 0.0
        %1390 = vmatprep.subr.mxu0 0.0
        %1391 = vmatpush1.msra.mxu0 0.0
        %1392 = vmatprep.subr.mxu0 0.0
        %1393 = vmatpush1.msra.mxu0 0.0
        %1394 = vmatprep.mubr.f32.mxu0 0.0
        %1395 = vmatmul.mubr.f32.gmra.mrb[0].mxu0 %v597
        %v1396 = vpop.f32.mrb[0].mxu0
        %v1397 = vadd.f32 %v1260, %v1396
        %v1398 = vpop.f32.mrb[0].mxu0
        %v1399 = vadd.f32 %v1262, %v1398
        %1400 = vmatprep.mubr.f32.mxu0 0.0
        %1401 = vmatmul.mubr.f32.gmra.mrb[0].mxu0 %v600
        %v1402 = vpop.f32.mrb[0].mxu0
        %v1403 = vadd.f32 %v1266, %v1402
        %v1404 = vpop.f32.mrb[0].mxu0
        %v1405 = vadd.f32 %v1268, %v1404
        %1406 = vmatprep.mubr.f32.mxu0 0.0
        %1407 = vmatmul.mubr.f32.gmra.mrb[0].mxu0 %v603
        %v1408 = vpop.f32.mrb[0].mxu0
        %v1409 = vadd.f32 %v1272, %v1408
        %v1410 = vpop.f32.mrb[0].mxu0
        %v1411 = vadd.f32 %v1274, %v1410
        %1412 = vmatprep.mubr.f32.mxu0 0.0
        %1413 = vmatmul.mubr.f32.gmra.mrb[0].mxu0 %v606
        %v1414 = vpop.f32.mrb[0].mxu0
        %v1415 = vadd.f32 %v1278, %v1414
        %v1416 = vpop.f32.mrb[0].mxu0
        %v1417 = vadd.f32 %v1280, %v1416
        %1418 = vmatprep.mubr.f32.mxu0 0.0
        %1419 = vmatmul.mubr.f32.gmra.mrb[0].mxu0 %v609
        %v1420 = vpop.f32.mrb[0].mxu0
        %v1421 = vadd.f32 %v1284, %v1420
        %v1422 = vpop.f32.mrb[0].mxu0
        %v1423 = vadd.f32 %v1286, %v1422
        %1424 = vmatprep.mubr.f32.mxu0 0.0
        %1425 = vmatmul.mubr.f32.gmra.mrb[0].mxu0 %v612
        %v1426 = vpop.f32.mrb[0].mxu0
        %v1427 = vadd.f32 %v1290, %v1426
        %v1428 = vpop.f32.mrb[0].mxu0
        %v1429 = vadd.f32 %v1292, %v1428
        %1430 = vmatprep.mubr.f32.mxu0 0.0
        %1431 = vmatmul.mubr.f32.gmra.mrb[0].mxu0 %v615
        %v1432 = vpop.f32.mrb[0].mxu0
        %v1433 = vadd.f32 %v1296, %v1432
        %v1434 = vpop.f32.mrb[0].mxu0
        %v1435 = vadd.f32 %v1298, %v1434
        %1436 = vmatprep.mubr.f32.mxu0 0.0
        %1437 = vmatmul.mubr.f32.gmra.mrb[0].mxu0 %v618
        %v1438 = vpop.f32.mrb[0].mxu0
        %v1439 = vadd.f32 %v1302, %v1438
        %v1440 = vpop.f32.mrb[0].mxu0
        %v1441 = vadd.f32 %v1304, %v1440
        %1442 = vmatprep.mubr.f32.mxu0 0.0
        %1443 = vmatmul.mubr.f32.gmra.mrb[0].mxu0 %v621
        %v1444 = vpop.f32.mrb[0].mxu0
        %v1445 = vadd.f32 %v1308, %v1444
        %v1446 = vpop.f32.mrb[0].mxu0
        %v1447 = vadd.f32 %v1310, %v1446
        %1448 = vmatprep.mubr.f32.mxu0 0.0
        %1449 = vmatmul.mubr.f32.gmra.mrb[0].mxu0 %v624
        %v1450 = vpop.f32.mrb[0].mxu0
        %v1451 = vadd.f32 %v1314, %v1450
        %v1452 = vpop.f32.mrb[0].mxu0
        %v1453 = vadd.f32 %v1316, %v1452
        %1454 = vmatprep.mubr.f32.mxu0 0.0
        %1455 = vmatmul.mubr.f32.gmra.mrb[0].mxu0 %v627
        %v1456 = vpop.f32.mrb[0].mxu0
        %v1457 = vadd.f32 %v1320, %v1456
        %v1458 = vpop.f32.mrb[0].mxu0
        %v1459 = vadd.f32 %v1322, %v1458
        %1460 = vmatprep.mubr.f32.mxu0 0.0
        %1461 = vmatmul.mubr.f32.gmra.mrb[0].mxu0 %v630
        %v1462 = vpop.f32.mrb[0].mxu0
        %v1463 = vadd.f32 %v1326, %v1462
        %v1464 = vpop.f32.mrb[0].mxu0
        %v1465 = vadd.f32 %v1328, %v1464
        %1466 = vdwg.mxu0
        %vm1491 = vcmask 1046528
        %v1492 = vrot.slane %v1027, 1
        %v1493 = vrot.slane %v1033, 1
        %v1494 = vsel %vm1491, %v1492, %v1493
        %v1495 = vrot.slane %v1029, 1
        %v1496 = vrot.slane %v1035, 1
        %v1497 = vsel %vm1491, %v1495, %v1496
        %v1498 = vrot.slane %v1039, 1
        %v1499 = vsel %vm1491, %v1493, %v1498
        %v1500 = vrot.slane %v1041, 1
        %v1501 = vsel %vm1491, %v1496, %v1500
        %v1502 = vrot.slane %v1045, 1
        %v1503 = vrot.slane %v1047, 1
        %v1504 = vrot.slane %v1051, 1
        %v1505 = vsel %vm1491, %v1502, %v1504
        %v1506 = vrot.slane %v1053, 1
        %v1507 = vsel %vm1491, %v1503, %v1506
        %v1508 = vrot.slane %v1057, 1
        %v1509 = vsel %vm1491, %v1504, %v1508
        %v1510 = vrot.slane %v1059, 1
        %v1511 = vsel %vm1491, %v1506, %v1510
        %v1512 = vrot.slane %v1063, 1
        %v1513 = vrot.slane %v1065, 1
        %v1514 = vrot.slane %v1069, 1
        %v1515 = vsel %vm1491, %v1512, %v1514
        %v1516 = vrot.slane %v1071, 1
        %v1517 = vsel %vm1491, %v1513, %v1516
        %v1518 = vrot.slane %v1075, 1
        %v1519 = vsel %vm1491, %v1514, %v1518
        %v1520 = vrot.slane %v1077, 1
        %v1521 = vsel %vm1491, %v1516, %v1520
        %v1522 = vrot.slane %v1081, 1
        %v1523 = vrot.slane %v1083, 1
        %v1524 = vrot.slane %v1087, 1
        %v1525 = vsel %vm1491, %v1522, %v1524
        %v1526 = vrot.slane %v1089, 1
        %v1527 = vsel %vm1491, %v1523, %v1526
        %v1528 = vrot.slane %v1093, 1
        %v1529 = vsel %vm1491, %v1524, %v1528
        %v1530 = vrot.slane %v1095, 1
        %v1531 = vsel %vm1491, %v1526, %v1530
        %1548 = vmatprep.subr.mxu0 %v632
        %1549 = vmatpush1.msra.mxu0 %v631
        %1550 = vmatprep.subr.mxu0 %v634
        %1551 = vmatpush1.msra.mxu0 %v633
        %1552 = vmatprep.subr.mxu0 %v636
        %1553 = vmatpush1.msra.mxu0 %v635
        %1554 = vmatprep.subr.mxu0 %v638
        %1555 = vmatpush1.msra.mxu0 %v637
        %1556 = vmatprep.subr.mxu0 %v640
        %1557 = vmatpush1.msra.mxu0 %v639
        %1558 = vmatprep.subr.mxu0 %v642
        %1559 = vmatpush1.msra.mxu0 %v641
        %1560 = vmatprep.subr.mxu0 %v644
        %1561 = vmatpush1.msra.mxu0 %v643
        %1562 = vmatprep.subr.mxu0 %v646
        %1563 = vmatpush1.msra.mxu0 %v645
        %1564 = vmatprep.subr.mxu0 %v648
        %1565 = vmatpush1.msra.mxu0 %v647
        %1566 = vmatprep.subr.mxu0 %v650
        %1567 = vmatpush1.msra.mxu0 %v649
        %1568 = vmatprep.subr.mxu0 %v652
        %1569 = vmatpush1.msra.mxu0 %v651
        %1570 = vmatprep.subr.mxu0 %v654
        %1571 = vmatpush1.msra.mxu0 %v653
        %1572 = vmatprep.subr.mxu0 %v656
        %1573 = vmatpush1.msra.mxu0 %v655
        %1574 = vmatprep.subr.mxu0 %v658
        %1575 = vmatpush1.msra.mxu0 %v657
        %1576 = vmatprep.subr.mxu0 %v660
        %1577 = vmatpush1.msra.mxu0 %v659
        %1578 = vmatprep.subr.mxu0 %v662
        %1579 = vmatpush1.msra.mxu0 %v661
        %1580 = vmatprep.subr.mxu0 %v664
        %1581 = vmatpush1.msra.mxu0 %v663
        %1582 = vmatprep.subr.mxu0 %v666
        %1583 = vmatpush1.msra.mxu0 %v665
        %1584 = vmatprep.subr.mxu0 %v668
        %1585 = vmatpush1.msra.mxu0 %v667
        %1586 = vmatprep.subr.mxu0 %v670
        %1587 = vmatpush1.msra.mxu0 %v669
        %1588 = vmatprep.subr.mxu0 %v672
        %1589 = vmatpush1.msra.mxu0 %v671
        %1590 = vmatprep.subr.mxu0 %v674
        %1591 = vmatpush1.msra.mxu0 %v673
        %1592 = vmatprep.subr.mxu0 %v676
        %1593 = vmatpush1.msra.mxu0 %v675
        %1594 = vmatprep.subr.mxu0 %v678
        %1595 = vmatpush1.msra.mxu0 %v677
        %1596 = vmatprep.subr.mxu0 %v680
        %1597 = vmatpush1.msra.mxu0 %v679
        %1598 = vmatprep.subr.mxu0 %v682
        %1599 = vmatpush1.msra.mxu0 %v681
        %1600 = vmatprep.subr.mxu0 %v684
        %1601 = vmatpush1.msra.mxu0 %v683
        %1602 = vmatprep.subr.mxu0 %v686
        %1603 = vmatpush1.msra.mxu0 %v685
        %1604 = vmatprep.subr.mxu0 %v688
        %1605 = vmatpush1.msra.mxu0 %v687
        %1606 = vmatprep.subr.mxu0 %v690
        %1607 = vmatpush1.msra.mxu0 %v689
        %1608 = vmatprep.subr.mxu0 %v692
        %1609 = vmatpush1.msra.mxu0 %v691
        %1610 = vmatprep.subr.mxu0 %v694
        %1611 = vmatpush1.msra.mxu0 %v693
        %1612 = vmatprep.mubr.f32.mxu0 %v596
        %1613 = vmatmul.mubr.f32.gmra.mrb[0].mxu0 %v595
        %v1614 = vpop.f32.mrb[0].mxu0
        %v1615 = vadd.f32 %v1494, %v1614
        %v1616 = vpop.f32.mrb[0].mxu0
        %v1617 = vadd.f32 %v1497, %v1616
        %1618 = vmatprep.mubr.f32.mxu0 %v599
        %1619 = vmatmul.mubr.f32.gmra.mrb[0].mxu0 %v598
        %v1620 = vpop.f32.mrb[0].mxu0
        %v1621 = vadd.f32 %v1499, %v1620
        %v1622 = vpop.f32.mrb[0].mxu0
        %v1623 = vadd.f32 %v1501, %v1622
        %1624 = vmatprep.mubr.f32.mxu0 %v602
        %1625 = vmatmul.mubr.f32.gmra.mrb[0].mxu0 %v601
        %v1626 = vpop.f32.mrb[0].mxu0
        %v1627 = vpop.f32.mrb[0].mxu0
        %1628 = vmatprep.mubr.f32.mxu0 %v605
        %1629 = vmatmul.mubr.f32.gmra.mrb[0].mxu0 %v604
        %v1630 = vpop.f32.mrb[0].mxu0
        %v1631 = vadd.f32 %v1505, %v1630
        %v1632 = vpop.f32.mrb[0].mxu0
        %v1633 = vadd.f32 %v1507, %v1632
        %1634 = vmatprep.mubr.f32.mxu0 %v608
        %1635 = vmatmul.mubr.f32.gmra.mrb[0].mxu0 %v607
        %v1636 = vpop.f32.mrb[0].mxu0
        %v1637 = vadd.f32 %v1509, %v1636
        %v1638 = vpop.f32.mrb[0].mxu0
        %v1639 = vadd.f32 %v1511, %v1638
        %1640 = vmatprep.mubr.f32.mxu0 %v611
        %1641 = vmatmul.mubr.f32.gmra.mrb[0].mxu0 %v610
        %v1642 = vpop.f32.mrb[0].mxu0
        %v1643 = vpop.f32.mrb[0].mxu0
        %1644 = vmatprep.mubr.f32.mxu0 %v614
        %1645 = vmatmul.mubr.f32.gmra.mrb[0].mxu0 %v613
        %v1646 = vpop.f32.mrb[0].mxu0
        %v1647 = vadd.f32 %v1515, %v1646
        %v1648 = vpop.f32.mrb[0].mxu0
        %v1649 = vadd.f32 %v1517, %v1648
        %1650 = vmatprep.mubr.f32.mxu0 %v617
        %1651 = vmatmul.mubr.f32.gmra.mrb[0].mxu0 %v616
        %v1652 = vpop.f32.mrb[0].mxu0
        %v1653 = vadd.f32 %v1519, %v1652
        %v1654 = vpop.f32.mrb[0].mxu0
        %v1655 = vadd.f32 %v1521, %v1654
        %1656 = vmatprep.mubr.f32.mxu0 %v620
        %1657 = vmatmul.mubr.f32.gmra.mrb[0].mxu0 %v619
        %v1658 = vpop.f32.mrb[0].mxu0
        %v1659 = vpop.f32.mrb[0].mxu0
        %1660 = vmatprep.mubr.f32.mxu0 %v623
        %1661 = vmatmul.mubr.f32.gmra.mrb[0].mxu0 %v622
        %v1662 = vpop.f32.mrb[0].mxu0
        %v1663 = vadd.f32 %v1525, %v1662
        %v1664 = vpop.f32.mrb[0].mxu0
        %v1665 = vadd.f32 %v1527, %v1664
        %1666 = vmatprep.mubr.f32.mxu0 %v626
        %1667 = vmatmul.mubr.f32.gmra.mrb[0].mxu0 %v625
        %v1668 = vpop.f32.mrb[0].mxu0
        %v1669 = vadd.f32 %v1529, %v1668
        %v1670 = vpop.f32.mrb[0].mxu0
        %v1671 = vadd.f32 %v1531, %v1670
        %1672 = vmatprep.mubr.f32.mxu0 %v629
        %1673 = vmatmul.mubr.f32.gmra.mrb[0].mxu0 %v628
        %v1674 = vpop.f32.mrb[0].mxu0
        %v1675 = vpop.f32.mrb[0].mxu0
        %1676 = vdwg.mxu0
        %1677 = vmatprep.subr.mxu0 %v696
        %1678 = vmatpush1.msra.mxu0 %v695
        %1679 = vmatprep.subr.mxu0 %v698
        %1680 = vmatpush1.msra.mxu0 %v697
        %1681 = vmatprep.subr.mxu0 %v700
        %1682 = vmatpush1.msra.mxu0 %v699
        %1683 = vmatprep.subr.mxu0 %v702
        %1684 = vmatpush1.msra.mxu0 %v701
        %1685 = vmatprep.subr.mxu0 %v704
        %1686 = vmatpush1.msra.mxu0 %v703
        %1687 = vmatprep.subr.mxu0 %v706
        %1688 = vmatpush1.msra.mxu0 %v705
        %1689 = vmatprep.subr.mxu0 %v708
        %1690 = vmatpush1.msra.mxu0 %v707
        %1691 = vmatprep.subr.mxu0 %v710
        %1692 = vmatpush1.msra.mxu0 %v709
        %1693 = vmatprep.subr.mxu0 %v712
        %1694 = vmatpush1.msra.mxu0 %v711
        %1695 = vmatprep.subr.mxu0 %v714
        %1696 = vmatpush1.msra.mxu0 %v713
        %1697 = vmatprep.subr.mxu0 %v716
        %1698 = vmatpush1.msra.mxu0 %v715
        %1699 = vmatprep.subr.mxu0 %v718
        %1700 = vmatpush1.msra.mxu0 %v717
        %1701 = vmatprep.subr.mxu0 %v720
        %1702 = vmatpush1.msra.mxu0 %v719
        %1703 = vmatprep.subr.mxu0 %v722
        %1704 = vmatpush1.msra.mxu0 %v721
        %1705 = vmatprep.subr.mxu0 %v724
        %1706 = vmatpush1.msra.mxu0 %v723
        %1707 = vmatprep.subr.mxu0 %v726
        %1708 = vmatpush1.msra.mxu0 %v725
        %1709 = vmatprep.subr.mxu0 0.0
        %1710 = vmatpush1.msra.mxu0 0.0
        %1711 = vmatprep.subr.mxu0 0.0
        %1712 = vmatpush1.msra.mxu0 0.0
        %1713 = vmatprep.subr.mxu0 0.0
        %1714 = vmatpush1.msra.mxu0 0.0
        %1715 = vmatprep.subr.mxu0 0.0
        %1716 = vmatpush1.msra.mxu0 0.0
        %1717 = vmatprep.subr.mxu0 0.0
        %1718 = vmatpush1.msra.mxu0 0.0
        %1719 = vmatprep.subr.mxu0 0.0
        %1720 = vmatpush1.msra.mxu0 0.0
        %1721 = vmatprep.subr.mxu0 0.0
        %1722 = vmatpush1.msra.mxu0 0.0
        %1723 = vmatprep.subr.mxu0 0.0
        %1724 = vmatpush1.msra.mxu0 0.0
        %1725 = vmatprep.subr.mxu0 0.0
        %1726 = vmatpush1.msra.mxu0 0.0
        %1727 = vmatprep.subr.mxu0 0.0
        %1728 = vmatpush1.msra.mxu0 0.0
        %1729 = vmatprep.subr.mxu0 0.0
        %1730 = vmatpush1.msra.mxu0 0.0
        %1731 = vmatprep.subr.mxu0 0.0
        %1732 = vmatpush1.msra.mxu0 0.0
        %1733 = vmatprep.subr.mxu0 0.0
        %1734 = vmatpush1.msra.mxu0 0.0
        %1735 = vmatprep.subr.mxu0 0.0
        %1736 = vmatpush1.msra.mxu0 0.0
        %1737 = vmatprep.subr.mxu0 0.0
        %1738 = vmatpush1.msra.mxu0 0.0
        %1739 = vmatprep.subr.mxu0 0.0
        %1740 = vmatpush1.msra.mxu0 0.0
        %1741 = vmatprep.mubr.f32.mxu0 0.0
        %1742 = vmatmul.mubr.f32.gmra.mrb[0].mxu0 %v597
        %v1743 = vpop.f32.mrb[0].mxu0
        %v1744 = vadd.f32 %v1615, %v1743
        %v1745 = vpop.f32.mrb[0].mxu0
        %v1746 = vadd.f32 %v1617, %v1745
        %1747 = vmatprep.mubr.f32.mxu0 0.0
        %1748 = vmatmul.mubr.f32.gmra.mrb[0].mxu0 %v600
        %v1749 = vpop.f32.mrb[0].mxu0
        %v1750 = vadd.f32 %v1621, %v1749
        %v1751 = vpop.f32.mrb[0].mxu0
        %v1752 = vadd.f32 %v1623, %v1751
        %1753 = vmatprep.mubr.f32.mxu0 0.0
        %1754 = vmatmul.mubr.f32.gmra.mrb[0].mxu0 %v603
        %v1755 = vpop.f32.mrb[0].mxu0
        %v1756 = vpop.f32.mrb[0].mxu0
        %1757 = vmatprep.mubr.f32.mxu0 0.0
        %1758 = vmatmul.mubr.f32.gmra.mrb[0].mxu0 %v606
        %v1759 = vpop.f32.mrb[0].mxu0
        %v1760 = vadd.f32 %v1631, %v1759
        %v1761 = vpop.f32.mrb[0].mxu0
        %v1762 = vadd.f32 %v1633, %v1761
        %1763 = vmatprep.mubr.f32.mxu0 0.0
        %1764 = vmatmul.mubr.f32.gmra.mrb[0].mxu0 %v609
        %v1765 = vpop.f32.mrb[0].mxu0
        %v1766 = vadd.f32 %v1637, %v1765
        %v1767 = vpop.f32.mrb[0].mxu0
        %v1768 = vadd.f32 %v1639, %v1767
        %1769 = vmatprep.mubr.f32.mxu0 0.0
        %1770 = vmatmul.mubr.f32.gmra.mrb[0].mxu0 %v612
        %v1771 = vpop.f32.mrb[0].mxu0
        %v1772 = vpop.f32.mrb[0].mxu0
        %1773 = vmatprep.mubr.f32.mxu0 0.0
        %1774 = vmatmul.mubr.f32.gmra.mrb[0].mxu0 %v615
        %v1775 = vpop.f32.mrb[0].mxu0
        %v1776 = vadd.f32 %v1647, %v1775
        %v1777 = vpop.f32.mrb[0].mxu0
        %v1778 = vadd.f32 %v1649, %v1777
        %1779 = vmatprep.mubr.f32.mxu0 0.0
        %1780 = vmatmul.mubr.f32.gmra.mrb[0].mxu0 %v618
        %v1781 = vpop.f32.mrb[0].mxu0
        %v1782 = vadd.f32 %v1653, %v1781
        %v1783 = vpop.f32.mrb[0].mxu0
        %v1784 = vadd.f32 %v1655, %v1783
        %1785 = vmatprep.mubr.f32.mxu0 0.0
        %1786 = vmatmul.mubr.f32.gmra.mrb[0].mxu0 %v621
        %v1787 = vpop.f32.mrb[0].mxu0
        %v1788 = vpop.f32.mrb[0].mxu0
        %1789 = vmatprep.mubr.f32.mxu0 0.0
        %1790 = vmatmul.mubr.f32.gmra.mrb[0].mxu0 %v624
        %v1791 = vpop.f32.mrb[0].mxu0
        %v1792 = vadd.f32 %v1663, %v1791
        %v1793 = vpop.f32.mrb[0].mxu0
        %v1794 = vadd.f32 %v1665, %v1793
        %1795 = vmatprep.mubr.f32.mxu0 0.0
        %1796 = vmatmul.mubr.f32.gmra.mrb[0].mxu0 %v627
        %v1797 = vpop.f32.mrb[0].mxu0
        %v1798 = vadd.f32 %v1669, %v1797
        %v1799 = vpop.f32.mrb[0].mxu0
        %v1800 = vadd.f32 %v1671, %v1799
        %1801 = vmatprep.mubr.f32.mxu0 0.0
        %1802 = vmatmul.mubr.f32.gmra.mrb[0].mxu0 %v630
        %v1803 = vpop.f32.mrb[0].mxu0
        %v1804 = vpop.f32.mrb[0].mxu0
        %1805 = vdwg.mxu0
        %vm1830 = vcmask 1045504
        %v1831 = vrot.slane %v1397, 2
        %v1832 = vrot.slane %v1403, 2
        %v1833 = vsel %vm1830, %v1831, %v1832
        %v1834 = vrot.slane %v1399, 2
        %v1835 = vrot.slane %v1405, 2
        %v1836 = vsel %vm1830, %v1834, %v1835
        %v1837 = vrot.slane %v1409, 2
        %v1838 = vsel %vm1830, %v1832, %v1837
        %v1839 = vrot.slane %v1411, 2
        %v1840 = vsel %vm1830, %v1835, %v1839
        %v1841 = vrot.slane %v1415, 2
        %v1842 = vrot.slane %v1421, 2
        %v1843 = vsel %vm1830, %v1841, %v1842
        %v1844 = vrot.slane %v1417, 2
        %v1845 = vrot.slane %v1423, 2
        %v1846 = vsel %vm1830, %v1844, %v1845
        %v1847 = vrot.slane %v1427, 2
        %v1848 = vsel %vm1830, %v1842, %v1847
        %v1849 = vrot.slane %v1429, 2
        %v1850 = vsel %vm1830, %v1845, %v1849
        %v1851 = vrot.slane %v1433, 2
        %v1852 = vrot.slane %v1439, 2
        %v1853 = vsel %vm1830, %v1851, %v1852
        %v1854 = vrot.slane %v1435, 2
        %v1855 = vrot.slane %v1441, 2
        %v1856 = vsel %vm1830, %v1854, %v1855
        %v1857 = vrot.slane %v1445, 2
        %v1858 = vsel %vm1830, %v1852, %v1857
        %v1859 = vrot.slane %v1447, 2
        %v1860 = vsel %vm1830, %v1855, %v1859
        %v1861 = vrot.slane %v1451, 2
        %v1862 = vrot.slane %v1457, 2
        %v1863 = vsel %vm1830, %v1861, %v1862
        %v1864 = vrot.slane %v1453, 2
        %v1865 = vrot.slane %v1459, 2
        %v1866 = vsel %vm1830, %v1864, %v1865
        %v1867 = vrot.slane %v1463, 2
        %v1868 = vsel %vm1830, %v1862, %v1867
        %v1869 = vrot.slane %v1465, 2
        %v1870 = vsel %vm1830, %v1865, %v1869
        %v1887 = vadd.f32 %v1744, %v1833
        %v1888 = vadd.f32 %v1746, %v1836
        %v1889 = vadd.f32 %v1750, %v1838
        %v1890 = vadd.f32 %v1752, %v1840
        %v1891 = vadd.f32 %v1760, %v1843
        %v1892 = vadd.f32 %v1762, %v1846
        %v1893 = vadd.f32 %v1766, %v1848
        %v1894 = vadd.f32 %v1768, %v1850
        %v1895 = vadd.f32 %v1776, %v1853
        %v1896 = vadd.f32 %v1778, %v1856
        %v1897 = vadd.f32 %v1782, %v1858
        %v1898 = vadd.f32 %v1784, %v1860
        %v1899 = vadd.f32 %v1792, %v1863
        %v1900 = vadd.f32 %v1794, %v1866
        %v1901 = vadd.f32 %v1798, %v1868
        %v1902 = vadd.f32 %v1800, %v1870
        %v1903 = vld [vmem:[%s5] sm:$0x3]
        %v1905 = vlaneseq
        %v1906 = vshrl.u32 %v1905, 7
        %v1907 = vsub.s32 0, %v1906
        %v1908 = vrot.slane %v1903, %v1907
        %v1909 = vlaneseq
        %v1910 = vshrl.u32 %v1909, 7
        %v1911 = vsub.s32 1, %v1910
        %v1912 = vrot.slane %v1903, %v1911
        %v1915 = vmul.f32 %v1887, %v1908
        %v1916 = vmul.f32 %v1888, %v1912
        %v1917 = vmul.f32 %v1889, %v1908
        %v1918 = vmul.f32 %v1890, %v1912
        %v1919 = vmul.f32 %v1891, %v1908
        %v1920 = vmul.f32 %v1892, %v1912
        %v1921 = vmul.f32 %v1893, %v1908
        %v1922 = vmul.f32 %v1894, %v1912
        %v1923 = vmul.f32 %v1895, %v1908
        %v1924 = vmul.f32 %v1896, %v1912
        %v1925 = vmul.f32 %v1897, %v1908
        %v1926 = vmul.f32 %v1898, %v1912
        %v1927 = vmul.f32 %v1899, %v1908
        %v1928 = vmul.f32 %v1900, %v1912
        %v1929 = vmul.f32 %v1901, %v1908
        %v1930 = vmul.f32 %v1902, %v1912
        %v1931 = vld [vmem:[#allocation10] sm:$0x3]
        %v1933 = vlaneseq
        %v1934 = vshrl.u32 %v1933, 7
        %v1935 = vsub.s32 0, %v1934
        %v1936 = vrot.slane %v1931, %v1935
        %v1937 = vlaneseq
        %v1938 = vshrl.u32 %v1937, 7
        %v1939 = vsub.s32 1, %v1938
        %v1940 = vrot.slane %v1931, %v1939
        %v1943 = vadd.f32 %v1915, %v1936
        %v1944 = vadd.f32 %v1916, %v1940
        %v1945 = vadd.f32 %v1917, %v1936
        %v1946 = vadd.f32 %v1918, %v1940
        %v1947 = vadd.f32 %v1919, %v1936
        %v1948 = vadd.f32 %v1920, %v1940
        %v1949 = vadd.f32 %v1921, %v1936
        %v1950 = vadd.f32 %v1922, %v1940
        %v1951 = vadd.f32 %v1923, %v1936
        %v1952 = vadd.f32 %v1924, %v1940
        %v1953 = vadd.f32 %v1925, %v1936
        %v1954 = vadd.f32 %v1926, %v1940
        %v1955 = vadd.f32 %v1927, %v1936
        %v1956 = vadd.f32 %v1928, %v1940
        %v1957 = vadd.f32 %v1929, %v1936
        %v1958 = vadd.f32 %v1930, %v1940
        %v1959 = vmax.f32 %v1943, 0.0
        %v1960 = vmax.f32 %v1944, 0.0
        %v1961 = vmax.f32 %v1945, 0.0
        %v1962 = vmax.f32 %v1946, 0.0
        %v1963 = vmax.f32 %v1947, 0.0
        %v1964 = vmax.f32 %v1948, 0.0
        %v1965 = vmax.f32 %v1949, 0.0
        %v1966 = vmax.f32 %v1950, 0.0
        %v1967 = vmax.f32 %v1951, 0.0
        %v1968 = vmax.f32 %v1952, 0.0
        %v1969 = vmax.f32 %v1953, 0.0
        %v1970 = vmax.f32 %v1954, 0.0
        %v1971 = vmax.f32 %v1955, 0.0
        %v1972 = vmax.f32 %v1956, 0.0
        %v1973 = vmax.f32 %v1957, 0.0
        %v1974 = vmax.f32 %v1958, 0.0
        %1991 = vrot.lane.b32.xlu0 %v1959, 16
        %v1992 = vpop.permute.xlu0 %1991
        %1993 = vrot.lane.b32.xlu0 %v1960, 16
        %v1994 = vpop.permute.xlu0 %1993
        %1995 = vrot.lane.b32.xlu0 %v1961, 16
        %v1996 = vpop.permute.xlu0 %1995
        %1997 = vrot.lane.b32.xlu0 %v1962, 16
        %v1998 = vpop.permute.xlu0 %1997
        %1999 = vrot.lane.b32.xlu0 %v1963, 16
        %v2000 = vpop.permute.xlu0 %1999
        %2001 = vrot.lane.b32.xlu0 %v1964, 16
        %v2002 = vpop.permute.xlu0 %2001
        %2003 = vrot.lane.b32.xlu0 %v1965, 16
        %v2004 = vpop.permute.xlu0 %2003
        %2005 = vrot.lane.b32.xlu0 %v1966, 16
        %v2006 = vpop.permute.xlu0 %2005
        %2007 = vrot.lane.b32.xlu0 %v1967, 16
        %v2008 = vpop.permute.xlu0 %2007
        %2009 = vrot.lane.b32.xlu0 %v1968, 16
        %v2010 = vpop.permute.xlu0 %2009
        %2011 = vrot.lane.b32.xlu0 %v1969, 16
        %v2012 = vpop.permute.xlu0 %2011
        %2013 = vrot.lane.b32.xlu0 %v1970, 16
        %v2014 = vpop.permute.xlu0 %2013
        %2015 = vrot.lane.b32.xlu0 %v1971, 16
        %v2016 = vpop.permute.xlu0 %2015
        %2017 = vrot.lane.b32.xlu0 %v1972, 16
        %v2018 = vpop.permute.xlu0 %2017
        %2019 = vrot.lane.b32.xlu0 %v1973, 16
        %v2020 = vpop.permute.xlu0 %2019
        %2021 = vrot.lane.b32.xlu0 %v1974, 16
        %v2022 = vpop.permute.xlu0 %2021
        %vm2023 = vcmask 130048
        %v2024 = vsel %vm2023, %v1992, %v1994
        %v2025 = vsel %vm2023, %v1996, %v1998
        %v2026 = vsel %vm2023, %v2000, %v2002
        %v2027 = vsel %vm2023, %v2004, %v2006
        %v2028 = vsel %vm2023, %v2008, %v2010
        %v2029 = vsel %vm2023, %v2012, %v2014
        %v2030 = vsel %vm2023, %v2016, %v2018
        %v2031 = vsel %vm2023, %v2020, %v2022
        %v2048 = vsel %vm2023, 0.0, %v1992
        %v2049 = vsel %vm2023, 0.0, %v1996
        %v2050 = vsel %vm2023, 0.0, %v2000
        %v2051 = vsel %vm2023, 0.0, %v2004
        %v2052 = vsel %vm2023, 0.0, %v2008
        %v2053 = vsel %vm2023, 0.0, %v2012
        %v2054 = vsel %vm2023, 0.0, %v2016
        %v2055 = vsel %vm2023, 0.0, %v2020
        %2056 = vrot.lane.b32.xlu0 %v1959, 112
        %v2057 = vpop.permute.xlu0 %2056
        %2058 = vrot.lane.b32.xlu0 %v1960, 112
        %v2059 = vpop.permute.xlu0 %2058
        %2060 = vrot.lane.b32.xlu0 %v1961, 112
        %v2061 = vpop.permute.xlu0 %2060
        %2062 = vrot.lane.b32.xlu0 %v1962, 112
        %v2063 = vpop.permute.xlu0 %2062
        %2064 = vrot.lane.b32.xlu0 %v1963, 112
        %v2065 = vpop.permute.xlu0 %2064
        %2066 = vrot.lane.b32.xlu0 %v1964, 112
        %v2067 = vpop.permute.xlu0 %2066
        %2068 = vrot.lane.b32.xlu0 %v1965, 112
        %v2069 = vpop.permute.xlu0 %2068
        %2070 = vrot.lane.b32.xlu0 %v1966, 112
        %v2071 = vpop.permute.xlu0 %2070
        %2072 = vrot.lane.b32.xlu0 %v1967, 112
        %v2073 = vpop.permute.xlu0 %2072
        %2074 = vrot.lane.b32.xlu0 %v1968, 112
        %v2075 = vpop.permute.xlu0 %2074
        %2076 = vrot.lane.b32.xlu0 %v1969, 112
        %v2077 = vpop.permute.xlu0 %2076
        %2078 = vrot.lane.b32.xlu0 %v1970, 112
        %v2079 = vpop.permute.xlu0 %2078
        %2080 = vrot.lane.b32.xlu0 %v1971, 112
        %v2081 = vpop.permute.xlu0 %2080
        %2082 = vrot.lane.b32.xlu0 %v1972, 112
        %v2083 = vpop.permute.xlu0 %2082
        %2084 = vrot.lane.b32.xlu0 %v1973, 112
        %v2085 = vpop.permute.xlu0 %2084
        %2086 = vrot.lane.b32.xlu0 %v1974, 112
        %v2087 = vpop.permute.xlu0 %2086
        %vm2088 = vcmask 916480
        %v2089 = vsel %vm2088, %v2057, %v2059
        %v2090 = vsel %vm2088, %v2061, %v2063
        %v2091 = vsel %vm2088, %v2065, %v2067
        %v2092 = vsel %vm2088, %v2069, %v2071
        %v2093 = vsel %vm2088, %v2073, %v2075
        %v2094 = vsel %vm2088, %v2077, %v2079
        %v2095 = vsel %vm2088, %v2081, %v2083
        %v2096 = vsel %vm2088, %v2085, %v2087
        %v2113 = vsel %vm2088, %v2059, 0.0
        %v2114 = vsel %vm2088, %v2063, 0.0
        %v2115 = vsel %vm2088, %v2067, 0.0
        %v2116 = vsel %vm2088, %v2071, 0.0
        %v2117 = vsel %vm2088, %v2075, 0.0
        %v2118 = vsel %vm2088, %v2079, 0.0
        %v2119 = vsel %vm2088, %v2083, 0.0
        %v2120 = vsel %vm2088, %v2087, 0.0
        %v2121 = vld [vmem:[%s7] sm:$0xff]
        %v2122 = vld [vmem:[%s7 + $0x8] sm:$0xff]
        %v2123 = vld [vmem:[%s7 + $0x10] sm:$0x1]
        %v2124 = vld [vmem:[%s7 + $0x18] sm:$0x1]
        %v2125 = vlaneseq
        %v2126 = vshrl.u32 %v2125, 7
        %v2127 = vsub.s32 0, %v2126
        %v2128 = vrot.slane %v2121, %v2127
        %v2129 = vlaneseq
        %v2130 = vshrl.u32 %v2129, 7
        %v2131 = vsub.s32 0, %v2130
        %v2132 = vrot.slane %v2122, %v2131
        %v2133 = vmul.f32 %v2048, %v2128
        %v2134 = vmul.f32 %v2024, %v2132
        %v2135 = vmul.f32 %v2049, %v2128
        %v2136 = vmul.f32 %v2025, %v2132
        %v2137 = vmul.f32 %v2050, %v2128
        %v2138 = vmul.f32 %v2026, %v2132
        %v2139 = vmul.f32 %v2051, %v2128
        %v2140 = vmul.f32 %v2027, %v2132
        %v2141 = vmul.f32 %v2052, %v2128
        %v2142 = vmul.f32 %v2028, %v2132
        %v2143 = vmul.f32 %v2053, %v2128
        %v2144 = vmul.f32 %v2029, %v2132
        %v2145 = vmul.f32 %v2054, %v2128
        %v2146 = vmul.f32 %v2030, %v2132
        %v2147 = vmul.f32 %v2055, %v2128
        %v2148 = vmul.f32 %v2031, %v2132
        %v2149 = vlaneseq
        %v2150 = vshrl.u32 %v2149, 7
        %v2151 = vsub.s32 1, %v2150
        %v2152 = vrot.slane %v2121, %v2151
        %v2153 = vlaneseq
        %v2154 = vshrl.u32 %v2153, 7
        %v2155 = vsub.s32 1, %v2154
        %v2156 = vrot.slane %v2122, %v2155
        %v2157 = vmul.f32 %v1959, %v2152
        %v2158 = vmul.f32 %v1960, %v2156
        %v2159 = vmul.f32 %v1961, %v2152
        %v2160 = vmul.f32 %v1962, %v2156
        %v2161 = vmul.f32 %v1963, %v2152
        %v2162 = vmul.f32 %v1964, %v2156
        %v2163 = vmul.f32 %v1965, %v2152
        %v2164 = vmul.f32 %v1966, %v2156
        %v2165 = vmul.f32 %v1967, %v2152
        %v2166 = vmul.f32 %v1968, %v2156
        %v2167 = vmul.f32 %v1969, %v2152
        %v2168 = vmul.f32 %v1970, %v2156
        %v2169 = vmul.f32 %v1971, %v2152
        %v2170 = vmul.f32 %v1972, %v2156
        %v2171 = vmul.f32 %v1973, %v2152
        %v2172 = vmul.f32 %v1974, %v2156
        %v2173 = vadd.f32 %v2133, %v2157
        %v2174 = vadd.f32 %v2134, %v2158
        %v2175 = vadd.f32 %v2135, %v2159
        %v2176 = vadd.f32 %v2136, %v2160
        %v2177 = vadd.f32 %v2137, %v2161
        %v2178 = vadd.f32 %v2138, %v2162
        %v2179 = vadd.f32 %v2139, %v2163
        %v2180 = vadd.f32 %v2140, %v2164
        %v2181 = vadd.f32 %v2141, %v2165
        %v2182 = vadd.f32 %v2142, %v2166
        %v2183 = vadd.f32 %v2143, %v2167
        %v2184 = vadd.f32 %v2144, %v2168
        %v2185 = vadd.f32 %v2145, %v2169
        %v2186 = vadd.f32 %v2146, %v2170
        %v2187 = vadd.f32 %v2147, %v2171
        %v2188 = vadd.f32 %v2148, %v2172
        %v2189 = vlaneseq
        %v2190 = vshrl.u32 %v2189, 7
        %v2191 = vsub.s32 2, %v2190
        %v2192 = vrot.slane %v2121, %v2191
        %v2193 = vlaneseq
        %v2194 = vshrl.u32 %v2193, 7
        %v2195 = vsub.s32 2, %v2194
        %v2196 = vrot.slane %v2122, %v2195
        %v2197 = vmul.f32 %v2089, %v2192
        %v2198 = vmul.f32 %v2113, %v2196
        %v2199 = vmul.f32 %v2090, %v2192
        %v2200 = vmul.f32 %v2114, %v2196
        %v2201 = vmul.f32 %v2091, %v2192
        %v2202 = vmul.f32 %v2115, %v2196
        %v2203 = vmul.f32 %v2092, %v2192
        %v2204 = vmul.f32 %v2116, %v2196
        %v2205 = vmul.f32 %v2093, %v2192
        %v2206 = vmul.f32 %v2117, %v2196
        %v2207 = vmul.f32 %v2094, %v2192
        %v2208 = vmul.f32 %v2118, %v2196
        %v2209 = vmul.f32 %v2095, %v2192
        %v2210 = vmul.f32 %v2119, %v2196
        %v2211 = vmul.f32 %v2096, %v2192
        %v2212 = vmul.f32 %v2120, %v2196
        %v2213 = vadd.f32 %v2173, %v2197
        %v2214 = vadd.f32 %v2174, %v2198
        %v2215 = vadd.f32 %v2175, %v2199
        %v2216 = vadd.f32 %v2176, %v2200
        %v2217 = vadd.f32 %v2177, %v2201
        %v2218 = vadd.f32 %v2178, %v2202
        %v2219 = vadd.f32 %v2179, %v2203
        %v2220 = vadd.f32 %v2180, %v2204
        %v2221 = vadd.f32 %v2181, %v2205
        %v2222 = vadd.f32 %v2182, %v2206
        %v2223 = vadd.f32 %v2183, %v2207
        %v2224 = vadd.f32 %v2184, %v2208
        %v2225 = vadd.f32 %v2185, %v2209
        %v2226 = vadd.f32 %v2186, %v2210
        %v2227 = vadd.f32 %v2187, %v2211
        %v2228 = vadd.f32 %v2188, %v2212
        %v2229 = vlaneseq
        %v2230 = vshrl.u32 %v2229, 7
        %v2231 = vsub.s32 3, %v2230
        %v2232 = vrot.slane %v2121, %v2231
        %v2233 = vlaneseq
        %v2234 = vshrl.u32 %v2233, 7
        %v2235 = vsub.s32 3, %v2234
        %v2236 = vrot.slane %v2122, %v2235
        %v2237 = vmul.f32 %v2048, %v2232
        %v2238 = vmul.f32 %v2024, %v2236
        %v2239 = vmul.f32 %v2049, %v2232
        %v2240 = vmul.f32 %v2025, %v2236
        %v2241 = vmul.f32 %v2050, %v2232
        %v2242 = vmul.f32 %v2026, %v2236
        %v2243 = vmul.f32 %v2051, %v2232
        %v2244 = vmul.f32 %v2027, %v2236
        %v2245 = vmul.f32 %v2052, %v2232
        %v2246 = vmul.f32 %v2028, %v2236
        %v2247 = vmul.f32 %v2053, %v2232
        %v2248 = vmul.f32 %v2029, %v2236
        %v2249 = vmul.f32 %v2054, %v2232
        %v2250 = vmul.f32 %v2030, %v2236
        %v2251 = vmul.f32 %v2055, %v2232
        %v2252 = vmul.f32 %v2031, %v2236
        %v2253 = vlaneseq
        %v2254 = vshrl.u32 %v2253, 7
        %v2255 = vsub.s32 4, %v2254
        %v2256 = vrot.slane %v2121, %v2255
        %v2257 = vlaneseq
        %v2258 = vshrl.u32 %v2257, 7
        %v2259 = vsub.s32 4, %v2258
        %v2260 = vrot.slane %v2122, %v2259
        %v2261 = vmul.f32 %v1959, %v2256
        %v2262 = vmul.f32 %v1960, %v2260
        %v2263 = vmul.f32 %v1961, %v2256
        %v2264 = vmul.f32 %v1962, %v2260
        %v2265 = vmul.f32 %v1963, %v2256
        %v2266 = vmul.f32 %v1964, %v2260
        %v2267 = vmul.f32 %v1965, %v2256
        %v2268 = vmul.f32 %v1966, %v2260
        %v2269 = vmul.f32 %v1967, %v2256
        %v2270 = vmul.f32 %v1968, %v2260
        %v2271 = vmul.f32 %v1969, %v2256
        %v2272 = vmul.f32 %v1970, %v2260
        %v2273 = vmul.f32 %v1971, %v2256
        %v2274 = vmul.f32 %v1972, %v2260
        %v2275 = vmul.f32 %v1973, %v2256
        %v2276 = vmul.f32 %v1974, %v2260
        %v2277 = vadd.f32 %v2237, %v2261
        %v2278 = vadd.f32 %v2238, %v2262
        %v2279 = vadd.f32 %v2239, %v2263
        %v2280 = vadd.f32 %v2240, %v2264
        %v2281 = vadd.f32 %v2241, %v2265
        %v2282 = vadd.f32 %v2242, %v2266
        %v2283 = vadd.f32 %v2243, %v2267
        %v2284 = vadd.f32 %v2244, %v2268
        %v2285 = vadd.f32 %v2245, %v2269
        %v2286 = vadd.f32 %v2246, %v2270
        %v2287 = vadd.f32 %v2247, %v2271
        %v2288 = vadd.f32 %v2248, %v2272
        %v2289 = vadd.f32 %v2249, %v2273
        %v2290 = vadd.f32 %v2250, %v2274
        %v2291 = vadd.f32 %v2251, %v2275
        %v2292 = vadd.f32 %v2252, %v2276
        %v2293 = vlaneseq
        %v2294 = vshrl.u32 %v2293, 7
        %v2295 = vsub.s32 5, %v2294
        %v2296 = vrot.slane %v2121, %v2295
        %v2297 = vlaneseq
        %v2298 = vshrl.u32 %v2297, 7
        %v2299 = vsub.s32 5, %v2298
        %v2300 = vrot.slane %v2122, %v2299
        %v2301 = vmul.f32 %v2089, %v2296
        %v2302 = vmul.f32 %v2113, %v2300
        %v2303 = vmul.f32 %v2090, %v2296
        %v2304 = vmul.f32 %v2114, %v2300
        %v2305 = vmul.f32 %v2091, %v2296
        %v2306 = vmul.f32 %v2115, %v2300
        %v2307 = vmul.f32 %v2092, %v2296
        %v2308 = vmul.f32 %v2116, %v2300
        %v2309 = vmul.f32 %v2093, %v2296
        %v2310 = vmul.f32 %v2117, %v2300
        %v2311 = vmul.f32 %v2094, %v2296
        %v2312 = vmul.f32 %v2118, %v2300
        %v2313 = vmul.f32 %v2095, %v2296
        %v2314 = vmul.f32 %v2119, %v2300
        %v2315 = vmul.f32 %v2096, %v2296
        %v2316 = vmul.f32 %v2120, %v2300
        %v2317 = vadd.f32 %v2277, %v2301
        %v2318 = vadd.f32 %v2278, %v2302
        %v2319 = vadd.f32 %v2279, %v2303
        %v2320 = vadd.f32 %v2280, %v2304
        %v2321 = vadd.f32 %v2281, %v2305
        %v2322 = vadd.f32 %v2282, %v2306
        %v2323 = vadd.f32 %v2283, %v2307
        %v2324 = vadd.f32 %v2284, %v2308
        %v2325 = vadd.f32 %v2285, %v2309
        %v2326 = vadd.f32 %v2286, %v2310
        %v2327 = vadd.f32 %v2287, %v2311
        %v2328 = vadd.f32 %v2288, %v2312
        %v2329 = vadd.f32 %v2289, %v2313
        %v2330 = vadd.f32 %v2290, %v2314
        %v2331 = vadd.f32 %v2291, %v2315
        %v2332 = vadd.f32 %v2292, %v2316
        %v2333 = vlaneseq
        %v2334 = vshrl.u32 %v2333, 7
        %v2335 = vsub.s32 6, %v2334
        %v2336 = vrot.slane %v2121, %v2335
        %v2337 = vlaneseq
        %v2338 = vshrl.u32 %v2337, 7
        %v2339 = vsub.s32 6, %v2338
        %v2340 = vrot.slane %v2122, %v2339
        %v2341 = vmul.f32 %v2048, %v2336
        %v2342 = vmul.f32 %v2024, %v2340
        %v2343 = vmul.f32 %v2049, %v2336
        %v2344 = vmul.f32 %v2025, %v2340
        %v2345 = vmul.f32 %v2050, %v2336
        %v2346 = vmul.f32 %v2026, %v2340
        %v2347 = vmul.f32 %v2051, %v2336
        %v2348 = vmul.f32 %v2027, %v2340
        %v2349 = vmul.f32 %v2052, %v2336
        %v2350 = vmul.f32 %v2028, %v2340
        %v2351 = vmul.f32 %v2053, %v2336
        %v2352 = vmul.f32 %v2029, %v2340
        %v2353 = vmul.f32 %v2054, %v2336
        %v2354 = vmul.f32 %v2030, %v2340
        %v2355 = vmul.f32 %v2055, %v2336
        %v2356 = vmul.f32 %v2031, %v2340
        %v2357 = vlaneseq
        %v2358 = vshrl.u32 %v2357, 7
        %v2359 = vsub.s32 7, %v2358
        %v2360 = vrot.slane %v2121, %v2359
        %v2361 = vlaneseq
        %v2362 = vshrl.u32 %v2361, 7
        %v2363 = vsub.s32 7, %v2362
        %v2364 = vrot.slane %v2122, %v2363
        %v2365 = vmul.f32 %v1959, %v2360
        %v2366 = vmul.f32 %v1960, %v2364
        %v2367 = vmul.f32 %v1961, %v2360
        %v2368 = vmul.f32 %v1962, %v2364
        %v2369 = vmul.f32 %v1963, %v2360
        %v2370 = vmul.f32 %v1964, %v2364
        %v2371 = vmul.f32 %v1965, %v2360
        %v2372 = vmul.f32 %v1966, %v2364
        %v2373 = vmul.f32 %v1967, %v2360
        %v2374 = vmul.f32 %v1968, %v2364
        %v2375 = vmul.f32 %v1969, %v2360
        %v2376 = vmul.f32 %v1970, %v2364
        %v2377 = vmul.f32 %v1971, %v2360
        %v2378 = vmul.f32 %v1972, %v2364
        %v2379 = vmul.f32 %v1973, %v2360
        %v2380 = vmul.f32 %v1974, %v2364
        %v2381 = vadd.f32 %v2341, %v2365
        %v2382 = vadd.f32 %v2342, %v2366
        %v2383 = vadd.f32 %v2343, %v2367
        %v2384 = vadd.f32 %v2344, %v2368
        %v2385 = vadd.f32 %v2345, %v2369
        %v2386 = vadd.f32 %v2346, %v2370
        %v2387 = vadd.f32 %v2347, %v2371
        %v2388 = vadd.f32 %v2348, %v2372
        %v2389 = vadd.f32 %v2349, %v2373
        %v2390 = vadd.f32 %v2350, %v2374
        %v2391 = vadd.f32 %v2351, %v2375
        %v2392 = vadd.f32 %v2352, %v2376
        %v2393 = vadd.f32 %v2353, %v2377
        %v2394 = vadd.f32 %v2354, %v2378
        %v2395 = vadd.f32 %v2355, %v2379
        %v2396 = vadd.f32 %v2356, %v2380
        %v2397 = vlaneseq
        %v2398 = vshrl.u32 %v2397, 7
        %v2399 = vsub.s32 0, %v2398
        %v2400 = vrot.slane %v2123, %v2399
        %v2401 = vlaneseq
        %v2402 = vshrl.u32 %v2401, 7
        %v2403 = vsub.s32 0, %v2402
        %v2404 = vrot.slane %v2124, %v2403
        %v2405 = vmul.f32 %v2089, %v2400
        %v2406 = vmul.f32 %v2113, %v2404
        %v2407 = vmul.f32 %v2090, %v2400
        %v2408 = vmul.f32 %v2114, %v2404
        %v2409 = vmul.f32 %v2091, %v2400
        %v2410 = vmul.f32 %v2115, %v2404
        %v2411 = vmul.f32 %v2092, %v2400
        %v2412 = vmul.f32 %v2116, %v2404
        %v2413 = vmul.f32 %v2093, %v2400
        %v2414 = vmul.f32 %v2117, %v2404
        %v2415 = vmul.f32 %v2094, %v2400
        %v2416 = vmul.f32 %v2118, %v2404
        %v2417 = vmul.f32 %v2095, %v2400
        %v2418 = vmul.f32 %v2119, %v2404
        %v2419 = vmul.f32 %v2096, %v2400
        %v2420 = vmul.f32 %v2120, %v2404
        %v2421 = vadd.f32 %v2381, %v2405
        %v2422 = vadd.f32 %v2382, %v2406
        %v2423 = vadd.f32 %v2383, %v2407
        %v2424 = vadd.f32 %v2384, %v2408
        %v2425 = vadd.f32 %v2385, %v2409
        %v2426 = vadd.f32 %v2386, %v2410
        %v2427 = vadd.f32 %v2387, %v2411
        %v2428 = vadd.f32 %v2388, %v2412
        %v2429 = vadd.f32 %v2389, %v2413
        %v2430 = vadd.f32 %v2390, %v2414
        %v2431 = vadd.f32 %v2391, %v2415
        %v2432 = vadd.f32 %v2392, %v2416
        %v2433 = vadd.f32 %v2393, %v2417
        %v2434 = vadd.f32 %v2394, %v2418
        %v2435 = vadd.f32 %v2395, %v2419
        %v2436 = vadd.f32 %v2396, %v2420
        %vm2453 = vcmask 1040384
        %v2454 = vrot.slane %v2213, 7
        %v2455 = vrot.slane %v2214, 7
        %v2456 = vrot.slane %v2215, 7
        %v2457 = vsel %vm2453, %v2454, %v2456
        %v2458 = vrot.slane %v2216, 7
        %v2459 = vsel %vm2453, %v2455, %v2458
        %v2460 = vrot.slane %v2217, 7
        %v2461 = vrot.slane %v2218, 7
        %v2462 = vrot.slane %v2219, 7
        %v2463 = vsel %vm2453, %v2460, %v2462
        %v2464 = vrot.slane %v2220, 7
        %v2465 = vsel %vm2453, %v2461, %v2464
        %v2466 = vrot.slane %v2221, 7
        %v2467 = vrot.slane %v2222, 7
        %v2468 = vrot.slane %v2223, 7
        %v2469 = vsel %vm2453, %v2466, %v2468
        %v2470 = vrot.slane %v2224, 7
        %v2471 = vsel %vm2453, %v2467, %v2470
        %v2472 = vrot.slane %v2225, 7
        %v2473 = vrot.slane %v2226, 7
        %v2474 = vrot.slane %v2227, 7
        %v2475 = vsel %vm2453, %v2472, %v2474
        %v2476 = vrot.slane %v2228, 7
        %v2477 = vsel %vm2453, %v2473, %v2476
        %v2494 = vsel %vm2453, 0.0, %v2454
        %v2495 = vsel %vm2453, 0.0, %v2455
        %v2496 = vsel %vm2453, 0.0, %v2460
        %v2497 = vsel %vm2453, 0.0, %v2461
        %v2498 = vsel %vm2453, 0.0, %v2466
        %v2499 = vsel %vm2453, 0.0, %v2467
        %v2500 = vsel %vm2453, 0.0, %v2472
        %v2501 = vsel %vm2453, 0.0, %v2473
        %v2502 = vadd.f32 %v2494, %v2317
        %v2503 = vadd.f32 %v2495, %v2318
        %v2504 = vadd.f32 %v2457, %v2319
        %v2505 = vadd.f32 %v2459, %v2320
        %v2506 = vadd.f32 %v2496, %v2321
        %v2507 = vadd.f32 %v2497, %v2322
        %v2508 = vadd.f32 %v2463, %v2323
        %v2509 = vadd.f32 %v2465, %v2324
        %v2510 = vadd.f32 %v2498, %v2325
        %v2511 = vadd.f32 %v2499, %v2326
        %v2512 = vadd.f32 %v2469, %v2327
        %v2513 = vadd.f32 %v2471, %v2328
        %v2514 = vadd.f32 %v2500, %v2329
        %v2515 = vadd.f32 %v2501, %v2330
        %v2516 = vadd.f32 %v2475, %v2331
        %v2517 = vadd.f32 %v2477, %v2332
        %v2534 = vrot.slane %v2421, 1
        %v2535 = vrot.slane %v2423, 1
        %v2536 = vsel %vm1491, %v2534, %v2535
        %v2537 = vrot.slane %v2422, 1
        %v2538 = vrot.slane %v2424, 1
        %v2539 = vsel %vm1491, %v2537, %v2538
        %v2540 = vrot.slane %v2425, 1
        %v2541 = vrot.slane %v2427, 1
        %v2542 = vsel %vm1491, %v2540, %v2541
        %v2543 = vrot.slane %v2426, 1
        %v2544 = vrot.slane %v2428, 1
        %v2545 = vsel %vm1491, %v2543, %v2544
        %v2546 = vrot.slane %v2429, 1
        %v2547 = vrot.slane %v2431, 1
        %v2548 = vsel %vm1491, %v2546, %v2547
        %v2549 = vrot.slane %v2430, 1
        %v2550 = vrot.slane %v2432, 1
        %v2551 = vsel %vm1491, %v2549, %v2550
        %v2552 = vrot.slane %v2433, 1
        %v2553 = vrot.slane %v2435, 1
        %v2554 = vsel %vm1491, %v2552, %v2553
        %v2555 = vrot.slane %v2434, 1
        %v2556 = vrot.slane %v2436, 1
        %v2557 = vsel %vm1491, %v2555, %v2556
        %v2574 = vsel %vm1491, %v2535, 0.0
        %v2575 = vsel %vm1491, %v2538, 0.0
        %v2576 = vsel %vm1491, %v2541, 0.0
        %v2577 = vsel %vm1491, %v2544, 0.0
        %v2578 = vsel %vm1491, %v2547, 0.0
        %v2579 = vsel %vm1491, %v2550, 0.0
        %v2580 = vsel %vm1491, %v2553, 0.0
        %v2581 = vsel %vm1491, %v2556, 0.0
        %v2582 = vadd.f32 %v2502, %v2536
        %v2583 = vadd.f32 %v2503, %v2539
        %v2584 = vadd.f32 %v2504, %v2574
        %v2585 = vadd.f32 %v2505, %v2575
        %v2586 = vadd.f32 %v2506, %v2542
        %v2587 = vadd.f32 %v2507, %v2545
        %v2588 = vadd.f32 %v2508, %v2576
        %v2589 = vadd.f32 %v2509, %v2577
        %v2590 = vadd.f32 %v2510, %v2548
        %v2591 = vadd.f32 %v2511, %v2551
        %v2592 = vadd.f32 %v2512, %v2578
        %v2593 = vadd.f32 %v2513, %v2579
        %v2594 = vadd.f32 %v2514, %v2554
        %v2595 = vadd.f32 %v2515, %v2557
        %v2596 = vadd.f32 %v2516, %v2580
        %v2597 = vadd.f32 %v2517, %v2581
        %v2598 = vld [vmem:[#allocation11] sm:$0x3]
        %v2600 = vlaneseq
        %v2601 = vshrl.u32 %v2600, 7
        %v2602 = vsub.s32 0, %v2601
        %v2603 = vrot.slane %v2598, %v2602
        %v2604 = vlaneseq
        %v2605 = vshrl.u32 %v2604, 7
        %v2606 = vsub.s32 1, %v2605
        %v2607 = vrot.slane %v2598, %v2606
        %v2610 = vmul.f32 %v2582, %v2603
        %v2611 = vmul.f32 %v2583, %v2607
        %v2612 = vmul.f32 %v2584, %v2603
        %v2613 = vmul.f32 %v2585, %v2607
        %v2614 = vmul.f32 %v2586, %v2603
        %v2615 = vmul.f32 %v2587, %v2607
        %v2616 = vmul.f32 %v2588, %v2603
        %v2617 = vmul.f32 %v2589, %v2607
        %v2618 = vmul.f32 %v2590, %v2603
        %v2619 = vmul.f32 %v2591, %v2607
        %v2620 = vmul.f32 %v2592, %v2603
        %v2621 = vmul.f32 %v2593, %v2607
        %v2622 = vmul.f32 %v2594, %v2603
        %v2623 = vmul.f32 %v2595, %v2607
        %v2624 = vmul.f32 %v2596, %v2603
        %v2625 = vmul.f32 %v2597, %v2607
        %v2626 = vld [vmem:[#allocation13] sm:$0x3]
        %v2628 = vlaneseq
        %v2629 = vshrl.u32 %v2628, 7
        %v2630 = vsub.s32 0, %v2629
        %v2631 = vrot.slane %v2626, %v2630
        %v2632 = vlaneseq
        %v2633 = vshrl.u32 %v2632, 7
        %v2634 = vsub.s32 1, %v2633
        %v2635 = vrot.slane %v2626, %v2634
        %v2638 = vadd.f32 %v2610, %v2631
        %v2639 = vadd.f32 %v2611, %v2635
        %v2640 = vadd.f32 %v2612, %v2631
        %v2641 = vadd.f32 %v2613, %v2635
        %v2642 = vadd.f32 %v2614, %v2631
        %v2643 = vadd.f32 %v2615, %v2635
        %v2644 = vadd.f32 %v2616, %v2631
        %v2645 = vadd.f32 %v2617, %v2635
        %v2646 = vadd.f32 %v2618, %v2631
        %v2647 = vadd.f32 %v2619, %v2635
        %v2648 = vadd.f32 %v2620, %v2631
        %v2649 = vadd.f32 %v2621, %v2635
        %v2650 = vadd.f32 %v2622, %v2631
        %v2651 = vadd.f32 %v2623, %v2635
        %v2652 = vadd.f32 %v2624, %v2631
        %v2653 = vadd.f32 %v2625, %v2635
        %v2654 = vmax.f32 %v2638, 0.0
        %v2655 = vmax.f32 %v2639, 0.0
        %v2656 = vmax.f32 %v2640, 0.0
        %v2657 = vmax.f32 %v2641, 0.0
        %v2658 = vmax.f32 %v2642, 0.0
        %v2659 = vmax.f32 %v2643, 0.0
        %v2660 = vmax.f32 %v2644, 0.0
        %v2661 = vmax.f32 %v2645, 0.0
        %v2662 = vmax.f32 %v2646, 0.0
        %v2663 = vmax.f32 %v2647, 0.0
        %v2664 = vmax.f32 %v2648, 0.0
        %v2665 = vmax.f32 %v2649, 0.0
        %v2666 = vmax.f32 %v2650, 0.0
        %v2667 = vmax.f32 %v2651, 0.0
        %v2668 = vmax.f32 %v2652, 0.0
        %v2669 = vmax.f32 %v2653, 0.0
        %v2670 = vadd.f32 %v2654, %v2656
        %v2671 = vrot.slane %v2670, 4
        %v2672 = vadd.f32 %v2670, %v2671
        %v2673 = vrot.slane %v2672, 2
        %v2674 = vadd.f32 %v2672, %v2673
        %v2675 = vrot.slane %v2674, 1
        %v2676 = vadd.f32 %v2674, %v2675
        %v2677 = vadd.f32 %v2655, %v2657
        %v2678 = vrot.slane %v2677, 4
        %v2679 = vadd.f32 %v2677, %v2678
        %v2680 = vrot.slane %v2679, 2
        %v2681 = vadd.f32 %v2679, %v2680
        %v2682 = vrot.slane %v2681, 1
        %v2683 = vadd.f32 %v2681, %v2682
        %v2684 = vadd.f32 %v2658, %v2660
        %v2685 = vrot.slane %v2684, 4
        %v2686 = vadd.f32 %v2684, %v2685
        %v2687 = vrot.slane %v2686, 2
        %v2688 = vadd.f32 %v2686, %v2687
        %v2689 = vrot.slane %v2688, 1
        %v2690 = vadd.f32 %v2688, %v2689
        %v2691 = vadd.f32 %v2659, %v2661
        %v2692 = vrot.slane %v2691, 4
        %v2693 = vadd.f32 %v2691, %v2692
        %v2694 = vrot.slane %v2693, 2
        %v2695 = vadd.f32 %v2693, %v2694
        %v2696 = vrot.slane %v2695, 1
        %v2697 = vadd.f32 %v2695, %v2696
        %v2698 = vadd.f32 %v2662, %v2664
        %v2699 = vrot.slane %v2698, 4
        %v2700 = vadd.f32 %v2698, %v2699
        %v2701 = vrot.slane %v2700, 2
        %v2702 = vadd.f32 %v2700, %v2701
        %v2703 = vrot.slane %v2702, 1
        %v2704 = vadd.f32 %v2702, %v2703
        %v2705 = vadd.f32 %v2663, %v2665
        %v2706 = vrot.slane %v2705, 4
        %v2707 = vadd.f32 %v2705, %v2706
        %v2708 = vrot.slane %v2707, 2
        %v2709 = vadd.f32 %v2707, %v2708
        %v2710 = vrot.slane %v2709, 1
        %v2711 = vadd.f32 %v2709, %v2710
        %v2712 = vadd.f32 %v2666, %v2668
        %v2713 = vrot.slane %v2712, 4
        %v2714 = vadd.f32 %v2712, %v2713
        %v2715 = vrot.slane %v2714, 2
        %v2716 = vadd.f32 %v2714, %v2715
        %v2717 = vrot.slane %v2716, 1
        %v2718 = vadd.f32 %v2716, %v2717
        %v2719 = vadd.f32 %v2667, %v2669
        %v2720 = vrot.slane %v2719, 4
        %v2721 = vadd.f32 %v2719, %v2720
        %v2722 = vrot.slane %v2721, 2
        %v2723 = vadd.f32 %v2721, %v2722
        %v2724 = vrot.slane %v2723, 1
        %v2725 = vadd.f32 %v2723, %v2724
        %v2726 = vld [vmem:[%s10] sm:$0xff]
        %v2727 = vld [vmem:[%s10 + $0x8] sm:$0xff]
        %v2728 = vld [vmem:[%s10 + $0x10] sm:$0xff]
        %v2729 = vld [vmem:[%s10 + $0x18] sm:$0xff]
        %v2730 = vld [vmem:[%s10 + $0x20] sm:$0xff]
        %v2731 = vld [vmem:[%s10 + $0x28] sm:$0xff]
        %v2732 = vld [vmem:[%s10 + $0x30] sm:$0xff]
        %v2733 = vld [vmem:[%s10 + $0x38] sm:$0xff]
        %v2734 = vld [vmem:[%s10 + $0x40] sm:$0xff]
        %v2735 = vld [vmem:[%s10 + $0x48] sm:$0xff]
        %v2736 = vld [vmem:[%s10 + $0x50] sm:$0xff]
        %v2737 = vld [vmem:[%s10 + $0x58] sm:$0xff]
        %v2738 = vld [vmem:[%s10 + $0x60] sm:$0xff]
        %v2739 = vld [vmem:[%s10 + $0x68] sm:$0xff]
        %v2740 = vld [vmem:[%s10 + $0x70] sm:$0xff]
        %v2741 = vld [vmem:[%s10 + $0x78] sm:$0xff]
        %v2742 = vld [vmem:[%s10 + $0x80] sm:$0xff]
        %v2743 = vld [vmem:[%s10 + $0x88] sm:$0xff]
        %v2744 = vld [vmem:[%s10 + $0x90] sm:$0xff]
        %v2745 = vld [vmem:[%s10 + $0x98] sm:$0xff]
        %v2746 = vld [vmem:[%s10 + $0xa0] sm:$0xff]
        %v2747 = vld [vmem:[%s10 + $0xa8] sm:$0xff]
        %v2748 = vld [vmem:[%s10 + $0xb0] sm:$0xff]
        %v2749 = vld [vmem:[%s10 + $0xb8] sm:$0xff]
        %v2750 = vld [vmem:[%s10 + $0xc0] sm:$0xff]
        %v2751 = vld [vmem:[%s10 + $0xc8] sm:$0xff]
        %v2752 = vld [vmem:[%s10 + $0xd0] sm:$0xff]
        %v2753 = vld [vmem:[%s10 + $0xd8] sm:$0xff]
        %v2754 = vld [vmem:[%s10 + $0xe0] sm:$0xff]
        %v2755 = vld [vmem:[%s10 + $0xe8] sm:$0xff]
        %v2756 = vld [vmem:[%s10 + $0xf0] sm:$0xff]
        %v2757 = vld [vmem:[%s10 + $0xf8] sm:$0xff]
        %v2758 = vld [vmem:[%s11] sm:$0x1]
        %v2760 = vlaneseq
        %v2761 = vshrl.u32 %v2760, 7
        %v2762 = vsub.s32 0, %v2761
        %v2763 = vrot.slane %v2758, %v2762
        %vm2773 = vcmask 1041409
        %v2774 = vsel %vm2773, %v2690, %v2676
        %vm2775 = vcmask 1042434
        %v2776 = vsel %vm2775, %v2704, %v2774
        %vm2777 = vcmask 1043459
        %v2778 = vsel %vm2777, %v2718, %v2776
        %v2779 = vsel %vm2773, %v2697, %v2683
        %v2780 = vsel %vm2775, %v2711, %v2779
        %v2781 = vsel %vm2777, %v2725, %v2780
        %2784 = vmatprep.subr.mxu0 0.0
        %2785 = vmatpush1.msra.mxu0 %v2726
        %2786 = vmatprep.subr.mxu0 0.0
        %2787 = vmatpush1.msra.mxu0 %v2727
        %2788 = vmatprep.subr.mxu0 0.0
        %2789 = vmatpush1.msra.mxu0 %v2728
        %2790 = vmatprep.subr.mxu0 0.0
        %2791 = vmatpush1.msra.mxu0 %v2729
        %2792 = vmatprep.subr.mxu0 0.0
        %2793 = vmatpush1.msra.mxu0 %v2730
        %2794 = vmatprep.subr.mxu0 0.0
        %2795 = vmatpush1.msra.mxu0 %v2731
        %2796 = vmatprep.subr.mxu0 0.0
        %2797 = vmatpush1.msra.mxu0 %v2732
        %2798 = vmatprep.subr.mxu0 0.0
        %2799 = vmatpush1.msra.mxu0 %v2733
        %2800 = vmatprep.subr.mxu0 0.0
        %2801 = vmatpush1.msra.mxu0 %v2734
        %2802 = vmatprep.subr.mxu0 0.0
        %2803 = vmatpush1.msra.mxu0 %v2735
        %2804 = vmatprep.subr.mxu0 0.0
        %2805 = vmatpush1.msra.mxu0 %v2736
        %2806 = vmatprep.subr.mxu0 0.0
        %2807 = vmatpush1.msra.mxu0 %v2737
        %2808 = vmatprep.subr.mxu0 0.0
        %2809 = vmatpush1.msra.mxu0 %v2738
        %2810 = vmatprep.subr.mxu0 0.0
        %2811 = vmatpush1.msra.mxu0 %v2739
        %2812 = vmatprep.subr.mxu0 0.0
        %2813 = vmatpush1.msra.mxu0 %v2740
        %2814 = vmatprep.subr.mxu0 0.0
        %2815 = vmatpush1.msra.mxu0 %v2741
        %2816 = vmatprep.subr.mxu0 0.0
        %2817 = vmatpush1.msra.mxu0 %v2742
        %2818 = vmatprep.subr.mxu0 0.0
        %2819 = vmatpush1.msra.mxu0 %v2743
        %2820 = vmatprep.subr.mxu0 0.0
        %2821 = vmatpush1.msra.mxu0 %v2744
        %2822 = vmatprep.subr.mxu0 0.0
        %2823 = vmatpush1.msra.mxu0 %v2745
        %2824 = vmatprep.subr.mxu0 0.0
        %2825 = vmatpush1.msra.mxu0 %v2746
        %2826 = vmatprep.subr.mxu0 0.0
        %2827 = vmatpush1.msra.mxu0 %v2747
        %2828 = vmatprep.subr.mxu0 0.0
        %2829 = vmatpush1.msra.mxu0 %v2748
        %2830 = vmatprep.subr.mxu0 0.0
        %2831 = vmatpush1.msra.mxu0 %v2749
        %2832 = vmatprep.subr.mxu0 0.0
        %2833 = vmatpush1.msra.mxu0 %v2750
        %2834 = vmatprep.subr.mxu0 0.0
        %2835 = vmatpush1.msra.mxu0 %v2751
        %2836 = vmatprep.subr.mxu0 0.0
        %2837 = vmatpush1.msra.mxu0 %v2752
        %2838 = vmatprep.subr.mxu0 0.0
        %2839 = vmatpush1.msra.mxu0 %v2753
        %2840 = vmatprep.subr.mxu0 0.0
        %2841 = vmatpush1.msra.mxu0 %v2754
        %2842 = vmatprep.subr.mxu0 0.0
        %2843 = vmatpush1.msra.mxu0 %v2755
        %2844 = vmatprep.subr.mxu0 0.0
        %2845 = vmatpush1.msra.mxu0 %v2756
        %2846 = vmatprep.subr.mxu0 0.0
        %2847 = vmatpush1.msra.mxu0 %v2757
        %2848 = vmatprep.mubr.f32.mxu0 %v2781
        %2849 = vmatmul.mubr.f32.gmra.mrb[0].mxu0 %v2778
        %v2850 = vpop.f32.mrb[0].mxu0
        %v2851 = vadd.f32 %v2763, %v2850
        %v2852 = vpop.f32.mrb[0].mxu0
        %2853 = vdwg.mxu0
        %v2854 = vmax.f32 %v2851, 0.0
        %v2855 = vld [vmem:[%s12] sm:$0xff]
        %v2856 = vld [vmem:[%s12 + $0x8] sm:$0xff]
        %v2857 = vld [vmem:[%s13] sm:$0x3]
        %v2859 = vlaneseq
        %v2860 = vshrl.u32 %v2859, 7
        %v2861 = vsub.s32 0, %v2860
        %v2862 = vrot.slane %v2857, %v2861
        %v2863 = vlaneseq
        %v2864 = vshrl.u32 %v2863, 7
        %v2865 = vsub.s32 1, %v2864
        %v2866 = vrot.slane %v2857, %v2865
        %vm2869 = vcmask 64512
        %v2871 = vsel %vm2869, %v2854, 0
        %2873 = vmatprep.subr.mxu0 %v2856
        %2874 = vmatpush1.msra.mxu0 %v2855
        %2875 = vmatprep.subr.mxu0 0.0
        %2876 = vmatpush1.msra.mxu0 0.0
        %2877 = vmatprep.subr.mxu0 0.0
        %2878 = vmatpush1.msra.mxu0 0.0
        %2879 = vmatprep.subr.mxu0 0.0
        %2880 = vmatpush1.msra.mxu0 0.0
        %2881 = vmatprep.subr.mxu0 0.0
        %2882 = vmatpush1.msra.mxu0 0.0
        %2883 = vmatprep.subr.mxu0 0.0
        %2884 = vmatpush1.msra.mxu0 0.0
        %2885 = vmatprep.subr.mxu0 0.0
        %2886 = vmatpush1.msra.mxu0 0.0
        %2887 = vmatprep.subr.mxu0 0.0
        %2888 = vmatpush1.msra.mxu0 0.0
        %2889 = vmatprep.subr.mxu0 0.0
        %2890 = vmatpush1.msra.mxu0 0.0
        %2891 = vmatprep.subr.mxu0 0.0
        %2892 = vmatpush1.msra.mxu0 0.0
        %2893 = vmatprep.subr.mxu0 0.0
        %2894 = vmatpush1.msra.mxu0 0.0
        %2895 = vmatprep.subr.mxu0 0.0
        %2896 = vmatpush1.msra.mxu0 0.0
        %2897 = vmatprep.subr.mxu0 0.0
        %2898 = vmatpush1.msra.mxu0 0.0
        %2899 = vmatprep.subr.mxu0 0.0
        %2900 = vmatpush1.msra.mxu0 0.0
        %2901 = vmatprep.subr.mxu0 0.0
        %2902 = vmatpush1.msra.mxu0 0.0
        %2903 = vmatprep.subr.mxu0 0.0
        %2904 = vmatpush1.msra.mxu0 0.0
        %2905 = vmatprep.subr.mxu0 0.0
        %2906 = vmatpush1.msra.mxu0 0.0
        %2907 = vmatprep.subr.mxu0 0.0
        %2908 = vmatpush1.msra.mxu0 0.0
        %2909 = vmatprep.subr.mxu0 0.0
        %2910 = vmatpush1.msra.mxu0 0.0
        %2911 = vmatprep.subr.mxu0 0.0
        %2912 = vmatpush1.msra.mxu0 0.0
        %2913 = vmatprep.subr.mxu0 0.0
        %2914 = vmatpush1.msra.mxu0 0.0
        %2915 = vmatprep.subr.mxu0 0.0
        %2916 = vmatpush1.msra.mxu0 0.0
        %2917 = vmatprep.subr.mxu0 0.0
        %2918 = vmatpush1.msra.mxu0 0.0
        %2919 = vmatprep.subr.mxu0 0.0
        %2920 = vmatpush1.msra.mxu0 0.0
        %2921 = vmatprep.subr.mxu0 0.0
        %2922 = vmatpush1.msra.mxu0 0.0
        %2923 = vmatprep.subr.mxu0 0.0
        %2924 = vmatpush1.msra.mxu0 0.0
        %2925 = vmatprep.subr.mxu0 0.0
        %2926 = vmatpush1.msra.mxu0 0.0
        %2927 = vmatprep.subr.mxu0 0.0
        %2928 = vmatpush1.msra.mxu0 0.0
        %2929 = vmatprep.subr.mxu0 0.0
        %2930 = vmatpush1.msra.mxu0 0.0
        %2931 = vmatprep.subr.mxu0 0.0
        %2932 = vmatpush1.msra.mxu0 0.0
        %2933 = vmatprep.subr.mxu0 0.0
        %2934 = vmatpush1.msra.mxu0 0.0
        %2935 = vmatprep.subr.mxu0 0.0
        %2936 = vmatpush1.msra.mxu0 0.0
        %2937 = vmatprep.mubr.f32.mxu0 0.0
        %2938 = vmatmul.mubr.f32.gmra.mrb[0].mxu0 %v2871
        %v2939 = vpop.f32.mrb[0].mxu0
        %v2940 = vadd.f32 %v2862, %v2939
        %v2941 = vpop.f32.mrb[0].mxu0
        %v2942 = vadd.f32 %v2866, %v2941
        %2943 = vdwg.mxu0
        %v2944 = vxor.u32 %v2940, 2147483648
        %v2945 = vxor.u32 %v2942, 2147483648
        %v2946 = vmul.f32 %v2944, 1.442695
        %v2947 = vpow.pop %v2946
        %v2948 = vmul.f32 %v2945, 1.442695
        %v2949 = vpow.pop %v2948
        %v2950 = vadd.f32 %v2947, 1.0
        %v2951 = vadd.f32 %v2949, 1.0
        %v2952 = vrcp.pop %v2950
        %v2953 = vmul.f32 1.0, %v2952
        %v2954 = vrcp.pop %v2951
        %v2955 = vmul.f32 1.0, %v2954
        %v2958 = vcombine.low %v2953, %v2955
        %v2960 = vunpack.c.l.s4 1966171168
        %v2961 = vunpack.c.0.s8 %v2960
        %v2962 = vlaneseq
        %v2963 = vshrl.u32 %v2962, 7
        %v2964 = vsub.s32 %v2961, %v2963
        %v2965 = vrot.slane %v2958, %v2964
        %v2966 = vcombine.high %v2965, %v2965
        %v2968 = vunpack.c.l.s4 1966171168
        %v2969 = vunpack.c.0.s8 %v2968
        %v2970 = vlaneseq
        %v2971 = vshrl.u32 %v2970, 7
        %v2972 = vsub.s32 %v2969, %v2971
        %v2973 = vrot.slane %v2965, %v2972
        %v2975 = vunpack.c.l.s4 1966171168
        %v2976 = vunpack.c.0.s8 %v2975
        %v2977 = vlaneseq
        %v2978 = vshrl.u32 %v2977, 7
        %v2979 = vsub.s32 %v2976, %v2978
        %v2980 = vrot.slane %v2966, %v2979
        %v2981 = vcombine.high %v2973, %v2973
        %v2982 = vcombine.high %v2980, %v2980
        %v2983 = vlaneseq
        %v2984 = vshrl.u32 %v2983, 7
        %v2985 = vsub.s32 0, %v2984
        %v2986 = vrot.slane %v2973, %v2985
        %v2987 = vlaneseq
        %v2988 = vshrl.u32 %v2987, 7
        %v2989 = vsub.s32 1, %v2988
        %v2990 = vrot.slane %v2973, %v2989
        %v2991 = vlaneseq
        %v2992 = vshrl.u32 %v2991, 7
        %v2993 = vsub.s32 0, %v2992
        %v2994 = vrot.slane %v2980, %v2993
        %v2995 = vlaneseq
        %v2996 = vshrl.u32 %v2995, 7
        %v2997 = vsub.s32 1, %v2996
        %v2998 = vrot.slane %v2980, %v2997
        %v2999 = vlaneseq
        %v3000 = vshrl.u32 %v2999, 7
        %v3001 = vsub.s32 0, %v3000
        %v3002 = vrot.slane %v2981, %v3001
        %v3003 = vlaneseq
        %v3004 = vshrl.u32 %v3003, 7
        %v3005 = vsub.s32 1, %v3004
        %v3006 = vrot.slane %v2981, %v3005
        %v3007 = vlaneseq
        %v3008 = vshrl.u32 %v3007, 7
        %v3009 = vsub.s32 0, %v3008
        %v3010 = vrot.slane %v2982, %v3009
        %v3011 = vlaneseq
        %v3012 = vshrl.u32 %v3011, 7
        %v3013 = vsub.s32 1, %v3012
        %v3014 = vrot.slane %v2982, %v3013
        %v3023 = vmul.f32 %v2654, %v2986
        %v3024 = vmul.f32 %v2655, %v2990
        %v3025 = vmul.f32 %v2656, %v2986
        %v3026 = vmul.f32 %v2657, %v2990
        %v3027 = vmul.f32 %v2658, %v2994
        %v3028 = vmul.f32 %v2659, %v2998
        %v3029 = vmul.f32 %v2660, %v2994
        %v3030 = vmul.f32 %v2661, %v2998
        %v3031 = vmul.f32 %v2662, %v3002
        %v3032 = vmul.f32 %v2663, %v3006
        %v3033 = vmul.f32 %v2664, %v3002
        %v3034 = vmul.f32 %v2665, %v3006
        %v3035 = vmul.f32 %v2666, %v3010
        %v3036 = vmul.f32 %v2667, %v3014
        %v3037 = vmul.f32 %v2668, %v3010
        %v3038 = vmul.f32 %v2669, %v3014
        %v3039 = vld [vmem:[%s592] sm:$0xff]
        %v3040 = vld [vmem:[%s592 + $0x8] sm:$0xff]
        %v3041 = vld [vmem:[%s592 + $0x10] sm:$0xff]
        %v3042 = vld [vmem:[%s592 + $0x18] sm:$0xff]
        %v3043 = vld [vmem:[%s592 + $0x20] sm:$0xff]
        %v3044 = vld [vmem:[%s592 + $0x28] sm:$0xff]
        %v3045 = vld [vmem:[%s592 + $0x30] sm:$0xff]
        %v3046 = vld [vmem:[%s592 + $0x38] sm:$0xff]
        %v3047 = vld [vmem:[%s592 + $0x40] sm:$0xff]
        %v3048 = vld [vmem:[%s592 + $0x48] sm:$0xff]
        %v3049 = vld [vmem:[%s592 + $0x50] sm:$0xff]
        %v3050 = vld [vmem:[%s592 + $0x58] sm:$0xff]
        %v3051 = vld [vmem:[%s592 + $0x60] sm:$0xff]
        %v3052 = vld [vmem:[%s592 + $0x68] sm:$0xff]
        %v3053 = vld [vmem:[%s592 + $0x70] sm:$0xff]
        %v3054 = vld [vmem:[%s592 + $0x78] sm:$0xff]
        %v3055 = vadd.f32 %v3023, %v3039
        %v3056 = vadd.f32 %v3024, %v3040
        %v3057 = vadd.f32 %v3025, %v3041
        %v3058 = vadd.f32 %v3026, %v3042
        %v3059 = vadd.f32 %v3027, %v3043
        %v3060 = vadd.f32 %v3028, %v3044
        %v3061 = vadd.f32 %v3029, %v3045
        %v3062 = vadd.f32 %v3030, %v3046
        %v3063 = vadd.f32 %v3031, %v3047
        %v3064 = vadd.f32 %v3032, %v3048
        %v3065 = vadd.f32 %v3033, %v3049
        %v3066 = vadd.f32 %v3034, %v3050
        %v3067 = vadd.f32 %v3035, %v3051
        %v3068 = vadd.f32 %v3036, %v3052
        %v3069 = vadd.f32 %v3037, %v3053
        %v3070 = vadd.f32 %v3038, %v3054
        %v3071 = vmax.f32 %v3055, 0.0
        %v3072 = vmax.f32 %v3056, 0.0
        %v3073 = vmax.f32 %v3057, 0.0
        %v3074 = vmax.f32 %v3058, 0.0
        %v3075 = vmax.f32 %v3059, 0.0
        %v3076 = vmax.f32 %v3060, 0.0
        %v3077 = vmax.f32 %v3061, 0.0
        %v3078 = vmax.f32 %v3062, 0.0
        %v3079 = vmax.f32 %v3063, 0.0
        %v3080 = vmax.f32 %v3064, 0.0
        %v3081 = vmax.f32 %v3065, 0.0
        %v3082 = vmax.f32 %v3066, 0.0
        %v3083 = vmax.f32 %v3067, 0.0
        %v3084 = vmax.f32 %v3068, 0.0
        %v3085 = vmax.f32 %v3069, 0.0
        %v3086 = vmax.f32 %v3070, 0.0
        %3087 = vst [vmem:[%s585] sm:$0xff] %v3071
        %3088 = vst [vmem:[%s585 + $0x8] sm:$0xff] %v3072
        %3089 = vst [vmem:[%s585 + $0x10] sm:$0xff] %v3073
        %3090 = vst [vmem:[%s585 + $0x18] sm:$0xff] %v3074
        %3091 = vst [vmem:[%s585 + $0x20] sm:$0xff] %v3075
        %3092 = vst [vmem:[%s585 + $0x28] sm:$0xff] %v3076
        %3093 = vst [vmem:[%s585 + $0x30] sm:$0xff] %v3077
        %3094 = vst [vmem:[%s585 + $0x38] sm:$0xff] %v3078
        %3095 = vst [vmem:[%s585 + $0x40] sm:$0xff] %v3079
        %3096 = vst [vmem:[%s585 + $0x48] sm:$0xff] %v3080
        %3097 = vst [vmem:[%s585 + $0x50] sm:$0xff] %v3081
        %3098 = vst [vmem:[%s585 + $0x58] sm:$0xff] %v3082
        %3099 = vst [vmem:[%s585 + $0x60] sm:$0xff] %v3083
        %3100 = vst [vmem:[%s585 + $0x68] sm:$0xff] %v3084
        %3101 = vst [vmem:[%s585 + $0x70] sm:$0xff] %v3085
        %3102 = vst [vmem:[%s585 + $0x78] sm:$0xff] %v3086
        %s3103 = sand.u32 %s346, 1
        %s3104 = scalar_lea.sflag [#allocation4], %s3103
        %s3105 = sand.u32 %s346, 1
        %s3106 = smul.addr %s3105, 128
        %s3107 = scalar_lea.vmem [#allocation14], %s3106
        // Predicated region
        $region105: #{tpu_custom_call.1} parent=75 // pred_check
          %p3108 = pneg %p356
        $region106: #{tpu_custom_call.1} parent=75 // pred_check_branch
          %3110 = sbr.rel (%p3108) target = $region108
        $region107: #{tpu_custom_call.1} parent=75 // pred_region
          %s3111 = smul.u32 4, %s34
          %s3113 = ssub.s32 2048, 2048
          %3114 = vsyncadd %s3104, %s3113
          %s3115 = smul.addr %s3111, 4
          %s3116 = smul.addr %s3115, 128
          %s3117 = scalar_lea.hbm %s14, %s3116
          %s3118 = sshll.u32 %s3107, 4
          %s3119 = int_to_ptr.vmem [resolvable:$true] %s3118
          %3124 = dma.vmem_to_hbm [thread:$0]  %s3119, 2048, %s3117, %s3104, 256, 256, 16
        $region108: #{tpu_custom_call.1} parent=75 // pred_fallthru
          _
      $region76: #{tpu_custom_call.1} parent=5 // pred_fallthru
        _
      %p3125 = scmp.le.s32.totalorder 2, %s29
      // Predicated region
      $region109: #{tpu_custom_call.1} parent=5 // pred_check
        %p3126 = pneg %p3125
      $region110: #{tpu_custom_call.1} parent=5 // pred_check_branch
        %3128 = sbr.rel (%p3126) target = $region112
      $region111: #{tpu_custom_call.1} parent=5 // pred_region
        %s3129 = ssub.s32 %s29, 2
        // Predicated region
        $region113: #{tpu_custom_call.1} parent=111 // pred_check
          %p3130 = pneg %p362
        $region114: #{tpu_custom_call.1} parent=111 // pred_check_branch
          %3132 = sbr.rel (%p3130) target = $region116
        $region115: #{tpu_custom_call.1} parent=111 // pred_region
          %s3133 = sand.u32 %s347, 1
          %s3134 = scalar_lea.sflag [#allocation4], %s3133
          %s3135 = sand.u32 %s347, 1
          %s3136 = smul.addr %s3135, 128
          %s3137 = scalar_lea.vmem [#allocation14], %s3136
          %3138 = dma.done %s3134, 2048
        $region116: #{tpu_custom_call.1} parent=111 // pred_fallthru
          _
      $region112: #{tpu_custom_call.1} parent=5 // pred_fallthru
        _
    $region6: #{tpu_custom_call.1} parent=1 // loop_footer
      %s33 = sadd.s32 1, %s29
    $region7: #{tpu_custom_call.1} parent=1 // loop_footer_branch
      %28 = sbr.rel target = $region3
    $region8: #{tpu_custom_call.1} parent=1 // loop_exit
      _
    %3139 = vsyncpa [#allocation3], 1
    %s3140 = scalar_lea.sflag [#allocation3], 1
    %3141 = vsyncpa %s3140, 1
    %3142 = vsyncpa [#allocation6], 1
    %3143 = vsyncpa [#allocation9], 1
    %3144 = vsyncpa [#allocation12], 1
    %3145 = vsyncpa [#allocation4], 1
    %s3146 = scalar_lea.sflag [#allocation4], 1
    %3147 = vsyncpa %s3146, 1

</llo_original>
